<compile_context>
chip_gen: v6e
topology: v6e:2x2x1
jax: 0.10.0
libtpu: 0.0.40
codegen_flags: <defaults>
</compile_context>

<pallas_src>
import functools

import numpy as np
import jax
import jax.numpy as jnp
from jax import lax
from jax.experimental import pallas as pl
from jax.experimental.pallas import tpu as pltpu


# ----------------------------------------------------------------------------
# Pallas kernel: one (batch, D-tile) block of the Bottleneck3D forward.
# ----------------------------------------------------------------------------
def bottleneck3d_kernel(xc_ref, xh_ref, mask_ref,
                        w1_ref, b1_ref, w2_ref, b2_ref, w3_ref, b3_ref,
                        w4_ref, b4_ref, w5_ref, b5_ref,
                        o_ref, *, tile_d, H, W):
    HW = H * W
    Sc = tile_d * HW                      # center (output) lanes
    j = pl.program_id(1)
    nD = pl.num_programs(1)

    relu = lambda v: jnp.maximum(v, 0.0)

    m = mask_ref[...]                     # (6, S2) f32 0/1 masks
    m_wlo, m_whi = m[0:1], m[1:2]         # valid "w-1" / "w+1" taps
    m_hlo, m_hhi = m[2:3], m[3:4]         # valid "h-1" / "h+1" taps
    m_first, m_last = m[4:5], m[5:6]      # halo plane 0 / plane tile_d+1

    xc = xc_ref[0]                        # (Cin, Sc)   f32, center planes
    xh = xh_ref[0, 0]                     # (Cin, 2*HW) f32, [before | after] halo

    # x slab with D halo, cast once to bf16 for the MXU: [before | center | after]
    slab_bf = jnp.concatenate([xh[:, :HW], xc, xh[:, HW:]],
                              axis=1).astype(jnp.bfloat16)            # (Cin, S2)

    def pointwise(a_bf, w_ref, b_ref):
        # 1x1x1 conv (BN scale pre-folded into w): (Co,Ci) @ (Ci,S) -> (Co,S)
        return jnp.dot(w_ref[...], a_bf,
                       preferred_element_type=jnp.float32) + b_ref[...]

    def conv3tap(a, w_ref, b_ref, delta, m_lo=None, m_hi=None, center_only=False):
        # 3-tap conv along one spatial axis, fused into a single MXU matmul:
        #   operand rows [0:P)   = a shifted so lane s holds a[s-delta]  (tap 0)
        #   operand rows [P:2P)  = a                                     (tap 1)
        #   operand rows [2P:3P) = a shifted so lane s holds a[s+delta]  (tap 2)
        # w_ref is (Co, 3P) with BN scale already folded in.
        S = a.shape[1]
        left = pltpu.roll(a, delta % S, axis=1)
        right = pltpu.roll(a, (S - delta) % S, axis=1)
        if m_lo is not None:              # zero-padding at the H/W boundaries
            left = left * m_lo
            right = right * m_hi
        a3 = jnp.concatenate([left, a, right], axis=0)
        if center_only:
            a3 = a3[:, HW:HW + Sc]
        return jnp.dot(w_ref[...], a3.astype(jnp.bfloat16),
                       preferred_element_type=jnp.float32) + b_ref[...]

    # conv1 (1x1x1) + bn1 + relu, over the full slab (halo planes included)
    out1 = relu(pointwise(slab_bf, w1_ref, b1_ref))                   # (P, S2)
    # conv2 (1,1,3) along W + bn2
    out2 = conv3tap(out1, w2_ref, b2_ref, 1, m_wlo, m_whi)            # (P, S2)
    # conv3 (1,3,1) along H + bn3, plus residual out2
    out3 = conv3tap(relu(out2), w3_ref, b3_ref, W, m_hlo, m_hhi) + out2
    # residual sum; only the center planes are needed from here on
    res23 = out2[:, HW:HW + Sc] + out3[:, HW:HW + Sc]                 # (P, Sc)
    # conv4 (3,1,1) along D: its zero padding at the volume boundary means the
    # out-of-volume halo planes of relu(out3) must contribute exactly zero.
    f_first = jnp.where(j == 0, 1.0, 0.0)
    f_last = jnp.where(j == nD - 1, 1.0, 0.0)
    keep = 1.0 - (f_first * m_first + f_last * m_last)                # (1, S2)
    out3_relu = relu(out3) * keep
    out4 = conv3tap(out3_relu, w4_ref, b4_ref, HW, center_only=True) + res23
    # conv5 (1x1x1) + bn5, residual with x, final relu — center planes only
    out5 = pointwise(relu(out4).astype(jnp.bfloat16), w5_ref, b5_ref)  # (Cout, Sc)
    o_ref[0] = relu(out5 + xc)


# ----------------------------------------------------------------------------
# Wrapper helpers
# ----------------------------------------------------------------------------
def _build_halo(x, tile_d):
    # For each D tile, the plane just before and just after it (zeros at the
    # volume boundary), flattened to (N, nD, C, 2*H*W).
    N, C, D, H, W = x.shape
    nD = D // tile_d
    xp = jnp.pad(x, ((0, 0), (0, 0), (1, 1), (0, 0), (0, 0)))
    before = jnp.stack([xp[:, :, j * tile_d] for j in range(nD)], axis=1)
    after = jnp.stack([xp[:, :, j * tile_d + tile_d + 1] for j in range(nD)], axis=1)
    halo = jnp.stack([before, after], axis=3)            # (N, nD, C, 2, H, W)
    return halo.reshape(N, nD, C, 2 * H * W)


def _make_masks(tile_d, H, W):
    # Static 0/1 masks over the flattened slab lane index (built host-side).
    HW = H * W
    S2 = (tile_d + 2) * HW
    col = np.arange(S2)
    q = col % HW
    wpos = q % W
    hpos = q // W
    plane = col // HW
    m = np.stack([wpos != 0, wpos != W - 1,
                  hpos != 0, hpos != H - 1,
                  plane == 0, plane == tile_d + 1], axis=0)
    return jnp.asarray(m.astype(np.float32))             # (6, S2)


def bottleneck3d_pallas(x, params, *, tile_d=None):
    """x: (N, Cin, D, H, W) float32 (NCDHW, as in PyTorch). Returns same shape."""
    N, Cin, D, H, W = x.shape
    (w1, b1, w2, b2, w3, b3, w4, b4, w5, b5) = params
    P = w1.shape[0]
    Cout = w5.shape[0]
    assert Cin == Cout, ("stride=1 / downsample=None path requires "
                         "inplanes == planes*expansion")
    if tile_d is None:
        tile_d = D
    assert D % tile_d == 0, "D must be divisible by tile_d"
    nD = D // tile_d
    HW = H * W
    Sc = tile_d * HW
    S2 = (tile_d + 2) * HW

    x_flat = x.reshape(N, Cin, D * HW)       # channels-major, lane-dense blocks
    x_halo = _build_halo(x, tile_d)          # (N, nD, Cin, 2*HW)
    masks = _make_masks(tile_d, H, W)        # (6, S2)

    kernel = functools.partial(bottleneck3d_kernel, tile_d=tile_d, H=H, W=W)

    def const_spec(arr):
        nd = arr.ndim
        return pl.BlockSpec(arr.shape, lambda n, j, nd=nd: (0,) * nd)

    in_specs = ([pl.BlockSpec((1, Cin, Sc), lambda n, j: (n, 0, j)),
                 pl.BlockSpec((1, 1, Cin, 2 * HW), lambda n, j: (n, j, 0, 0)),
                 const_spec(masks)]
                + [const_spec(p) for p in params])
    out_spec = pl.BlockSpec((1, Cout, Sc), lambda n, j: (n, 0, j))

    # rough per-step VMEM footprint -> explicit scoped-VMEM limit
    blk = 4 * (Cin * Sc + Cin * 2 * HW + Cout * Sc)          # pipelined f32 blocks
    wgt = sum(int(p.size) * p.dtype.itemsize for p in params) + 4 * 6 * S2
    live = (2 * Cin * S2                                     # bf16 slab
            + 4 * 4 * P * S2                                 # out1..out3(+relu) f32
            + 2 * 3 * P * S2                                 # fused-tap operand bf16
            + 4 * 3 * P * Sc + 2 * 4 * Cout * Sc)            # out4 / res / out5 / out
    vmem_limit = int(2 * blk + wgt + live) + (8 << 20)
    vmem_limit = min(max(vmem_limit, 32 << 20), 64 << 20)

    flops = 2 * N * D * HW * (Cin * P + 3 * 3 * P * P + P * Cout)
    bytes_accessed = 4 * (int(x_flat.size) + int(x_halo.size) + N * Cout * D * HW) + wgt

    out_flat = pl.pallas_call(
        kernel,
        out_shape=jax.ShapeDtypeStruct((N, Cout, D * HW), jnp.float32),
        grid_spec=pltpu.PrefetchScalarGridSpec(
            num_scalar_prefetch=0,
            grid=(N, nD),
            in_specs=in_specs,
            out_specs=out_spec),
        compiler_params=pltpu.CompilerParams(
            dimension_semantics=("parallel", "parallel"),
            vmem_limit_bytes=vmem_limit),
        cost_estimate=pl.CostEstimate(flops=int(flops), transcendentals=0,
                                      bytes_accessed=int(bytes_accessed)),
    )(x_flat, x_halo, masks, *params)
    return out_flat.reshape(N, Cout, D, H, W)


# ----------------------------------------------------------------------------
# Parameter construction (torch-shaped, then folded to the kernel layout)
# ----------------------------------------------------------------------------
def make_params(key, inplanes, planes, expansion=4, eps=1e-5):
    """Returns (kernel_params, torch_params).

    kernel_params: BN-scale-folded bf16 weights in MXU layout + f32 biases.
    torch_params:  PyTorch-shaped f32 conv weights (O,I,kd,kh,kw) and raw BN
                   (gamma, beta, mean, var) tuples, for the references.
    """
    cout = planes * expansion
    keys = jax.random.split(key, 30)
    ki = iter(keys)

    def nrm(shape, scale=0.1):
        return scale * jax.random.normal(next(ki), shape, dtype=jnp.float32)

    def make_bn(c):
        gamma = 1.0 + nrm((c,))
        beta = nrm((c,))
        mean = nrm((c,))
        var = jnp.abs(nrm((c,), 1.0)) * 0.5 + 0.5
        return (gamma, beta, mean, var)

    convs = (nrm((planes, inplanes, 1, 1, 1)),
             nrm((planes, planes, 1, 1, 3)),
             nrm((planes, planes, 1, 3, 1)),
             nrm((planes, planes, 3, 1, 1)),
             nrm((cout, planes, 1, 1, 1)))
    bns = tuple(make_bn(c) for c in (planes, planes, planes, planes, cout))

    def fold(w, bn):
        gamma, beta, mean, var = bn
        s = gamma / jnp.sqrt(var + eps)
        return w * s[:, None, None, None, None], beta - mean * s

    folded = [fold(w, bn) for w, bn in zip(convs, bns)]
    (f1, b1), (f2, b2), (f3, b3), (f4, b4), (f5, b5) = folded

    bf16 = jnp.bfloat16
    w1k = f1[:, :, 0, 0, 0].astype(bf16)                                        # (P, Cin)
    w2k = jnp.concatenate([f2[:, :, 0, 0, k] for k in range(3)], 1).astype(bf16)  # (P, 3P) W taps
    w3k = jnp.concatenate([f3[:, :, 0, k, 0] for k in range(3)], 1).astype(bf16)  # (P, 3P) H taps
    w4k = jnp.concatenate([f4[:, :, k, 0, 0] for k in range(3)], 1).astype(bf16)  # (P, 3P) D taps
    w5k = f5[:, :, 0, 0, 0].astype(bf16)                                        # (Cout, P)

    kernel_params = (w1k, b1.reshape(-1, 1), w2k, b2.reshape(-1, 1),
                     w3k, b3.reshape(-1, 1), w4k, b4.reshape(-1, 1),
                     w5k, b5.reshape(-1, 1))
    return kernel_params, (convs, bns)


# ----------------------------------------------------------------------------
# Pure-JAX NCDHW reference (lax.conv_general_dilated) for validation
# ----------------------------------------------------------------------------
def bottleneck3d_ref(x, torch_params, eps=1e-5, use_bf16=True):
    """use_bf16=True mirrors the kernel's numerics (BN scale folded into bf16
    conv weights, f32 accumulation); use_bf16=False is the plain f32 module."""
    convs, bns = torch_params
    relu = lambda v: jnp.maximum(v, 0.0)
    dn = ('NCDHW', 'OIDHW', 'NCDHW')

    def conv_bn(a, w, bn):
        gamma, beta, mean, var = bn
        s = gamma / jnp.sqrt(var + eps)
        b = beta - mean * s
        if use_bf16:
            wf = (w * s[:, None, None, None, None]).astype(jnp.bfloat16)
            y = lax.conv_general_dilated(a.astype(jnp.bfloat16), wf, (1, 1, 1),
                                         'SAME', dimension_numbers=dn,
                                         preferred_element_type=jnp.float32)
            return y + b[None, :, None, None, None]
        y = lax.conv_general_dilated(a, w, (1, 1, 1), 'SAME', dimension_numbers=dn)
        return y * s[None, :, None, None, None] + b[None, :, None, None, None]

    c1, c2, c3, c4, c5 = convs
    bn1, bn2, bn3, bn4, bn5 = bns
    out1 = relu(conv_bn(x, c1, bn1))
    out2 = conv_bn(out1, c2, bn2)
    out3 = conv_bn(relu(out2), c3, bn3) + out2
    out4 = conv_bn(relu(out3), c4, bn4) + out2 + out3
    out5 = conv_bn(relu(out4), c5, bn5)
    return relu(out5 + x)


# ----------------------------------------------------------------------------
if __name__ == "__main__":
    N, D, H, W = 2, 16, 8, 16
    planes, expansion = 16, 4
    inplanes = planes * expansion            # residual add requires Cin == Cout

    key = jax.random.PRNGKey(0)
    kx, kp = jax.random.split(key)
    x = jax.random.normal(kx, (N, inplanes, D, H, W), dtype=jnp.float32)
    kernel_params, torch_params = make_params(kp, inplanes, planes, expansion)

    out = bottleneck3d_pallas(x, kernel_params, tile_d=8)
    out = jax.block_until_ready(out)

    ref_match = bottleneck3d_ref(x, torch_params, use_bf16=True)   # same numerics
    ref_f32 = bottleneck3d_ref(x, torch_params, use_bf16=False)    # plain module
    assert out.shape == ref_match.shape

    err = float(jnp.max(jnp.abs(out - ref_match)))
    assert err < 5e-3, f"mismatch vs bf16-matched reference: {err}"
    err32 = float(jnp.max(jnp.abs(out - ref_f32)))
    assert err32 < 0.25, f"implausible deviation from f32 reference: {err32}"
    print("KERNEL_OK")
</pallas_src>

<mosaic_0001>
module attributes {stable_mosaic.version = 11 : i64} {
  func.func @bottleneck3d_kernel(%arg0: i32, %arg1: i32, %arg2: memref<1x64x1024xf32, #tpu.memory_space<vmem>>, %arg3: memref<1x1x64x256xf32, #tpu.memory_space<vmem>>, %arg4: memref<6x1280xf32, #tpu.memory_space<vmem>>, %arg5: memref<16x64xbf16, #tpu.memory_space<vmem>>, %arg6: memref<16x1xf32, #tpu.memory_space<vmem>>, %arg7: memref<16x48xbf16, #tpu.memory_space<vmem>>, %arg8: memref<16x1xf32, #tpu.memory_space<vmem>>, %arg9: memref<16x48xbf16, #tpu.memory_space<vmem>>, %arg10: memref<16x1xf32, #tpu.memory_space<vmem>>, %arg11: memref<16x48xbf16, #tpu.memory_space<vmem>>, %arg12: memref<16x1xf32, #tpu.memory_space<vmem>>, %arg13: memref<64x16xbf16, #tpu.memory_space<vmem>>, %arg14: memref<64x1xf32, #tpu.memory_space<vmem>>, %arg15: memref<1x64x1024xf32, #tpu.memory_space<vmem>>) attributes {dimension_semantics = [#tpu.dimension_semantics<parallel>, #tpu.dimension_semantics<parallel>], iteration_bounds = array<i64: 2, 2>, scalar_prefetch = 0 : i64, scratch_operands = 0 : i64, tpu.core_type = #tpu.core_type<tc>, window_params = [{transform_indices = @transform_0, window_bounds = array<i64: 1, 64, 1024>}, {transform_indices = @transform_1, window_bounds = array<i64: 1, 1, 64, 256>}, {pipeline_mode = #tpu.pipeline_mode<synchronous>, transform_indices = @transform_2, window_bounds = array<i64: 6, 1280>}, {pipeline_mode = #tpu.pipeline_mode<synchronous>, transform_indices = @transform_3, window_bounds = array<i64: 16, 64>}, {pipeline_mode = #tpu.pipeline_mode<synchronous>, transform_indices = @transform_4, window_bounds = array<i64: 16, 1>}, {pipeline_mode = #tpu.pipeline_mode<synchronous>, transform_indices = @transform_5, window_bounds = array<i64: 16, 48>}, {pipeline_mode = #tpu.pipeline_mode<synchronous>, transform_indices = @transform_6, window_bounds = array<i64: 16, 1>}, {pipeline_mode = #tpu.pipeline_mode<synchronous>, transform_indices = @transform_7, window_bounds = array<i64: 16, 48>}, {pipeline_mode = #tpu.pipeline_mode<synchronous>, transform_indices = @transform_8, window_bounds = array<i64: 16, 1>}, {pipeline_mode = #tpu.pipeline_mode<synchronous>, transform_indices = @transform_9, window_bounds = array<i64: 16, 48>}, {pipeline_mode = #tpu.pipeline_mode<synchronous>, transform_indices = @transform_10, window_bounds = array<i64: 16, 1>}, {pipeline_mode = #tpu.pipeline_mode<synchronous>, transform_indices = @transform_11, window_bounds = array<i64: 64, 16>}, {pipeline_mode = #tpu.pipeline_mode<synchronous>, transform_indices = @transform_12, window_bounds = array<i64: 64, 1>}, {transform_indices = @transform_13, window_bounds = array<i64: 1, 64, 1024>}]} {
    %c0 = arith.constant 0 : index
    %c0_0 = arith.constant 0 : index
    %0 = vector.load %arg4[%c0, %c0_0] : memref<6x1280xf32, #tpu.memory_space<vmem>>, vector<6x1280xf32>
    %1 = vector.extract_strided_slice %0 {offsets = [0, 0], sizes = [1, 1280], strides = [1, 1]} : vector<6x1280xf32> to vector<1x1280xf32>
    %2 = vector.extract_strided_slice %0 {offsets = [1, 0], sizes = [1, 1280], strides = [1, 1]} : vector<6x1280xf32> to vector<1x1280xf32>
    %3 = vector.extract_strided_slice %0 {offsets = [2, 0], sizes = [1, 1280], strides = [1, 1]} : vector<6x1280xf32> to vector<1x1280xf32>
    %4 = vector.extract_strided_slice %0 {offsets = [3, 0], sizes = [1, 1280], strides = [1, 1]} : vector<6x1280xf32> to vector<1x1280xf32>
    %5 = vector.extract_strided_slice %0 {offsets = [4, 0], sizes = [1, 1280], strides = [1, 1]} : vector<6x1280xf32> to vector<1x1280xf32>
    %6 = vector.extract_strided_slice %0 {offsets = [5, 0], sizes = [1, 1280], strides = [1, 1]} : vector<6x1280xf32> to vector<1x1280xf32>
    %c0_1 = arith.constant 0 : index
    %c0_2 = arith.constant 0 : index
    %c0_3 = arith.constant 0 : index
    %7 = vector.load %arg2[%c0_1, %c0_2, %c0_3] : memref<1x64x1024xf32, #tpu.memory_space<vmem>>, vector<1x64x1024xf32>
    %8 = vector.shape_cast %7 : vector<1x64x1024xf32> to vector<64x1024xf32>
    %c0_4 = arith.constant 0 : index
    %c0_5 = arith.constant 0 : index
    %c0_6 = arith.constant 0 : index
    %c0_7 = arith.constant 0 : index
    %9 = vector.load %arg3[%c0_4, %c0_5, %c0_6, %c0_7] : memref<1x1x64x256xf32, #tpu.memory_space<vmem>>, vector<1x1x64x256xf32>
    %10 = vector.shape_cast %9 : vector<1x1x64x256xf32> to vector<64x256xf32>
    %11 = vector.extract_strided_slice %10 {offsets = [0, 0], sizes = [64, 128], strides = [1, 1]} : vector<64x256xf32> to vector<64x128xf32>
    %12 = vector.extract_strided_slice %10 {offsets = [0, 128], sizes = [64, 128], strides = [1, 1]} : vector<64x256xf32> to vector<64x128xf32>
    %13 = tpu.concatenate %11, %8, %12 in 1 : vector<64x128xf32>, vector<64x1024xf32>, vector<64x128xf32> -> vector<64x1280xf32>
    %14 = arith.truncf %13 : vector<64x1280xf32> to vector<64x1280xbf16>
    %c0_8 = arith.constant 0 : index
    %c0_9 = arith.constant 0 : index
    %15 = vector.load %arg5[%c0_8, %c0_9] : memref<16x64xbf16, #tpu.memory_space<vmem>>, vector<16x64xbf16>
    %cst = arith.constant dense<0.000000e+00> : vector<16x1280xf32>
    %16 = tpu.matmul %15, %14, %cst {dimension_numbers = #tpu.dot_dimension_numbers<[1], [0], [0], [1], [0, 0, 1, 1], [], []>} : vector<16x64xbf16>, vector<64x1280xbf16>, vector<16x1280xf32> -> vector<16x1280xf32>
    %c0_10 = arith.constant 0 : index
    %c0_11 = arith.constant 0 : index
    %17 = vector.load %arg6[%c0_10, %c0_11] : memref<16x1xf32, #tpu.memory_space<vmem>>, vector<16x1xf32>
    %18 = vector.broadcast %17 : vector<16x1xf32> to vector<16x1280xf32>
    %19 = arith.addf %16, %18 : vector<16x1280xf32>
    %cst_12 = arith.constant 0.000000e+00 : f32
    %20 = vector.broadcast %cst_12 : f32 to vector<16x1280xf32>
    %21 = arith.maximumf %19, %20 : vector<16x1280xf32>
    %c1_i32 = arith.constant 1 : i32
    %22 = tpu.dynamic_rotate %21 by %c1_i32 dim 1 : vector<16x1280xf32>, i32 -> vector<16x1280xf32>
    %c1279_i32 = arith.constant 1279 : i32
    %23 = tpu.dynamic_rotate %21 by %c1279_i32 dim 1 : vector<16x1280xf32>, i32 -> vector<16x1280xf32>
    %24 = vector.broadcast %1 : vector<1x1280xf32> to vector<16x1280xf32>
    %25 = arith.mulf %22, %24 : vector<16x1280xf32>
    %26 = vector.broadcast %2 : vector<1x1280xf32> to vector<16x1280xf32>
    %27 = arith.mulf %23, %26 : vector<16x1280xf32>
    %28 = tpu.concatenate %25, %21, %27 in 0 : vector<16x1280xf32>, vector<16x1280xf32>, vector<16x1280xf32> -> vector<48x1280xf32>
    %c0_13 = arith.constant 0 : index
    %c0_14 = arith.constant 0 : index
    %29 = vector.load %arg7[%c0_13, %c0_14] : memref<16x48xbf16, #tpu.memory_space<vmem>>, vector<16x48xbf16>
    %30 = arith.truncf %28 : vector<48x1280xf32> to vector<48x1280xbf16>
    %cst_15 = arith.constant dense<0.000000e+00> : vector<16x1280xf32>
    %31 = tpu.matmul %29, %30, %cst_15 {dimension_numbers = #tpu.dot_dimension_numbers<[1], [0], [0], [1], [0, 0, 1, 1], [], []>} : vector<16x48xbf16>, vector<48x1280xbf16>, vector<16x1280xf32> -> vector<16x1280xf32>
    %c0_16 = arith.constant 0 : index
    %c0_17 = arith.constant 0 : index
    %32 = vector.load %arg8[%c0_16, %c0_17] : memref<16x1xf32, #tpu.memory_space<vmem>>, vector<16x1xf32>
    %33 = vector.broadcast %32 : vector<16x1xf32> to vector<16x1280xf32>
    %34 = arith.addf %31, %33 : vector<16x1280xf32>
    %cst_18 = arith.constant 0.000000e+00 : f32
    %35 = vector.broadcast %cst_18 : f32 to vector<16x1280xf32>
    %36 = arith.maximumf %34, %35 : vector<16x1280xf32>
    %c16_i32 = arith.constant 16 : i32
    %37 = tpu.dynamic_rotate %36 by %c16_i32 dim 1 : vector<16x1280xf32>, i32 -> vector<16x1280xf32>
    %c1264_i32 = arith.constant 1264 : i32
    %38 = tpu.dynamic_rotate %36 by %c1264_i32 dim 1 : vector<16x1280xf32>, i32 -> vector<16x1280xf32>
    %39 = vector.broadcast %3 : vector<1x1280xf32> to vector<16x1280xf32>
    %40 = arith.mulf %37, %39 : vector<16x1280xf32>
    %41 = vector.broadcast %4 : vector<1x1280xf32> to vector<16x1280xf32>
    %42 = arith.mulf %38, %41 : vector<16x1280xf32>
    %43 = tpu.concatenate %40, %36, %42 in 0 : vector<16x1280xf32>, vector<16x1280xf32>, vector<16x1280xf32> -> vector<48x1280xf32>
    %c0_19 = arith.constant 0 : index
    %c0_20 = arith.constant 0 : index
    %44 = vector.load %arg9[%c0_19, %c0_20] : memref<16x48xbf16, #tpu.memory_space<vmem>>, vector<16x48xbf16>
    %45 = arith.truncf %43 : vector<48x1280xf32> to vector<48x1280xbf16>
    %cst_21 = arith.constant dense<0.000000e+00> : vector<16x1280xf32>
    %46 = tpu.matmul %44, %45, %cst_21 {dimension_numbers = #tpu.dot_dimension_numbers<[1], [0], [0], [1], [0, 0, 1, 1], [], []>} : vector<16x48xbf16>, vector<48x1280xbf16>, vector<16x1280xf32> -> vector<16x1280xf32>
    %c0_22 = arith.constant 0 : index
    %c0_23 = arith.constant 0 : index
    %47 = vector.load %arg10[%c0_22, %c0_23] : memref<16x1xf32, #tpu.memory_space<vmem>>, vector<16x1xf32>
    %48 = vector.broadcast %47 : vector<16x1xf32> to vector<16x1280xf32>
    %49 = arith.addf %46, %48 : vector<16x1280xf32>
    %50 = arith.addf %49, %34 : vector<16x1280xf32>
    %51 = vector.extract_strided_slice %34 {offsets = [0, 128], sizes = [16, 1024], strides = [1, 1]} : vector<16x1280xf32> to vector<16x1024xf32>
    %52 = vector.extract_strided_slice %50 {offsets = [0, 128], sizes = [16, 1024], strides = [1, 1]} : vector<16x1280xf32> to vector<16x1024xf32>
    %53 = arith.addf %51, %52 : vector<16x1024xf32>
    %c0_i32 = arith.constant 0 : i32
    %54 = arith.cmpi eq, %arg1, %c0_i32 : i32
    %cst_24 = arith.constant 1.000000e+00 : f32
    %cst_25 = arith.constant 0.000000e+00 : f32
    %55 = arith.select %54, %cst_24, %cst_25 : f32
    %c1_i32_26 = arith.constant 1 : i32
    %56 = arith.cmpi eq, %arg1, %c1_i32_26 : i32
    %cst_27 = arith.constant 1.000000e+00 : f32
    %cst_28 = arith.constant 0.000000e+00 : f32
    %57 = arith.select %56, %cst_27, %cst_28 : f32
    %58 = vector.broadcast %55 : f32 to vector<1x1280xf32>
    %59 = arith.mulf %58, %5 : vector<1x1280xf32>
    %60 = vector.broadcast %57 : f32 to vector<1x1280xf32>
    %61 = arith.mulf %60, %6 : vector<1x1280xf32>
    %62 = arith.addf %59, %61 : vector<1x1280xf32>
    %cst_29 = arith.constant 1.000000e+00 : f32
    %63 = vector.broadcast %cst_29 : f32 to vector<1x1280xf32>
    %64 = arith.subf %63, %62 : vector<1x1280xf32>
    %cst_30 = arith.constant 0.000000e+00 : f32
    %65 = vector.broadcast %cst_30 : f32 to vector<16x1280xf32>
    %66 = arith.maximumf %50, %65 : vector<16x1280xf32>
    %67 = vector.broadcast %64 : vector<1x1280xf32> to vector<16x1280xf32>
    %68 = arith.mulf %66, %67 : vector<16x1280xf32>
    %c128_i32 = arith.constant 128 : i32
    %69 = tpu.dynamic_rotate %68 by %c128_i32 dim 1 : vector<16x1280xf32>, i32 -> vector<16x1280xf32>
    %c1152_i32 = arith.constant 1152 : i32
    %70 = tpu.dynamic_rotate %68 by %c1152_i32 dim 1 : vector<16x1280xf32>, i32 -> vector<16x1280xf32>
    %71 = tpu.concatenate %69, %68, %70 in 0 : vector<16x1280xf32>, vector<16x1280xf32>, vector<16x1280xf32> -> vector<48x1280xf32>
    %72 = vector.extract_strided_slice %71 {offsets = [0, 128], sizes = [48, 1024], strides = [1, 1]} : vector<48x1280xf32> to vector<48x1024xf32>
    %c0_31 = arith.constant 0 : index
    %c0_32 = arith.constant 0 : index
    %73 = vector.load %arg11[%c0_31, %c0_32] : memref<16x48xbf16, #tpu.memory_space<vmem>>, vector<16x48xbf16>
    %74 = arith.truncf %72 : vector<48x1024xf32> to vector<48x1024xbf16>
    %cst_33 = arith.constant dense<0.000000e+00> : vector<16x1024xf32>
    %75 = tpu.matmul %73, %74, %cst_33 {dimension_numbers = #tpu.dot_dimension_numbers<[1], [0], [0], [1], [0, 0, 1, 1], [], []>} : vector<16x48xbf16>, vector<48x1024xbf16>, vector<16x1024xf32> -> vector<16x1024xf32>
    %c0_34 = arith.constant 0 : index
    %c0_35 = arith.constant 0 : index
    %76 = vector.load %arg12[%c0_34, %c0_35] : memref<16x1xf32, #tpu.memory_space<vmem>>, vector<16x1xf32>
    %77 = vector.broadcast %76 : vector<16x1xf32> to vector<16x1024xf32>
    %78 = arith.addf %75, %77 : vector<16x1024xf32>
    %79 = arith.addf %78, %53 : vector<16x1024xf32>
    %cst_36 = arith.constant 0.000000e+00 : f32
    %80 = vector.broadcast %cst_36 : f32 to vector<16x1024xf32>
    %81 = arith.maximumf %79, %80 : vector<16x1024xf32>
    %82 = arith.truncf %81 : vector<16x1024xf32> to vector<16x1024xbf16>
    %c0_37 = arith.constant 0 : index
    %c0_38 = arith.constant 0 : index
    %83 = vector.load %arg13[%c0_37, %c0_38] : memref<64x16xbf16, #tpu.memory_space<vmem>>, vector<64x16xbf16>
    %cst_39 = arith.constant dense<0.000000e+00> : vector<64x1024xf32>
    %84 = tpu.matmul %83, %82, %cst_39 {dimension_numbers = #tpu.dot_dimension_numbers<[1], [0], [0], [1], [0, 0, 1, 1], [], []>} : vector<64x16xbf16>, vector<16x1024xbf16>, vector<64x1024xf32> -> vector<64x1024xf32>
    %c0_40 = arith.constant 0 : index
    %c0_41 = arith.constant 0 : index
    %85 = vector.load %arg14[%c0_40, %c0_41] : memref<64x1xf32, #tpu.memory_space<vmem>>, vector<64x1xf32>
    %86 = vector.broadcast %85 : vector<64x1xf32> to vector<64x1024xf32>
    %87 = arith.addf %84, %86 : vector<64x1024xf32>
    %88 = arith.addf %87, %8 : vector<64x1024xf32>
    %cst_42 = arith.constant 0.000000e+00 : f32
    %89 = vector.broadcast %cst_42 : f32 to vector<64x1024xf32>
    %90 = arith.maximumf %88, %89 : vector<64x1024xf32>
    %c0_43 = arith.constant 0 : index
    %c0_44 = arith.constant 0 : index
    %c0_45 = arith.constant 0 : index
    %91 = vector.load %arg15[%c0_43, %c0_44, %c0_45] : memref<1x64x1024xf32, #tpu.memory_space<vmem>>, vector<1x64x1024xf32>
    %92 = vector.shape_cast %91 : vector<1x64x1024xf32> to vector<64x1024xf32>
    %93 = vector.shape_cast %90 : vector<64x1024xf32> to vector<1x64x1024xf32>
    tpu.vector_store %arg15[%c0_43, %c0_44, %c0_45], %93 {strides = array<i32>} : memref<1x64x1024xf32, #tpu.memory_space<vmem>>, vector<1x64x1024xf32>,
    return
  }
  func.func @transform_0(%arg0: i32, %arg1: i32) -> (i32, i32, i32) {
    %c0_i32 = arith.constant 0 : i32
    %c0_i32_0 = arith.constant 0 : i32
    return %arg0, %c0_i32, %arg1 : i32, i32, i32
  }
  func.func @transform_1(%arg0: i32, %arg1: i32) -> (i32, i32, i32, i32) {
    %c0_i32 = arith.constant 0 : i32
    %c0_i32_0 = arith.constant 0 : i32
    %c0_i32_1 = arith.constant 0 : i32
    return %arg0, %arg1, %c0_i32, %c0_i32_0 : i32, i32, i32, i32
  }
  func.func @transform_2(%arg0: i32, %arg1: i32) -> (i32, i32) {
    %c0_i32 = arith.constant 0 : i32
    %c0_i32_0 = arith.constant 0 : i32
    %c0_i32_1 = arith.constant 0 : i32
    return %c0_i32, %c0_i32_0 : i32, i32
  }
  func.func @transform_3(%arg0: i32, %arg1: i32) -> (i32, i32) {
    %c0_i32 = arith.constant 0 : i32
    %c0_i32_0 = arith.constant 0 : i32
    %c0_i32_1 = arith.constant 0 : i32
    return %c0_i32, %c0_i32_0 : i32, i32
  }
  func.func @transform_4(%arg0: i32, %arg1: i32) -> (i32, i32) {
    %c0_i32 = arith.constant 0 : i32
    %c0_i32_0 = arith.constant 0 : i32
    %c0_i32_1 = arith.constant 0 : i32
    return %c0_i32, %c0_i32_0 : i32, i32
  }
  func.func @transform_5(%arg0: i32, %arg1: i32) -> (i32, i32) {
    %c0_i32 = arith.constant 0 : i32
    %c0_i32_0 = arith.constant 0 : i32
    %c0_i32_1 = arith.constant 0 : i32
    return %c0_i32, %c0_i32_0 : i32, i32
  }
  func.func @transform_6(%arg0: i32, %arg1: i32) -> (i32, i32) {
    %c0_i32 = arith.constant 0 : i32
    %c0_i32_0 = arith.constant 0 : i32
    %c0_i32_1 = arith.constant 0 : i32
    return %c0_i32, %c0_i32_0 : i32, i32
  }
  func.func @transform_7(%arg0: i32, %arg1: i32) -> (i32, i32) {
    %c0_i32 = arith.constant 0 : i32
    %c0_i32_0 = arith.constant 0 : i32
    %c0_i32_1 = arith.constant 0 : i32
    return %c0_i32, %c0_i32_0 : i32, i32
  }
  func.func @transform_8(%arg0: i32, %arg1: i32) -> (i32, i32) {
    %c0_i32 = arith.constant 0 : i32
    %c0_i32_0 = arith.constant 0 : i32
    %c0_i32_1 = arith.constant 0 : i32
    return %c0_i32, %c0_i32_0 : i32, i32
  }
  func.func @transform_9(%arg0: i32, %arg1: i32) -> (i32, i32) {
    %c0_i32 = arith.constant 0 : i32
    %c0_i32_0 = arith.constant 0 : i32
    %c0_i32_1 = arith.constant 0 : i32
    return %c0_i32, %c0_i32_0 : i32, i32
  }
  func.func @transform_10(%arg0: i32, %arg1: i32) -> (i32, i32) {
    %c0_i32 = arith.constant 0 : i32
    %c0_i32_0 = arith.constant 0 : i32
    %c0_i32_1 = arith.constant 0 : i32
    return %c0_i32, %c0_i32_0 : i32, i32
  }
  func.func @transform_11(%arg0: i32, %arg1: i32) -> (i32, i32) {
    %c0_i32 = arith.constant 0 : i32
    %c0_i32_0 = arith.constant 0 : i32
    %c0_i32_1 = arith.constant 0 : i32
    return %c0_i32, %c0_i32_0 : i32, i32
  }
  func.func @transform_12(%arg0: i32, %arg1: i32) -> (i32, i32) {
    %c0_i32 = arith.constant 0 : i32
    %c0_i32_0 = arith.constant 0 : i32
    %c0_i32_1 = arith.constant 0 : i32
    return %c0_i32, %c0_i32_0 : i32, i32
  }
  func.func @transform_13(%arg0: i32, %arg1: i32) -> (i32, i32, i32) {
    %c0_i32 = arith.constant 0 : i32
    %c0_i32_0 = arith.constant 0 : i32
    return %arg0, %c0_i32, %arg1 : i32, i32, i32
  }
}

</mosaic_0001>

<llo_original>
// kernel: tpu_custom_call.1
$region0: #{tpu_custom_call.1}
  #allocation0 [shape = 'u32[]', space=smem, size = 0x4, offset = 0x4, fixed_abs, tag = 'smem constant byte address 0x4 - core index']
  #allocation1 [shape = 'u32[144,128]{1,0:T(1,128)}', space=vmem, size = 0x12000, scoped, tag = 'internal scratch']
  %s0 = inlined_call_operand.hbm [shape: f32[2,64,2048], index: 0, kind: input, shape index: {}]
  %s1 = inlined_call_operand.hbm [shape: f32[2,2,64,256], index: 1, kind: input, shape index: {}]
  %s2 = inlined_call_operand.vmem [shape: f32[6,1280], index: 2, kind: input, shape index: {}]
  %s3 = inlined_call_operand.vmem [shape: bf16[16,64], index: 3, kind: input, shape index: {}]
  %s4 = inlined_call_operand.vmem [shape: f32[16,1], index: 4, kind: input, shape index: {}]
  %s5 = inlined_call_operand.vmem [shape: bf16[16,48], index: 5, kind: input, shape index: {}]
  %s6 = inlined_call_operand.vmem [shape: f32[16,1], index: 6, kind: input, shape index: {}]
  %s7 = inlined_call_operand.vmem [shape: bf16[16,48], index: 7, kind: input, shape index: {}]
  %s8 = inlined_call_operand.vmem [shape: f32[16,1], index: 8, kind: input, shape index: {}]
  %s9 = inlined_call_operand.vmem [shape: bf16[16,48], index: 9, kind: input, shape index: {}]
  %s10 = inlined_call_operand.vmem [shape: f32[16,1], index: 10, kind: input, shape index: {}]
  %s11 = inlined_call_operand.vmem [shape: bf16[64,16], index: 11, kind: input, shape index: {}]
  %s12 = inlined_call_operand.vmem [shape: f32[64,1], index: 12, kind: input, shape index: {}]
  %s13 = inlined_call_operand.hbm [shape: f32[2,64,2048], index: 13, kind: output, shape index: {}]
  %s14 = sld [smem:[#allocation0]]
  $region93: #{tpu_custom_call.1} parent=0
    _
  %s16 = ssub.s32 1, %s14
  %s17 = scalar_select 0, %s16, %s14
  $region1: #{tpu_custom_call.1} parent=0
    #allocation2 [shape = 'u8[524288]{0}', space=vmem, size = 0x80000, scoped, tag = 'input window, operand 0']
    #allocation3 [shape = 's32[2]{0}', space=sflag, size = 0x8, scoped, tag = 'scoped memory for tpu_custom_call.1']
    #allocation4 [shape = 's32[2]{0}', space=sflag, size = 0x8, scoped, tag = 'scoped memory for tpu_custom_call.1']
    #allocation5 [shape = 'u8[131072]{0}', space=vmem, size = 0x20000, scoped, tag = 'input window, operand 1']
    #allocation6 [shape = 's32[2]{0}', space=sflag, size = 0x8, scoped, tag = 'scoped memory for tpu_custom_call.1']
    #allocation7 [shape = 'u8[524288]{0}', space=vmem, size = 0x80000, scoped, tag = 'output window, operand 0']
    %18 = vsyncpa [#allocation3], 0
    %s19 = scalar_lea.sflag [#allocation3], 1
    %20 = vsyncpa %s19, 0
    %21 = vsyncpa [#allocation6], 0
    %s22 = scalar_lea.sflag [#allocation6], 1
    %23 = vsyncpa %s22, 0
    %24 = vsyncpa [#allocation4], 0
    %s25 = scalar_lea.sflag [#allocation4], 1
    %26 = vsyncpa %s25, 0
    loop: start=0, step=1, limit=6
    $region2: #{tpu_custom_call.1} parent=1 // loop_pre_header
      _
    $region3: #{tpu_custom_call.1} parent=1 // loop_header
      %s28 = sphi 0, %s32
      %p29 = scmp.ge.s32.totalorder %s28, 6
      %s35 = sphi 0, %s47
      %s36 = sphi 0, %s43
      %s37 = sphi 0, %s35
      %s38 = sphi 0, %s36
      %s39 = sphi 0, %s37
      %s40 = sphi 0, %s38
      %s52 = sphi 0, %s54
      %s55 = sphi 0, %s52
      %s56 = sphi 0, %s55
      %s72 = sphi 0, %s56
      %s80 = sphi 0, %s82
      %s83 = sphi 0, %s80
      %s84 = sphi 0, %s83
      %s100 = sphi 0, %s84
      %s104 = sphi 0, %s104
      %s106 = sphi 0, %s104
      %s107 = sphi 0, %s106
      %s121 = sphi 0, %s107
      %s125 = sphi 0, %s125
      %s127 = sphi 0, %s125
      %s128 = sphi 0, %s127
      %s142 = sphi 0, %s128
      %s146 = sphi 0, %s146
      %s148 = sphi 0, %s146
      %s149 = sphi 0, %s148
      %s163 = sphi 0, %s149
      %s167 = sphi 0, %s167
      %s169 = sphi 0, %s167
      %s170 = sphi 0, %s169
      %s184 = sphi 0, %s170
      %s188 = sphi 0, %s188
      %s190 = sphi 0, %s188
      %s191 = sphi 0, %s190
      %s205 = sphi 0, %s191
      %s209 = sphi 0, %s209
      %s211 = sphi 0, %s209
      %s212 = sphi 0, %s211
      %s226 = sphi 0, %s212
      %s230 = sphi 0, %s230
      %s232 = sphi 0, %s230
      %s233 = sphi 0, %s232
      %s247 = sphi 0, %s233
      %s251 = sphi 0, %s251
      %s253 = sphi 0, %s251
      %s254 = sphi 0, %s253
      %s268 = sphi 0, %s254
      %s272 = sphi 0, %s272
      %s274 = sphi 0, %s272
      %s275 = sphi 0, %s274
      %s289 = sphi 0, %s275
      %s293 = sphi 0, %s293
      %s295 = sphi 0, %s293
      %s296 = sphi 0, %s295
      %s310 = sphi 0, %s296
      %s314 = sphi 0, %s314
      %s316 = sphi 0, %s314
      %s317 = sphi 0, %s316
      %s331 = sphi 0, %s317
      %s339 = sphi 0, %s341
      %s342 = sphi 0, %s339
      %s343 = sphi 0, %s342
      %s359 = sphi 0, %s343
    $region4: #{tpu_custom_call.1} parent=1 // loop_header_branch
      %31 = sbr.rel (%p29) target = $region8
    $region5: #{tpu_custom_call.1} parent=1 // loop_body
      %s33 = ssub.s32 %s28, 1
      %s34 = ssub.s32 %s28, 2
      %s41 = sadd.s32 1, %s36
      %p42 = scmp.ge.s32.totalorder %s41, 2
      %s43 = scalar_select %p42, 0, %s41
      %s44 = sadd.s32 1, %s35
      %s45 = scalar_select %p42, %s44, %s35
      %p46 = scmp.ge.s32.totalorder %s45, 2
      %s47 = scalar_select %p46, 0, %s45
      %s48 = ssub.s32 %s35, %s47
      %s49 = ssub.s32 %s36, %s43
      %s50 = sor.u32 %s48, %s49
      %p51 = scmp.eq.s32.totalorder %s50, 0
      %s53 = sadd.s32 %s52, 1
      %s54 = scalar_select %p51, %s52, %s53
      %p57 = pneg %p51
      %p58 = scmp.eq.s32.totalorder %s28, 3
      %p59 = por %p57, %p58
      %p60 = scmp.ne.s32.totalorder %s52, %s55
      %p61 = scmp.eq.s32.totalorder %s28, 0
      %p62 = por %p60, %p61
      %p63 = scmp.ne.s32.totalorder %s52, %s55
      %p64 = scmp.eq.s32.totalorder %s33, 3
      %p65 = por %p63, %p64
      %p66 = scmp.ne.s32.totalorder %s55, %s56
      %p67 = scmp.eq.s32.totalorder %s33, 0
      %p68 = por %p66, %p67
      %p69 = scmp.ne.s32.totalorder %s55, %s56
      %p70 = scmp.eq.s32.totalorder %s34, 3
      %p71 = por %p69, %p70
      %p73 = scmp.ne.s32.totalorder %s56, %s72
      %p74 = scmp.eq.s32.totalorder %s34, 0
      %p75 = por %p73, %p74
      %s76 = ssub.s32 %s35, %s47
      %s77 = ssub.s32 %s36, %s43
      %s78 = sor.u32 %s76, %s77
      %p79 = scmp.eq.s32.totalorder %s78, 0
      %s81 = sadd.s32 %s80, 1
      %s82 = scalar_select %p79, %s80, %s81
      %p85 = pneg %p79
      %p86 = scmp.eq.s32.totalorder %s28, 3
      %p87 = por %p85, %p86
      %p88 = scmp.ne.s32.totalorder %s80, %s83
      %p89 = scmp.eq.s32.totalorder %s28, 0
      %p90 = por %p88, %p89
      %p91 = scmp.ne.s32.totalorder %s80, %s83
      %p92 = scmp.eq.s32.totalorder %s33, 3
      %p93 = por %p91, %p92
      %p94 = scmp.ne.s32.totalorder %s83, %s84
      %p95 = scmp.eq.s32.totalorder %s33, 0
      %p96 = por %p94, %p95
      %p97 = scmp.ne.s32.totalorder %s83, %s84
      %p98 = scmp.eq.s32.totalorder %s34, 3
      %p99 = por %p97, %p98
      %p101 = scmp.ne.s32.totalorder %s84, %s100
      %p102 = scmp.eq.s32.totalorder %s34, 0
      %p103 = por %p101, %p102
      %s105 = sadd.s32 %s104, 1
      %p108 = scmp.eq.s32.totalorder %s28, 3
      %p109 = scmp.ne.s32.totalorder %s104, %s106
      %p110 = scmp.eq.s32.totalorder %s28, 0
      %p111 = por %p109, %p110
      %p112 = scmp.ne.s32.totalorder %s104, %s106
      %p113 = scmp.eq.s32.totalorder %s33, 3
      %p114 = por %p112, %p113
      %p115 = scmp.ne.s32.totalorder %s106, %s107
      %p116 = scmp.eq.s32.totalorder %s33, 0
      %p117 = por %p115, %p116
      %p118 = scmp.ne.s32.totalorder %s106, %s107
      %p119 = scmp.eq.s32.totalorder %s34, 3
      %p120 = por %p118, %p119
      %p122 = scmp.ne.s32.totalorder %s107, %s121
      %p123 = scmp.eq.s32.totalorder %s34, 0
      %p124 = por %p122, %p123
      %s126 = sadd.s32 %s125, 1
      %p129 = scmp.eq.s32.totalorder %s28, 3
      %p130 = scmp.ne.s32.totalorder %s125, %s127
      %p131 = scmp.eq.s32.totalorder %s28, 0
      %p132 = por %p130, %p131
      %p133 = scmp.ne.s32.totalorder %s125, %s127
      %p134 = scmp.eq.s32.totalorder %s33, 3
      %p135 = por %p133, %p134
      %p136 = scmp.ne.s32.totalorder %s127, %s128
      %p137 = scmp.eq.s32.totalorder %s33, 0
      %p138 = por %p136, %p137
      %p139 = scmp.ne.s32.totalorder %s127, %s128
      %p140 = scmp.eq.s32.totalorder %s34, 3
      %p141 = por %p139, %p140
      %p143 = scmp.ne.s32.totalorder %s128, %s142
      %p144 = scmp.eq.s32.totalorder %s34, 0
      %p145 = por %p143, %p144
      %s147 = sadd.s32 %s146, 1
      %p150 = scmp.eq.s32.totalorder %s28, 3
      %p151 = scmp.ne.s32.totalorder %s146, %s148
      %p152 = scmp.eq.s32.totalorder %s28, 0
      %p153 = por %p151, %p152
      %p154 = scmp.ne.s32.totalorder %s146, %s148
      %p155 = scmp.eq.s32.totalorder %s33, 3
      %p156 = por %p154, %p155
      %p157 = scmp.ne.s32.totalorder %s148, %s149
      %p158 = scmp.eq.s32.totalorder %s33, 0
      %p159 = por %p157, %p158
      %p160 = scmp.ne.s32.totalorder %s148, %s149
      %p161 = scmp.eq.s32.totalorder %s34, 3
      %p162 = por %p160, %p161
      %p164 = scmp.ne.s32.totalorder %s149, %s163
      %p165 = scmp.eq.s32.totalorder %s34, 0
      %p166 = por %p164, %p165
      %s168 = sadd.s32 %s167, 1
      %p171 = scmp.eq.s32.totalorder %s28, 3
      %p172 = scmp.ne.s32.totalorder %s167, %s169
      %p173 = scmp.eq.s32.totalorder %s28, 0
      %p174 = por %p172, %p173
      %p175 = scmp.ne.s32.totalorder %s167, %s169
      %p176 = scmp.eq.s32.totalorder %s33, 3
      %p177 = por %p175, %p176
      %p178 = scmp.ne.s32.totalorder %s169, %s170
      %p179 = scmp.eq.s32.totalorder %s33, 0
      %p180 = por %p178, %p179
      %p181 = scmp.ne.s32.totalorder %s169, %s170
      %p182 = scmp.eq.s32.totalorder %s34, 3
      %p183 = por %p181, %p182
      %p185 = scmp.ne.s32.totalorder %s170, %s184
      %p186 = scmp.eq.s32.totalorder %s34, 0
      %p187 = por %p185, %p186
      %s189 = sadd.s32 %s188, 1
      %p192 = scmp.eq.s32.totalorder %s28, 3
      %p193 = scmp.ne.s32.totalorder %s188, %s190
      %p194 = scmp.eq.s32.totalorder %s28, 0
      %p195 = por %p193, %p194
      %p196 = scmp.ne.s32.totalorder %s188, %s190
      %p197 = scmp.eq.s32.totalorder %s33, 3
      %p198 = por %p196, %p197
      %p199 = scmp.ne.s32.totalorder %s190, %s191
      %p200 = scmp.eq.s32.totalorder %s33, 0
      %p201 = por %p199, %p200
      %p202 = scmp.ne.s32.totalorder %s190, %s191
      %p203 = scmp.eq.s32.totalorder %s34, 3
      %p204 = por %p202, %p203
      %p206 = scmp.ne.s32.totalorder %s191, %s205
      %p207 = scmp.eq.s32.totalorder %s34, 0
      %p208 = por %p206, %p207
      %s210 = sadd.s32 %s209, 1
      %p213 = scmp.eq.s32.totalorder %s28, 3
      %p214 = scmp.ne.s32.totalorder %s209, %s211
      %p215 = scmp.eq.s32.totalorder %s28, 0
      %p216 = por %p214, %p215
      %p217 = scmp.ne.s32.totalorder %s209, %s211
      %p218 = scmp.eq.s32.totalorder %s33, 3
      %p219 = por %p217, %p218
      %p220 = scmp.ne.s32.totalorder %s211, %s212
      %p221 = scmp.eq.s32.totalorder %s33, 0
      %p222 = por %p220, %p221
      %p223 = scmp.ne.s32.totalorder %s211, %s212
      %p224 = scmp.eq.s32.totalorder %s34, 3
      %p225 = por %p223, %p224
      %p227 = scmp.ne.s32.totalorder %s212, %s226
      %p228 = scmp.eq.s32.totalorder %s34, 0
      %p229 = por %p227, %p228
      %s231 = sadd.s32 %s230, 1
      %p234 = scmp.eq.s32.totalorder %s28, 3
      %p235 = scmp.ne.s32.totalorder %s230, %s232
      %p236 = scmp.eq.s32.totalorder %s28, 0
      %p237 = por %p235, %p236
      %p238 = scmp.ne.s32.totalorder %s230, %s232
      %p239 = scmp.eq.s32.totalorder %s33, 3
      %p240 = por %p238, %p239
      %p241 = scmp.ne.s32.totalorder %s232, %s233
      %p242 = scmp.eq.s32.totalorder %s33, 0
      %p243 = por %p241, %p242
      %p244 = scmp.ne.s32.totalorder %s232, %s233
      %p245 = scmp.eq.s32.totalorder %s34, 3
      %p246 = por %p244, %p245
      %p248 = scmp.ne.s32.totalorder %s233, %s247
      %p249 = scmp.eq.s32.totalorder %s34, 0
      %p250 = por %p248, %p249
      %s252 = sadd.s32 %s251, 1
      %p255 = scmp.eq.s32.totalorder %s28, 3
      %p256 = scmp.ne.s32.totalorder %s251, %s253
      %p257 = scmp.eq.s32.totalorder %s28, 0
      %p258 = por %p256, %p257
      %p259 = scmp.ne.s32.totalorder %s251, %s253
      %p260 = scmp.eq.s32.totalorder %s33, 3
      %p261 = por %p259, %p260
      %p262 = scmp.ne.s32.totalorder %s253, %s254
      %p263 = scmp.eq.s32.totalorder %s33, 0
      %p264 = por %p262, %p263
      %p265 = scmp.ne.s32.totalorder %s253, %s254
      %p266 = scmp.eq.s32.totalorder %s34, 3
      %p267 = por %p265, %p266
      %p269 = scmp.ne.s32.totalorder %s254, %s268
      %p270 = scmp.eq.s32.totalorder %s34, 0
      %p271 = por %p269, %p270
      %s273 = sadd.s32 %s272, 1
      %p276 = scmp.eq.s32.totalorder %s28, 3
      %p277 = scmp.ne.s32.totalorder %s272, %s274
      %p278 = scmp.eq.s32.totalorder %s28, 0
      %p279 = por %p277, %p278
      %p280 = scmp.ne.s32.totalorder %s272, %s274
      %p281 = scmp.eq.s32.totalorder %s33, 3
      %p282 = por %p280, %p281
      %p283 = scmp.ne.s32.totalorder %s274, %s275
      %p284 = scmp.eq.s32.totalorder %s33, 0
      %p285 = por %p283, %p284
      %p286 = scmp.ne.s32.totalorder %s274, %s275
      %p287 = scmp.eq.s32.totalorder %s34, 3
      %p288 = por %p286, %p287
      %p290 = scmp.ne.s32.totalorder %s275, %s289
      %p291 = scmp.eq.s32.totalorder %s34, 0
      %p292 = por %p290, %p291
      %s294 = sadd.s32 %s293, 1
      %p297 = scmp.eq.s32.totalorder %s28, 3
      %p298 = scmp.ne.s32.totalorder %s293, %s295
      %p299 = scmp.eq.s32.totalorder %s28, 0
      %p300 = por %p298, %p299
      %p301 = scmp.ne.s32.totalorder %s293, %s295
      %p302 = scmp.eq.s32.totalorder %s33, 3
      %p303 = por %p301, %p302
      %p304 = scmp.ne.s32.totalorder %s295, %s296
      %p305 = scmp.eq.s32.totalorder %s33, 0
      %p306 = por %p304, %p305
      %p307 = scmp.ne.s32.totalorder %s295, %s296
      %p308 = scmp.eq.s32.totalorder %s34, 3
      %p309 = por %p307, %p308
      %p311 = scmp.ne.s32.totalorder %s296, %s310
      %p312 = scmp.eq.s32.totalorder %s34, 0
      %p313 = por %p311, %p312
      %s315 = sadd.s32 %s314, 1
      %p318 = scmp.eq.s32.totalorder %s28, 3
      %p319 = scmp.ne.s32.totalorder %s314, %s316
      %p320 = scmp.eq.s32.totalorder %s28, 0
      %p321 = por %p319, %p320
      %p322 = scmp.ne.s32.totalorder %s314, %s316
      %p323 = scmp.eq.s32.totalorder %s33, 3
      %p324 = por %p322, %p323
      %p325 = scmp.ne.s32.totalorder %s316, %s317
      %p326 = scmp.eq.s32.totalorder %s33, 0
      %p327 = por %p325, %p326
      %p328 = scmp.ne.s32.totalorder %s316, %s317
      %p329 = scmp.eq.s32.totalorder %s34, 3
      %p330 = por %p328, %p329
      %p332 = scmp.ne.s32.totalorder %s317, %s331
      %p333 = scmp.eq.s32.totalorder %s34, 0
      %p334 = por %p332, %p333
      %s335 = ssub.s32 %s35, %s47
      %s336 = ssub.s32 %s36, %s43
      %s337 = sor.u32 %s335, %s336
      %p338 = scmp.eq.s32.totalorder %s337, 0
      %s340 = sadd.s32 %s339, 1
      %s341 = scalar_select %p338, %s339, %s340
      %p344 = pneg %p338
      %p345 = scmp.eq.s32.totalorder %s28, 3
      %p346 = por %p344, %p345
      %p347 = scmp.ne.s32.totalorder %s339, %s342
      %p348 = scmp.eq.s32.totalorder %s28, 0
      %p349 = por %p347, %p348
      %p350 = scmp.ne.s32.totalorder %s339, %s342
      %p351 = scmp.eq.s32.totalorder %s33, 3
      %p352 = por %p350, %p351
      %p353 = scmp.ne.s32.totalorder %s342, %s343
      %p354 = scmp.eq.s32.totalorder %s33, 0
      %p355 = por %p353, %p354
      %p356 = scmp.ne.s32.totalorder %s342, %s343
      %p357 = scmp.eq.s32.totalorder %s34, 3
      %p358 = por %p356, %p357
      %p360 = scmp.ne.s32.totalorder %s343, %s359
      %p361 = scmp.eq.s32.totalorder %s34, 0
      %p362 = por %p360, %p361
      %p363 = scmp.le.s32.totalorder 1, %s28
      %p364 = scmp.lt.s32.totalorder %s28, 5
      %p365 = pnand %p363, %p364
      %p366 = pneg %p365
      // Predicated region
      $region9: #{tpu_custom_call.1} parent=5 // pred_check
        _
      $region10: #{tpu_custom_call.1} parent=5 // pred_check_branch
        %368 = sbr.rel (%p365) target = $region12
      $region11: #{tpu_custom_call.1} parent=5 // pred_region
        %s369 = ssub.s32 %s28, 1
        // Predicated region
        $region13: #{tpu_custom_call.1} parent=11 // pred_check
          %p370 = pneg %p117
        $region14: #{tpu_custom_call.1} parent=11 // pred_check_branch
          %372 = sbr.rel (%p370) target = $region16
        $region15: #{tpu_custom_call.1} parent=11 // pred_region
          _
        $region16: #{tpu_custom_call.1} parent=11 // pred_fallthru
          _
        // Predicated region
        $region17: #{tpu_custom_call.1} parent=11 // pred_check
          %p373 = pneg %p138
        $region18: #{tpu_custom_call.1} parent=11 // pred_check_branch
          %375 = sbr.rel (%p373) target = $region20
        $region19: #{tpu_custom_call.1} parent=11 // pred_region
          _
        $region20: #{tpu_custom_call.1} parent=11 // pred_fallthru
          _
        // Predicated region
        $region21: #{tpu_custom_call.1} parent=11 // pred_check
          %p376 = pneg %p159
        $region22: #{tpu_custom_call.1} parent=11 // pred_check_branch
          %378 = sbr.rel (%p376) target = $region24
        $region23: #{tpu_custom_call.1} parent=11 // pred_region
          _
        $region24: #{tpu_custom_call.1} parent=11 // pred_fallthru
          _
        // Predicated region
        $region25: #{tpu_custom_call.1} parent=11 // pred_check
          %p379 = pneg %p180
        $region26: #{tpu_custom_call.1} parent=11 // pred_check_branch
          %381 = sbr.rel (%p379) target = $region28
        $region27: #{tpu_custom_call.1} parent=11 // pred_region
          _
        $region28: #{tpu_custom_call.1} parent=11 // pred_fallthru
          _
        // Predicated region
        $region29: #{tpu_custom_call.1} parent=11 // pred_check
          %p382 = pneg %p201
        $region30: #{tpu_custom_call.1} parent=11 // pred_check_branch
          %384 = sbr.rel (%p382) target = $region32
        $region31: #{tpu_custom_call.1} parent=11 // pred_region
          _
        $region32: #{tpu_custom_call.1} parent=11 // pred_fallthru
          _
        // Predicated region
        $region33: #{tpu_custom_call.1} parent=11 // pred_check
          %p385 = pneg %p222
        $region34: #{tpu_custom_call.1} parent=11 // pred_check_branch
          %387 = sbr.rel (%p385) target = $region36
        $region35: #{tpu_custom_call.1} parent=11 // pred_region
          _
        $region36: #{tpu_custom_call.1} parent=11 // pred_fallthru
          _
        // Predicated region
        $region37: #{tpu_custom_call.1} parent=11 // pred_check
          %p388 = pneg %p243
        $region38: #{tpu_custom_call.1} parent=11 // pred_check_branch
          %390 = sbr.rel (%p388) target = $region40
        $region39: #{tpu_custom_call.1} parent=11 // pred_region
          _
        $region40: #{tpu_custom_call.1} parent=11 // pred_fallthru
          _
        // Predicated region
        $region41: #{tpu_custom_call.1} parent=11 // pred_check
          %p391 = pneg %p264
        $region42: #{tpu_custom_call.1} parent=11 // pred_check_branch
          %393 = sbr.rel (%p391) target = $region44
        $region43: #{tpu_custom_call.1} parent=11 // pred_region
          _
        $region44: #{tpu_custom_call.1} parent=11 // pred_fallthru
          _
        // Predicated region
        $region45: #{tpu_custom_call.1} parent=11 // pred_check
          %p394 = pneg %p285
        $region46: #{tpu_custom_call.1} parent=11 // pred_check_branch
          %396 = sbr.rel (%p394) target = $region48
        $region47: #{tpu_custom_call.1} parent=11 // pred_region
          _
        $region48: #{tpu_custom_call.1} parent=11 // pred_fallthru
          _
        // Predicated region
        $region49: #{tpu_custom_call.1} parent=11 // pred_check
          %p397 = pneg %p306
        $region50: #{tpu_custom_call.1} parent=11 // pred_check_branch
          %399 = sbr.rel (%p397) target = $region52
        $region51: #{tpu_custom_call.1} parent=11 // pred_region
          _
        $region52: #{tpu_custom_call.1} parent=11 // pred_fallthru
          _
        // Predicated region
        $region53: #{tpu_custom_call.1} parent=11 // pred_check
          %p400 = pneg %p327
        $region54: #{tpu_custom_call.1} parent=11 // pred_check_branch
          %402 = sbr.rel (%p400) target = $region56
        $region55: #{tpu_custom_call.1} parent=11 // pred_region
          _
        $region56: #{tpu_custom_call.1} parent=11 // pred_fallthru
          _
      $region12: #{tpu_custom_call.1} parent=5 // pred_fallthru
        _
      %p403 = scmp.lt.s32.totalorder %s28, 4
      // Predicated region
      $region57: #{tpu_custom_call.1} parent=5 // pred_check
        %p404 = pneg %p403
      $region58: #{tpu_custom_call.1} parent=5 // pred_check_branch
        %406 = sbr.rel (%p404) target = $region60
      $region59: #{tpu_custom_call.1} parent=5 // pred_region
        // Predicated region
        $region61: #{tpu_custom_call.1} parent=59 // pred_check
          %p407 = pneg %p62
        $region62: #{tpu_custom_call.1} parent=59 // pred_check_branch
          %409 = sbr.rel (%p407) target = $region64
        $region63: #{tpu_custom_call.1} parent=59 // pred_region
          %s410 = sand.u32 %s52, 1
          %s411 = scalar_lea.sflag [#allocation3], %s410
          %s412 = sand.u32 %s52, 1
          %s413 = smul.addr %s412, 512
          %s414 = scalar_lea.vmem [#allocation2], %s413
          %s415 = smul.u32 8, %s36
          %s417 = ssub.s32 8192, 8192
          %418 = vsyncadd %s411, %s417
          %s419 = smul.addr %s35, 128
          %s420 = sadd.s32 %s415, %s419
          %s421 = smul.addr %s420, 128
          %s422 = scalar_lea.hbm %s0, %s421
          %s423 = sshll.u32 %s414, 4
          %s424 = int_to_ptr.vmem [resolvable:$true] %s423
          %429 = dma.hbm_to_vmem [thread:$0]  %s422, 8192, %s424, %s411, 2048, 1024, 64
        $region64: #{tpu_custom_call.1} parent=59 // pred_fallthru
          _
        // Predicated region
        $region65: #{tpu_custom_call.1} parent=59 // pred_check
          %p430 = pneg %p90
        $region66: #{tpu_custom_call.1} parent=59 // pred_check_branch
          %432 = sbr.rel (%p430) target = $region68
        $region67: #{tpu_custom_call.1} parent=59 // pred_region
          %s433 = sand.u32 %s80, 1
          %s434 = scalar_lea.sflag [#allocation6], %s433
          %s435 = sand.u32 %s80, 1
          %s436 = smul.addr %s435, 128
          %s437 = scalar_lea.vmem [#allocation5], %s436
          %s439 = ssub.s32 2048, 2048
          %440 = vsyncadd %s434, %s439
          %s441 = smul.addr %s36, 16
          %s442 = smul.addr %s35, 32
          %s443 = sadd.s32 %s441, %s442
          %s444 = smul.addr %s443, 128
          %s445 = scalar_lea.hbm %s1, %s444
          %s446 = sshll.u32 %s437, 4
          %s447 = int_to_ptr.vmem [resolvable:$true] %s446
          %452 = dma.hbm_to_vmem [thread:$0]  %s445, 2048, %s447, %s434, 256, 256, 16
        $region68: #{tpu_custom_call.1} parent=59 // pred_fallthru
          _
      $region60: #{tpu_custom_call.1} parent=5 // pred_fallthru
        _
      %p453 = scmp.le.s32.totalorder 1, %s28
      %p454 = scmp.lt.s32.totalorder %s28, 5
      %p455 = pnand %p453, %p454
      %p456 = pneg %p455
      // Predicated region
      $region69: #{tpu_custom_call.1} parent=5 // pred_check
        _
      $region70: #{tpu_custom_call.1} parent=5 // pred_check_branch
        %458 = sbr.rel (%p455) target = $region72
      $region71: #{tpu_custom_call.1} parent=5 // pred_region
        %s459 = ssub.s32 %s28, 1
        %s460 = sand.u32 %s55, 1
        %s461 = scalar_lea.sflag [#allocation3], %s460
        %s462 = sand.u32 %s55, 1
        %s463 = smul.addr %s462, 512
        %s464 = scalar_lea.vmem [#allocation2], %s463
        // Predicated region
        $region73: #{tpu_custom_call.1} parent=71 // pred_check
          %p465 = pneg %p68
        $region74: #{tpu_custom_call.1} parent=71 // pred_check_branch
          %467 = sbr.rel (%p465) target = $region76
        $region75: #{tpu_custom_call.1} parent=71 // pred_region
          %468 = dma.done %s461, 8192
        $region76: #{tpu_custom_call.1} parent=71 // pred_fallthru
          _
        %s469 = sand.u32 %s83, 1
        %s470 = scalar_lea.sflag [#allocation6], %s469
        %s471 = sand.u32 %s83, 1
        %s472 = smul.addr %s471, 128
        %s473 = scalar_lea.vmem [#allocation5], %s472
        // Predicated region
        $region77: #{tpu_custom_call.1} parent=71 // pred_check
          %p474 = pneg %p96
        $region78: #{tpu_custom_call.1} parent=71 // pred_check_branch
          %476 = sbr.rel (%p474) target = $region80
        $region79: #{tpu_custom_call.1} parent=71 // pred_region
          %477 = dma.done %s470, 2048
        $region80: #{tpu_custom_call.1} parent=71 // pred_fallthru
          _
        %s478 = sand.u32 %s55, 1
        %s479 = scalar_lea.sflag [#allocation3], %s478
        %s480 = sand.u32 %s55, 1
        %s481 = smul.addr %s480, 512
        %s482 = scalar_lea.vmem [#allocation2], %s481
        %p483 = pneg %p68
        %p484 = pneg %p65
        %s485 = sand.u32 %s83, 1
        %s486 = scalar_lea.sflag [#allocation6], %s485
        %s487 = sand.u32 %s83, 1
        %s488 = smul.addr %s487, 128
        %s489 = scalar_lea.vmem [#allocation5], %s488
        %p490 = pneg %p96
        %p491 = pneg %p93
        %p492 = pneg %p117
        %p493 = pneg %p114
        %p494 = pneg %p138
        %p495 = pneg %p135
        %p496 = pneg %p159
        %p497 = pneg %p156
        %p498 = pneg %p180
        %p499 = pneg %p177
        %p500 = pneg %p201
        %p501 = pneg %p198
        %p502 = pneg %p222
        %p503 = pneg %p219
        %p504 = pneg %p243
        %p505 = pneg %p240
        %p506 = pneg %p264
        %p507 = pneg %p261
        %p508 = pneg %p285
        %p509 = pneg %p282
        %p510 = pneg %p306
        %p511 = pneg %p303
        %p512 = pneg %p327
        %p513 = pneg %p324
        %p514 = pneg %p355
        %p515 = pneg %p352
        %s516 = sand.u32 %s342, 1
        %s517 = scalar_lea.sflag [#allocation4], %s516
        %s518 = sand.u32 %s342, 1
        %s519 = smul.addr %s518, 512
        %s520 = scalar_lea.vmem [#allocation7], %s519
        %s521 = smul.u32 8, %s38
        %s522 = smul.u32 8, %s38
        %v524 = vld [vmem:[%s2] sm:$0x3f]
        %v525 = vld [vmem:[%s2 + $0x8] sm:$0x3f]
        %v526 = vld [vmem:[%s2 + $0x10] sm:$0x3f]
        %v527 = vld [vmem:[%s2 + $0x18] sm:$0x3f]
        %v528 = vld [vmem:[%s2 + $0x20] sm:$0x3f]
        %v529 = vld [vmem:[%s2 + $0x28] sm:$0x3f]
        %v530 = vld [vmem:[%s2 + $0x30] sm:$0x3f]
        %v531 = vld [vmem:[%s2 + $0x38] sm:$0x3f]
        %v532 = vld [vmem:[%s2 + $0x40] sm:$0x3f]
        %v533 = vld [vmem:[%s2 + $0x48] sm:$0x3f]
        %v534 = vld [vmem:[%s464] sm:$0xff]
        %v535 = vld [vmem:[%s464 + $0x8] sm:$0xff]
        %v536 = vld [vmem:[%s464 + $0x10] sm:$0xff]
        %v537 = vld [vmem:[%s464 + $0x18] sm:$0xff]
        %v538 = vld [vmem:[%s464 + $0x20] sm:$0xff]
        %v539 = vld [vmem:[%s464 + $0x28] sm:$0xff]
        %v540 = vld [vmem:[%s464 + $0x30] sm:$0xff]
        %v541 = vld [vmem:[%s464 + $0x38] sm:$0xff]
        %v542 = vld [vmem:[%s464 + $0x40] sm:$0xff]
        %v543 = vld [vmem:[%s464 + $0x48] sm:$0xff]
        %v544 = vld [vmem:[%s464 + $0x50] sm:$0xff]
        %v545 = vld [vmem:[%s464 + $0x58] sm:$0xff]
        %v546 = vld [vmem:[%s464 + $0x60] sm:$0xff]
        %v547 = vld [vmem:[%s464 + $0x68] sm:$0xff]
        %v548 = vld [vmem:[%s464 + $0x70] sm:$0xff]
        %v549 = vld [vmem:[%s464 + $0x78] sm:$0xff]
        %v550 = vld [vmem:[%s464 + $0x80] sm:$0xff]
        %v551 = vld [vmem:[%s464 + $0x88] sm:$0xff]
        %v552 = vld [vmem:[%s464 + $0x90] sm:$0xff]
        %v553 = vld [vmem:[%s464 + $0x98] sm:$0xff]
        %v554 = vld [vmem:[%s464 + $0xa0] sm:$0xff]
        %v555 = vld [vmem:[%s464 + $0xa8] sm:$0xff]
        %v556 = vld [vmem:[%s464 + $0xb0] sm:$0xff]
        %v557 = vld [vmem:[%s464 + $0xb8] sm:$0xff]
        %v558 = vld [vmem:[%s464 + $0xc0] sm:$0xff]
        %v559 = vld [vmem:[%s464 + $0xc8] sm:$0xff]
        %v560 = vld [vmem:[%s464 + $0xd0] sm:$0xff]
        %v561 = vld [vmem:[%s464 + $0xd8] sm:$0xff]
        %v562 = vld [vmem:[%s464 + $0xe0] sm:$0xff]
        %v563 = vld [vmem:[%s464 + $0xe8] sm:$0xff]
        %v564 = vld [vmem:[%s464 + $0xf0] sm:$0xff]
        %v565 = vld [vmem:[%s464 + $0xf8] sm:$0xff]
        %v566 = vld [vmem:[%s464 + $0x100] sm:$0xff]
        %v567 = vld [vmem:[%s464 + $0x108] sm:$0xff]
        %v568 = vld [vmem:[%s464 + $0x110] sm:$0xff]
        %v569 = vld [vmem:[%s464 + $0x118] sm:$0xff]
        %v570 = vld [vmem:[%s464 + $0x120] sm:$0xff]
        %v571 = vld [vmem:[%s464 + $0x128] sm:$0xff]
        %v572 = vld [vmem:[%s464 + $0x130] sm:$0xff]
        %v573 = vld [vmem:[%s464 + $0x138] sm:$0xff]
        %v574 = vld [vmem:[%s464 + $0x140] sm:$0xff]
        %v575 = vld [vmem:[%s464 + $0x148] sm:$0xff]
        %v576 = vld [vmem:[%s464 + $0x150] sm:$0xff]
        %v577 = vld [vmem:[%s464 + $0x158] sm:$0xff]
        %v578 = vld [vmem:[%s464 + $0x160] sm:$0xff]
        %v579 = vld [vmem:[%s464 + $0x168] sm:$0xff]
        %v580 = vld [vmem:[%s464 + $0x170] sm:$0xff]
        %v581 = vld [vmem:[%s464 + $0x178] sm:$0xff]
        %v582 = vld [vmem:[%s464 + $0x180] sm:$0xff]
        %v583 = vld [vmem:[%s464 + $0x188] sm:$0xff]
        %v584 = vld [vmem:[%s464 + $0x190] sm:$0xff]
        %v585 = vld [vmem:[%s464 + $0x198] sm:$0xff]
        %v586 = vld [vmem:[%s464 + $0x1a0] sm:$0xff]
        %v587 = vld [vmem:[%s464 + $0x1a8] sm:$0xff]
        %v588 = vld [vmem:[%s464 + $0x1b0] sm:$0xff]
        %v589 = vld [vmem:[%s464 + $0x1b8] sm:$0xff]
        %v590 = vld [vmem:[%s464 + $0x1c0] sm:$0xff]
        %v591 = vld [vmem:[%s464 + $0x1c8] sm:$0xff]
        %v592 = vld [vmem:[%s464 + $0x1d0] sm:$0xff]
        %v593 = vld [vmem:[%s464 + $0x1d8] sm:$0xff]
        %v594 = vld [vmem:[%s464 + $0x1e0] sm:$0xff]
        %v595 = vld [vmem:[%s464 + $0x1e8] sm:$0xff]
        %v596 = vld [vmem:[%s464 + $0x1f0] sm:$0xff]
        %v597 = vld [vmem:[%s464 + $0x1f8] sm:$0xff]
        %v598 = vld [vmem:[%s473] sm:$0xff]
        %v599 = vld [vmem:[%s473 + $0x8] sm:$0xff]
        %v600 = vld [vmem:[%s473 + $0x10] sm:$0xff]
        %v601 = vld [vmem:[%s473 + $0x18] sm:$0xff]
        %v602 = vld [vmem:[%s473 + $0x20] sm:$0xff]
        %v603 = vld [vmem:[%s473 + $0x28] sm:$0xff]
        %v604 = vld [vmem:[%s473 + $0x30] sm:$0xff]
        %v605 = vld [vmem:[%s473 + $0x38] sm:$0xff]
        %v606 = vld [vmem:[%s473 + $0x40] sm:$0xff]
        %v607 = vld [vmem:[%s473 + $0x48] sm:$0xff]
        %v608 = vld [vmem:[%s473 + $0x50] sm:$0xff]
        %v609 = vld [vmem:[%s473 + $0x58] sm:$0xff]
        %v610 = vld [vmem:[%s473 + $0x60] sm:$0xff]
        %v611 = vld [vmem:[%s473 + $0x68] sm:$0xff]
        %v612 = vld [vmem:[%s473 + $0x70] sm:$0xff]
        %v613 = vld [vmem:[%s473 + $0x78] sm:$0xff]
        %v614 = vpack.c.bf16 %v600, %v598
        %v615 = vpack.c.bf16 %v542, %v534
        %v616 = vpack.c.bf16 %v543, %v535
        %v617 = vpack.c.bf16 %v544, %v536
        %v618 = vpack.c.bf16 %v545, %v537
        %v619 = vpack.c.bf16 %v546, %v538
        %v620 = vpack.c.bf16 %v547, %v539
        %v621 = vpack.c.bf16 %v548, %v540
        %v622 = vpack.c.bf16 %v549, %v541
        %v623 = vpack.c.bf16 %v601, %v599
        %v624 = vpack.c.bf16 %v604, %v602
        %v625 = vpack.c.bf16 %v558, %v550
        %v626 = vpack.c.bf16 %v559, %v551
        %v627 = vpack.c.bf16 %v560, %v552
        %v628 = vpack.c.bf16 %v561, %v553
        %v629 = vpack.c.bf16 %v562, %v554
        %v630 = vpack.c.bf16 %v563, %v555
        %v631 = vpack.c.bf16 %v564, %v556
        %v632 = vpack.c.bf16 %v565, %v557
        %v633 = vpack.c.bf16 %v605, %v603
        %v634 = vpack.c.bf16 %v608, %v606
        %v635 = vpack.c.bf16 %v574, %v566
        %v636 = vpack.c.bf16 %v575, %v567
        %v637 = vpack.c.bf16 %v576, %v568
        %v638 = vpack.c.bf16 %v577, %v569
        %v639 = vpack.c.bf16 %v578, %v570
        %v640 = vpack.c.bf16 %v579, %v571
        %v641 = vpack.c.bf16 %v580, %v572
        %v642 = vpack.c.bf16 %v581, %v573
        %v643 = vpack.c.bf16 %v609, %v607
        %v644 = vpack.c.bf16 %v612, %v610
        %v645 = vpack.c.bf16 %v590, %v582
        %v646 = vpack.c.bf16 %v591, %v583
        %v647 = vpack.c.bf16 %v592, %v584
        %v648 = vpack.c.bf16 %v593, %v585
        %v649 = vpack.c.bf16 %v594, %v586
        %v650 = vpack.c.bf16 %v595, %v587
        %v651 = vpack.c.bf16 %v596, %v588
        %v652 = vpack.c.bf16 %v597, %v589
        %v653 = vpack.c.bf16 %v613, %v611
        %v654 = vld [vmem:[%s3] sm:$0xf]
        %v655 = vld [vmem:[%s3 + $0x4] sm:$0xf]
        %v656 = vld [vmem:[%s4] sm:$0xff]
        %v657 = vld [vmem:[%s4 + $0x8] sm:$0xff]
        %659 = vset.pattern.permute.xlu0 0
        %660 = vperm.xlu0 %659, %v656
        %v661 = vpop.permute.xlu0 %660
        %664 = vset.pattern.permute.xlu0 0
        %665 = vperm.xlu0 %664, %v657
        %v666 = vpop.permute.xlu0 %665
        %v670 = vunpack.c.l.b16 %v654
        %v671 = vunpack.c.l.b16 %v655
        %v672 = vpack.c.b16 %v671, %v670
        %vm673 = vcmask 523264
        %v675 = vsel %vm673, %v672, 0
        %677 = vmatprep.subr.bf16.mxu0 0
        %678 = vmatpush1.bf16.msra.mxu0 0
        %679 = vmatprep.subr.bf16.mxu0 0
        %680 = vmatpush1.bf16.msra.mxu0 0
        %681 = vmatprep.subr.bf16.mxu0 0
        %682 = vmatpush1.bf16.msra.mxu0 0
        %683 = vmatprep.subr.bf16.mxu0 0
        %684 = vmatpush1.bf16.msra.mxu0 0
        %685 = vmatprep.subr.bf16.mxu0 %v645
        %686 = vmatpush1.bf16.msra.mxu0 %v644
        %687 = vmatprep.subr.bf16.mxu0 %v635
        %688 = vmatpush1.bf16.msra.mxu0 %v634
        %689 = vmatprep.subr.bf16.mxu0 %v625
        %690 = vmatpush1.bf16.msra.mxu0 %v624
        %691 = vmatprep.subr.bf16.mxu0 %v615
        %692 = vmatpush1.bf16.msra.mxu0 %v614
        %693 = vmatprep.subr.bf16.mxu0 0
        %694 = vmatpush2.bf16.msra.mxu0 0
        %695 = vmatprep.subr.bf16.mxu0 0
        %696 = vmatpush2.bf16.msra.mxu0 0
        %697 = vmatprep.subr.bf16.mxu0 0
        %698 = vmatpush2.bf16.msra.mxu0 0
        %699 = vmatprep.subr.bf16.mxu0 0
        %700 = vmatpush2.bf16.msra.mxu0 0
        %701 = vmatprep.subr.bf16.mxu0 0
        %702 = vmatpush2.bf16.msra.mxu0 0
        %703 = vmatprep.subr.bf16.mxu0 0
        %704 = vmatpush2.bf16.msra.mxu0 0
        %705 = vmatprep.subr.bf16.mxu0 0
        %706 = vmatpush2.bf16.msra.mxu0 0
        %707 = vmatprep.subr.bf16.mxu0 0
        %708 = vmatpush2.bf16.msra.mxu0 0
        %709 = vmatprep.mubr.bf16.mxu0 0
        %710 = vmatmul.mubr.bf16.gmra.mxu0 %v675
        %v711 = vpop.f32.mrf.mxu0
        %v712 = vadd.f32 %v661, %v711
        %v713 = vpop.f32.mrf.mxu0
        %v714 = vadd.f32 %v661, %v713
        %v715 = vpop.f32.mrf.mxu0
        %v716 = vadd.f32 %v666, %v715
        %v717 = vpop.f32.mrf.mxu0
        %v718 = vadd.f32 %v666, %v717
        %719 = vdwg.mxu0
        %720 = vmatprep.subr.bf16.mxu0 0
        %721 = vmatpush1.bf16.msra.mxu0 0
        %722 = vmatprep.subr.bf16.mxu0 0
        %723 = vmatpush1.bf16.msra.mxu0 0
        %724 = vmatprep.subr.bf16.mxu0 0
        %725 = vmatpush1.bf16.msra.mxu0 0
        %726 = vmatprep.subr.bf16.mxu0 0
        %727 = vmatpush1.bf16.msra.mxu0 0
        %728 = vmatprep.subr.bf16.mxu0 %v647
        %729 = vmatpush1.bf16.msra.mxu0 %v646
        %730 = vmatprep.subr.bf16.mxu0 %v637
        %731 = vmatpush1.bf16.msra.mxu0 %v636
        %732 = vmatprep.subr.bf16.mxu0 %v627
        %733 = vmatpush1.bf16.msra.mxu0 %v626
        %734 = vmatprep.subr.bf16.mxu0 %v617
        %735 = vmatpush1.bf16.msra.mxu0 %v616
        %736 = vmatprep.subr.bf16.mxu0 0
        %737 = vmatpush2.bf16.msra.mxu0 0
        %738 = vmatprep.subr.bf16.mxu0 0
        %739 = vmatpush2.bf16.msra.mxu0 0
        %740 = vmatprep.subr.bf16.mxu0 0
        %741 = vmatpush2.bf16.msra.mxu0 0
        %742 = vmatprep.subr.bf16.mxu0 0
        %743 = vmatpush2.bf16.msra.mxu0 0
        %744 = vmatprep.subr.bf16.mxu0 0
        %745 = vmatpush2.bf16.msra.mxu0 0
        %746 = vmatprep.subr.bf16.mxu0 0
        %747 = vmatpush2.bf16.msra.mxu0 0
        %748 = vmatprep.subr.bf16.mxu0 0
        %749 = vmatpush2.bf16.msra.mxu0 0
        %750 = vmatprep.subr.bf16.mxu0 0
        %751 = vmatpush2.bf16.msra.mxu0 0
        %752 = vmatprep.mubr.bf16.mxu0 0
        %753 = vmatmul.mubr.bf16.gmra.mxu0 %v675
        %v754 = vpop.f32.mrf.mxu0
        %v755 = vadd.f32 %v661, %v754
        %v756 = vpop.f32.mrf.mxu0
        %v757 = vadd.f32 %v661, %v756
        %v758 = vpop.f32.mrf.mxu0
        %v759 = vadd.f32 %v666, %v758
        %v760 = vpop.f32.mrf.mxu0
        %v761 = vadd.f32 %v666, %v760
        %762 = vdwg.mxu0
        %763 = vmatprep.subr.bf16.mxu0 0
        %764 = vmatpush1.bf16.msra.mxu0 0
        %765 = vmatprep.subr.bf16.mxu0 0
        %766 = vmatpush1.bf16.msra.mxu0 0
        %767 = vmatprep.subr.bf16.mxu0 0
        %768 = vmatpush1.bf16.msra.mxu0 0
        %769 = vmatprep.subr.bf16.mxu0 0
        %770 = vmatpush1.bf16.msra.mxu0 0
        %771 = vmatprep.subr.bf16.mxu0 %v649
        %772 = vmatpush1.bf16.msra.mxu0 %v648
        %773 = vmatprep.subr.bf16.mxu0 %v639
        %774 = vmatpush1.bf16.msra.mxu0 %v638
        %775 = vmatprep.subr.bf16.mxu0 %v629
        %776 = vmatpush1.bf16.msra.mxu0 %v628
        %777 = vmatprep.subr.bf16.mxu0 %v619
        %778 = vmatpush1.bf16.msra.mxu0 %v618
        %779 = vmatprep.subr.bf16.mxu0 0
        %780 = vmatpush2.bf16.msra.mxu0 0
        %781 = vmatprep.subr.bf16.mxu0 0
        %782 = vmatpush2.bf16.msra.mxu0 0
        %783 = vmatprep.subr.bf16.mxu0 0
        %784 = vmatpush2.bf16.msra.mxu0 0
        %785 = vmatprep.subr.bf16.mxu0 0
        %786 = vmatpush2.bf16.msra.mxu0 0
        %787 = vmatprep.subr.bf16.mxu0 0
        %788 = vmatpush2.bf16.msra.mxu0 0
        %789 = vmatprep.subr.bf16.mxu0 0
        %790 = vmatpush2.bf16.msra.mxu0 0
        %791 = vmatprep.subr.bf16.mxu0 0
        %792 = vmatpush2.bf16.msra.mxu0 0
        %793 = vmatprep.subr.bf16.mxu0 0
        %794 = vmatpush2.bf16.msra.mxu0 0
        %795 = vmatprep.mubr.bf16.mxu0 0
        %796 = vmatmul.mubr.bf16.gmra.mxu0 %v675
        %v797 = vpop.f32.mrf.mxu0
        %v798 = vadd.f32 %v661, %v797
        %v799 = vpop.f32.mrf.mxu0
        %v800 = vadd.f32 %v661, %v799
        %v801 = vpop.f32.mrf.mxu0
        %v802 = vadd.f32 %v666, %v801
        %v803 = vpop.f32.mrf.mxu0
        %v804 = vadd.f32 %v666, %v803
        %805 = vdwg.mxu0
        %806 = vmatprep.subr.bf16.mxu0 0
        %807 = vmatpush1.bf16.msra.mxu0 0
        %808 = vmatprep.subr.bf16.mxu0 0
        %809 = vmatpush1.bf16.msra.mxu0 0
        %810 = vmatprep.subr.bf16.mxu0 0
        %811 = vmatpush1.bf16.msra.mxu0 0
        %812 = vmatprep.subr.bf16.mxu0 0
        %813 = vmatpush1.bf16.msra.mxu0 0
        %814 = vmatprep.subr.bf16.mxu0 %v651
        %815 = vmatpush1.bf16.msra.mxu0 %v650
        %816 = vmatprep.subr.bf16.mxu0 %v641
        %817 = vmatpush1.bf16.msra.mxu0 %v640
        %818 = vmatprep.subr.bf16.mxu0 %v631
        %819 = vmatpush1.bf16.msra.mxu0 %v630
        %820 = vmatprep.subr.bf16.mxu0 %v621
        %821 = vmatpush1.bf16.msra.mxu0 %v620
        %822 = vmatprep.subr.bf16.mxu0 0
        %823 = vmatpush2.bf16.msra.mxu0 0
        %824 = vmatprep.subr.bf16.mxu0 0
        %825 = vmatpush2.bf16.msra.mxu0 0
        %826 = vmatprep.subr.bf16.mxu0 0
        %827 = vmatpush2.bf16.msra.mxu0 0
        %828 = vmatprep.subr.bf16.mxu0 0
        %829 = vmatpush2.bf16.msra.mxu0 0
        %830 = vmatprep.subr.bf16.mxu0 0
        %831 = vmatpush2.bf16.msra.mxu0 0
        %832 = vmatprep.subr.bf16.mxu0 0
        %833 = vmatpush2.bf16.msra.mxu0 0
        %834 = vmatprep.subr.bf16.mxu0 0
        %835 = vmatpush2.bf16.msra.mxu0 0
        %836 = vmatprep.subr.bf16.mxu0 0
        %837 = vmatpush2.bf16.msra.mxu0 0
        %838 = vmatprep.mubr.bf16.mxu0 0
        %839 = vmatmul.mubr.bf16.gmra.mxu0 %v675
        %v840 = vpop.f32.mrf.mxu0
        %v841 = vadd.f32 %v661, %v840
        %v842 = vpop.f32.mrf.mxu0
        %v843 = vadd.f32 %v661, %v842
        %v844 = vpop.f32.mrf.mxu0
        %v845 = vadd.f32 %v666, %v844
        %v846 = vpop.f32.mrf.mxu0
        %v847 = vadd.f32 %v666, %v846
        %848 = vdwg.mxu0
        %849 = vmatprep.subr.bf16.mxu0 0
        %850 = vmatpush1.bf16.msra.mxu0 0
        %851 = vmatprep.subr.bf16.mxu0 0
        %852 = vmatpush1.bf16.msra.mxu0 0
        %853 = vmatprep.subr.bf16.mxu0 0
        %854 = vmatpush1.bf16.msra.mxu0 0
        %855 = vmatprep.subr.bf16.mxu0 0
        %856 = vmatpush1.bf16.msra.mxu0 0
        %857 = vmatprep.subr.bf16.mxu0 %v653
        %858 = vmatpush1.bf16.msra.mxu0 %v652
        %859 = vmatprep.subr.bf16.mxu0 %v643
        %860 = vmatpush1.bf16.msra.mxu0 %v642
        %861 = vmatprep.subr.bf16.mxu0 %v633
        %862 = vmatpush1.bf16.msra.mxu0 %v632
        %863 = vmatprep.subr.bf16.mxu0 %v623
        %864 = vmatpush1.bf16.msra.mxu0 %v622
        %865 = vmatprep.subr.bf16.mxu0 0
        %866 = vmatpush2.bf16.msra.mxu0 0
        %867 = vmatprep.subr.bf16.mxu0 0
        %868 = vmatpush2.bf16.msra.mxu0 0
        %869 = vmatprep.subr.bf16.mxu0 0
        %870 = vmatpush2.bf16.msra.mxu0 0
        %871 = vmatprep.subr.bf16.mxu0 0
        %872 = vmatpush2.bf16.msra.mxu0 0
        %873 = vmatprep.subr.bf16.mxu0 0
        %874 = vmatpush2.bf16.msra.mxu0 0
        %875 = vmatprep.subr.bf16.mxu0 0
        %876 = vmatpush2.bf16.msra.mxu0 0
        %877 = vmatprep.subr.bf16.mxu0 0
        %878 = vmatpush2.bf16.msra.mxu0 0
        %879 = vmatprep.subr.bf16.mxu0 0
        %880 = vmatpush2.bf16.msra.mxu0 0
        %881 = vmatprep.mubr.bf16.mxu0 0
        %882 = vmatmul.mubr.bf16.gmra.mxu0 %v675
        %v883 = vpop.f32.mrf.mxu0
        %v884 = vadd.f32 %v661, %v883
        %v885 = vpop.f32.mrf.mxu0
        %v886 = vadd.f32 %v661, %v885
        %v887 = vpop.f32.mrf.mxu0
        %v888 = vadd.f32 %v666, %v887
        %v889 = vpop.f32.mrf.mxu0
        %v890 = vadd.f32 %v666, %v889
        %891 = vdwg.mxu0
        %v892 = vmax.f32 %v712, 0.0
        %v893 = vmax.f32 %v714, 0.0
        %v894 = vmax.f32 %v755, 0.0
        %v895 = vmax.f32 %v757, 0.0
        %v896 = vmax.f32 %v798, 0.0
        %v897 = vmax.f32 %v800, 0.0
        %v898 = vmax.f32 %v841, 0.0
        %v899 = vmax.f32 %v843, 0.0
        %v900 = vmax.f32 %v884, 0.0
        %v901 = vmax.f32 %v886, 0.0
        %v902 = vmax.f32 %v716, 0.0
        %v903 = vmax.f32 %v718, 0.0
        %v904 = vmax.f32 %v759, 0.0
        %v905 = vmax.f32 %v761, 0.0
        %v906 = vmax.f32 %v802, 0.0
        %v907 = vmax.f32 %v804, 0.0
        %v908 = vmax.f32 %v845, 0.0
        %v909 = vmax.f32 %v847, 0.0
        %v910 = vmax.f32 %v888, 0.0
        %v911 = vmax.f32 %v890, 0.0
        %912 = vrot.lane.b32.xlu0 %v892, 1
        %v913 = vpop.permute.xlu0 %912
        %914 = vrot.lane.b32.xlu0 %v902, 1
        %v915 = vpop.permute.xlu0 %914
        %916 = vrot.lane.b32.xlu0 %v893, 1
        %v917 = vpop.permute.xlu0 %916
        %918 = vrot.lane.b32.xlu0 %v903, 1
        %v919 = vpop.permute.xlu0 %918
        %920 = vrot.lane.b32.xlu0 %v894, 1
        %v921 = vpop.permute.xlu0 %920
        %922 = vrot.lane.b32.xlu0 %v904, 1
        %v923 = vpop.permute.xlu0 %922
        %924 = vrot.lane.b32.xlu0 %v895, 1
        %v925 = vpop.permute.xlu0 %924
        %926 = vrot.lane.b32.xlu0 %v905, 1
        %v927 = vpop.permute.xlu0 %926
        %928 = vrot.lane.b32.xlu0 %v896, 1
        %v929 = vpop.permute.xlu0 %928
        %930 = vrot.lane.b32.xlu0 %v906, 1
        %v931 = vpop.permute.xlu0 %930
        %932 = vrot.lane.b32.xlu0 %v897, 1
        %v933 = vpop.permute.xlu0 %932
        %934 = vrot.lane.b32.xlu0 %v907, 1
        %v935 = vpop.permute.xlu0 %934
        %936 = vrot.lane.b32.xlu0 %v898, 1
        %v937 = vpop.permute.xlu0 %936
        %938 = vrot.lane.b32.xlu0 %v908, 1
        %v939 = vpop.permute.xlu0 %938
        %940 = vrot.lane.b32.xlu0 %v899, 1
        %v941 = vpop.permute.xlu0 %940
        %942 = vrot.lane.b32.xlu0 %v909, 1
        %v943 = vpop.permute.xlu0 %942
        %944 = vrot.lane.b32.xlu0 %v900, 1
        %v945 = vpop.permute.xlu0 %944
        %946 = vrot.lane.b32.xlu0 %v910, 1
        %v947 = vpop.permute.xlu0 %946
        %948 = vrot.lane.b32.xlu0 %v901, 1
        %v949 = vpop.permute.xlu0 %948
        %950 = vrot.lane.b32.xlu0 %v911, 1
        %v951 = vpop.permute.xlu0 %950
        %v952 = vlaneseq
        %v953 = vand.u32 %v952, 127
        %vm954 = vcmp.lt.s32.totalorder %v953, 1
        %v955 = vsel %vm954, %v945, %v949
        %v956 = vsel %vm954, %v947, %v951
        %v957 = vsel %vm954, %v941, %v945
        %v958 = vsel %vm954, %v943, %v947
        %v959 = vsel %vm954, %v937, %v941
        %v960 = vsel %vm954, %v939, %v943
        %v961 = vsel %vm954, %v933, %v937
        %v962 = vsel %vm954, %v935, %v939
        %v963 = vsel %vm954, %v929, %v933
        %v964 = vsel %vm954, %v931, %v935
        %v965 = vsel %vm954, %v925, %v929
        %v966 = vsel %vm954, %v927, %v931
        %v967 = vsel %vm954, %v921, %v925
        %v968 = vsel %vm954, %v923, %v927
        %v969 = vsel %vm954, %v917, %v921
        %v970 = vsel %vm954, %v919, %v923
        %v971 = vsel %vm954, %v913, %v917
        %v972 = vsel %vm954, %v915, %v919
        %v973 = vsel %vm954, %v949, %v913
        %v974 = vsel %vm954, %v951, %v915
        %975 = vrot.lane.b32.xlu0 %v892, 127
        %v976 = vpop.permute.xlu0 %975
        %977 = vrot.lane.b32.xlu0 %v902, 127
        %v978 = vpop.permute.xlu0 %977
        %979 = vrot.lane.b32.xlu0 %v893, 127
        %v980 = vpop.permute.xlu0 %979
        %981 = vrot.lane.b32.xlu0 %v903, 127
        %v982 = vpop.permute.xlu0 %981
        %983 = vrot.lane.b32.xlu0 %v894, 127
        %v984 = vpop.permute.xlu0 %983
        %985 = vrot.lane.b32.xlu0 %v904, 127
        %v986 = vpop.permute.xlu0 %985
        %987 = vrot.lane.b32.xlu0 %v895, 127
        %v988 = vpop.permute.xlu0 %987
        %989 = vrot.lane.b32.xlu0 %v905, 127
        %v990 = vpop.permute.xlu0 %989
        %991 = vrot.lane.b32.xlu0 %v896, 127
        %v992 = vpop.permute.xlu0 %991
        %993 = vrot.lane.b32.xlu0 %v906, 127
        %v994 = vpop.permute.xlu0 %993
        %995 = vrot.lane.b32.xlu0 %v897, 127
        %v996 = vpop.permute.xlu0 %995
        %997 = vrot.lane.b32.xlu0 %v907, 127
        %v998 = vpop.permute.xlu0 %997
        %999 = vrot.lane.b32.xlu0 %v898, 127
        %v1000 = vpop.permute.xlu0 %999
        %1001 = vrot.lane.b32.xlu0 %v908, 127
        %v1002 = vpop.permute.xlu0 %1001
        %1003 = vrot.lane.b32.xlu0 %v899, 127
        %v1004 = vpop.permute.xlu0 %1003
        %1005 = vrot.lane.b32.xlu0 %v909, 127
        %v1006 = vpop.permute.xlu0 %1005
        %1007 = vrot.lane.b32.xlu0 %v900, 127
        %v1008 = vpop.permute.xlu0 %1007
        %1009 = vrot.lane.b32.xlu0 %v910, 127
        %v1010 = vpop.permute.xlu0 %1009
        %1011 = vrot.lane.b32.xlu0 %v901, 127
        %v1012 = vpop.permute.xlu0 %1011
        %1013 = vrot.lane.b32.xlu0 %v911, 127
        %v1014 = vpop.permute.xlu0 %1013
        %vm1015 = vcmp.lt.s32.totalorder %v953, 127
        %v1016 = vsel %vm1015, %v1008, %v1012
        %v1017 = vsel %vm1015, %v1010, %v1014
        %v1018 = vsel %vm1015, %v1004, %v1008
        %v1019 = vsel %vm1015, %v1006, %v1010
        %v1020 = vsel %vm1015, %v1000, %v1004
        %v1021 = vsel %vm1015, %v1002, %v1006
        %v1022 = vsel %vm1015, %v996, %v1000
        %v1023 = vsel %vm1015, %v998, %v1002
        %v1024 = vsel %vm1015, %v992, %v996
        %v1025 = vsel %vm1015, %v994, %v998
        %v1026 = vsel %vm1015, %v988, %v992
        %v1027 = vsel %vm1015, %v990, %v994
        %v1028 = vsel %vm1015, %v984, %v988
        %v1029 = vsel %vm1015, %v986, %v990
        %v1030 = vsel %vm1015, %v980, %v984
        %v1031 = vsel %vm1015, %v982, %v986
        %v1032 = vsel %vm1015, %v976, %v980
        %v1033 = vsel %vm1015, %v978, %v982
        %v1034 = vsel %vm1015, %v1012, %v976
        %v1035 = vsel %vm1015, %v1014, %v978
        %v1036 = vlaneseq
        %v1037 = vshrl.u32 %v1036, 7
        %v1038 = vsub.s32 0, %v1037
        %v1039 = vrot.slane %v524, %v1038
        %v1040 = vlaneseq
        %v1041 = vshrl.u32 %v1040, 7
        %v1042 = vsub.s32 0, %v1041
        %v1043 = vrot.slane %v525, %v1042
        %v1044 = vlaneseq
        %v1045 = vshrl.u32 %v1044, 7
        %v1046 = vsub.s32 0, %v1045
        %v1047 = vrot.slane %v526, %v1046
        %v1048 = vlaneseq
        %v1049 = vshrl.u32 %v1048, 7
        %v1050 = vsub.s32 0, %v1049
        %v1051 = vrot.slane %v527, %v1050
        %v1052 = vlaneseq
        %v1053 = vshrl.u32 %v1052, 7
        %v1054 = vsub.s32 0, %v1053
        %v1055 = vrot.slane %v528, %v1054
        %v1056 = vlaneseq
        %v1057 = vshrl.u32 %v1056, 7
        %v1058 = vsub.s32 0, %v1057
        %v1059 = vrot.slane %v529, %v1058
        %v1060 = vlaneseq
        %v1061 = vshrl.u32 %v1060, 7
        %v1062 = vsub.s32 0, %v1061
        %v1063 = vrot.slane %v530, %v1062
        %v1064 = vlaneseq
        %v1065 = vshrl.u32 %v1064, 7
        %v1066 = vsub.s32 0, %v1065
        %v1067 = vrot.slane %v531, %v1066
        %v1068 = vlaneseq
        %v1069 = vshrl.u32 %v1068, 7
        %v1070 = vsub.s32 0, %v1069
        %v1071 = vrot.slane %v532, %v1070
        %v1072 = vlaneseq
        %v1073 = vshrl.u32 %v1072, 7
        %v1074 = vsub.s32 0, %v1073
        %v1075 = vrot.slane %v533, %v1074
        %v1076 = vmul.f32 %v973, %v1039
        %v1077 = vmul.f32 %v971, %v1043
        %v1078 = vmul.f32 %v969, %v1047
        %v1079 = vmul.f32 %v967, %v1051
        %v1080 = vmul.f32 %v965, %v1055
        %v1081 = vmul.f32 %v963, %v1059
        %v1082 = vmul.f32 %v961, %v1063
        %v1083 = vmul.f32 %v959, %v1067
        %v1084 = vmul.f32 %v957, %v1071
        %v1085 = vmul.f32 %v955, %v1075
        %v1086 = vmul.f32 %v974, %v1039
        %v1087 = vmul.f32 %v972, %v1043
        %v1088 = vmul.f32 %v970, %v1047
        %v1089 = vmul.f32 %v968, %v1051
        %v1090 = vmul.f32 %v966, %v1055
        %v1091 = vmul.f32 %v964, %v1059
        %v1092 = vmul.f32 %v962, %v1063
        %v1093 = vmul.f32 %v960, %v1067
        %v1094 = vmul.f32 %v958, %v1071
        %v1095 = vmul.f32 %v956, %v1075
        %v1096 = vlaneseq
        %v1097 = vshrl.u32 %v1096, 7
        %v1098 = vsub.s32 1, %v1097
        %v1099 = vrot.slane %v524, %v1098
        %v1100 = vlaneseq
        %v1101 = vshrl.u32 %v1100, 7
        %v1102 = vsub.s32 1, %v1101
        %v1103 = vrot.slane %v525, %v1102
        %v1104 = vlaneseq
        %v1105 = vshrl.u32 %v1104, 7
        %v1106 = vsub.s32 1, %v1105
        %v1107 = vrot.slane %v526, %v1106
        %v1108 = vlaneseq
        %v1109 = vshrl.u32 %v1108, 7
        %v1110 = vsub.s32 1, %v1109
        %v1111 = vrot.slane %v527, %v1110
        %v1112 = vlaneseq
        %v1113 = vshrl.u32 %v1112, 7
        %v1114 = vsub.s32 1, %v1113
        %v1115 = vrot.slane %v528, %v1114
        %v1116 = vlaneseq
        %v1117 = vshrl.u32 %v1116, 7
        %v1118 = vsub.s32 1, %v1117
        %v1119 = vrot.slane %v529, %v1118
        %v1120 = vlaneseq
        %v1121 = vshrl.u32 %v1120, 7
        %v1122 = vsub.s32 1, %v1121
        %v1123 = vrot.slane %v530, %v1122
        %v1124 = vlaneseq
        %v1125 = vshrl.u32 %v1124, 7
        %v1126 = vsub.s32 1, %v1125
        %v1127 = vrot.slane %v531, %v1126
        %v1128 = vlaneseq
        %v1129 = vshrl.u32 %v1128, 7
        %v1130 = vsub.s32 1, %v1129
        %v1131 = vrot.slane %v532, %v1130
        %v1132 = vlaneseq
        %v1133 = vshrl.u32 %v1132, 7
        %v1134 = vsub.s32 1, %v1133
        %v1135 = vrot.slane %v533, %v1134
        %v1136 = vmul.f32 %v1032, %v1099
        %v1137 = vmul.f32 %v1030, %v1103
        %v1138 = vmul.f32 %v1028, %v1107
        %v1139 = vmul.f32 %v1026, %v1111
        %v1140 = vmul.f32 %v1024, %v1115
        %v1141 = vmul.f32 %v1022, %v1119
        %v1142 = vmul.f32 %v1020, %v1123
        %v1143 = vmul.f32 %v1018, %v1127
        %v1144 = vmul.f32 %v1016, %v1131
        %v1145 = vmul.f32 %v1034, %v1135
        %v1146 = vmul.f32 %v1033, %v1099
        %v1147 = vmul.f32 %v1031, %v1103
        %v1148 = vmul.f32 %v1029, %v1107
        %v1149 = vmul.f32 %v1027, %v1111
        %v1150 = vmul.f32 %v1025, %v1115
        %v1151 = vmul.f32 %v1023, %v1119
        %v1152 = vmul.f32 %v1021, %v1123
        %v1153 = vmul.f32 %v1019, %v1127
        %v1154 = vmul.f32 %v1017, %v1131
        %v1155 = vmul.f32 %v1035, %v1135
        %v1156 = vld [vmem:[%s5] sm:$0xf]
        %v1157 = vld [vmem:[%s5 + $0x4] sm:$0xf]
        %v1158 = vpack.c.bf16 %v1086, %v1076
        %v1159 = vpack.c.bf16 %v1087, %v1077
        %v1160 = vpack.c.bf16 %v1088, %v1078
        %v1161 = vpack.c.bf16 %v1089, %v1079
        %v1162 = vpack.c.bf16 %v1090, %v1080
        %v1163 = vpack.c.bf16 %v1091, %v1081
        %v1164 = vpack.c.bf16 %v1092, %v1082
        %v1165 = vpack.c.bf16 %v1093, %v1083
        %v1166 = vpack.c.bf16 %v1094, %v1084
        %v1167 = vpack.c.bf16 %v1095, %v1085
        %v1168 = vpack.c.bf16 %v902, %v892
        %v1169 = vpack.c.bf16 %v903, %v893
        %v1170 = vpack.c.bf16 %v904, %v894
        %v1171 = vpack.c.bf16 %v905, %v895
        %v1172 = vpack.c.bf16 %v906, %v896
        %v1173 = vpack.c.bf16 %v907, %v897
        %v1174 = vpack.c.bf16 %v908, %v898
        %v1175 = vpack.c.bf16 %v909, %v899
        %v1176 = vpack.c.bf16 %v910, %v900
        %v1177 = vpack.c.bf16 %v911, %v901
        %v1178 = vpack.c.bf16 %v1146, %v1136
        %v1179 = vpack.c.bf16 %v1147, %v1137
        %v1180 = vpack.c.bf16 %v1148, %v1138
        %v1181 = vpack.c.bf16 %v1149, %v1139
        %v1182 = vpack.c.bf16 %v1150, %v1140
        %v1183 = vpack.c.bf16 %v1151, %v1141
        %v1184 = vpack.c.bf16 %v1152, %v1142
        %v1185 = vpack.c.bf16 %v1153, %v1143
        %v1186 = vpack.c.bf16 %v1154, %v1144
        %v1187 = vpack.c.bf16 %v1155, %v1145
        %v1188 = vld [vmem:[%s6] sm:$0xff]
        %v1189 = vld [vmem:[%s6 + $0x8] sm:$0xff]
        %1191 = vset.pattern.permute.xlu0 0
        %1192 = vperm.xlu0 %1191, %v1188
        %v1193 = vpop.permute.xlu0 %1192
        %1196 = vset.pattern.permute.xlu0 0
        %1197 = vperm.xlu0 %1196, %v1189
        %v1198 = vpop.permute.xlu0 %1197
        %v1202 = vunpack.c.l.b16 %v1156
        %v1203 = vunpack.c.l.b16 %v1157
        %v1204 = vpack.c.b16 %v1203, %v1202
        %vm1205 = vcmask 392192
        %v1207 = vsel %vm1205, %v1204, 0
        %1209 = vmatprep.subr.bf16.mxu0 0
        %1210 = vmatpush1.bf16.msra.mxu0 0
        %1211 = vmatprep.subr.bf16.mxu0 0
        %1212 = vmatpush1.bf16.msra.mxu0 0
        %1213 = vmatprep.subr.bf16.mxu0 0
        %1214 = vmatpush1.bf16.msra.mxu0 0
        %1215 = vmatprep.subr.bf16.mxu0 0
        %1216 = vmatpush1.bf16.msra.mxu0 0
        %1217 = vmatprep.subr.bf16.mxu0 0
        %1218 = vmatpush1.bf16.msra.mxu0 0
        %1219 = vmatprep.subr.bf16.mxu0 %v1179
        %1220 = vmatpush1.bf16.msra.mxu0 %v1178
        %1221 = vmatprep.subr.bf16.mxu0 %v1169
        %1222 = vmatpush1.bf16.msra.mxu0 %v1168
        %1223 = vmatprep.subr.bf16.mxu0 %v1159
        %1224 = vmatpush1.bf16.msra.mxu0 %v1158
        %1225 = vmatprep.subr.bf16.mxu0 0
        %1226 = vmatpush2.bf16.msra.mxu0 0
        %1227 = vmatprep.subr.bf16.mxu0 0
        %1228 = vmatpush2.bf16.msra.mxu0 0
        %1229 = vmatprep.subr.bf16.mxu0 0
        %1230 = vmatpush2.bf16.msra.mxu0 0
        %1231 = vmatprep.subr.bf16.mxu0 0
        %1232 = vmatpush2.bf16.msra.mxu0 0
        %1233 = vmatprep.subr.bf16.mxu0 0
        %1234 = vmatpush2.bf16.msra.mxu0 0
        %1235 = vmatprep.subr.bf16.mxu0 0
        %1236 = vmatpush2.bf16.msra.mxu0 0
        %1237 = vmatprep.subr.bf16.mxu0 0
        %1238 = vmatpush2.bf16.msra.mxu0 0
        %1239 = vmatprep.subr.bf16.mxu0 0
        %1240 = vmatpush2.bf16.msra.mxu0 0
        %1241 = vmatprep.mubr.bf16.mxu0 0
        %1242 = vmatmul.mubr.bf16.gmra.mxu0 %v1207
        %v1243 = vpop.f32.mrf.mxu0
        %v1244 = vadd.f32 %v1193, %v1243
        %v1245 = vpop.f32.mrf.mxu0
        %v1246 = vadd.f32 %v1193, %v1245
        %v1247 = vpop.f32.mrf.mxu0
        %v1248 = vadd.f32 %v1198, %v1247
        %v1249 = vpop.f32.mrf.mxu0
        %v1250 = vadd.f32 %v1198, %v1249
        %1251 = vdwg.mxu0
        %1252 = vmatprep.subr.bf16.mxu0 0
        %1253 = vmatpush1.bf16.msra.mxu0 0
        %1254 = vmatprep.subr.bf16.mxu0 0
        %1255 = vmatpush1.bf16.msra.mxu0 0
        %1256 = vmatprep.subr.bf16.mxu0 0
        %1257 = vmatpush1.bf16.msra.mxu0 0
        %1258 = vmatprep.subr.bf16.mxu0 0
        %1259 = vmatpush1.bf16.msra.mxu0 0
        %1260 = vmatprep.subr.bf16.mxu0 0
        %1261 = vmatpush1.bf16.msra.mxu0 0
        %1262 = vmatprep.subr.bf16.mxu0 %v1181
        %1263 = vmatpush1.bf16.msra.mxu0 %v1180
        %1264 = vmatprep.subr.bf16.mxu0 %v1171
        %1265 = vmatpush1.bf16.msra.mxu0 %v1170
        %1266 = vmatprep.subr.bf16.mxu0 %v1161
        %1267 = vmatpush1.bf16.msra.mxu0 %v1160
        %1268 = vmatprep.subr.bf16.mxu0 0
        %1269 = vmatpush2.bf16.msra.mxu0 0
        %1270 = vmatprep.subr.bf16.mxu0 0
        %1271 = vmatpush2.bf16.msra.mxu0 0
        %1272 = vmatprep.subr.bf16.mxu0 0
        %1273 = vmatpush2.bf16.msra.mxu0 0
        %1274 = vmatprep.subr.bf16.mxu0 0
        %1275 = vmatpush2.bf16.msra.mxu0 0
        %1276 = vmatprep.subr.bf16.mxu0 0
        %1277 = vmatpush2.bf16.msra.mxu0 0
        %1278 = vmatprep.subr.bf16.mxu0 0
        %1279 = vmatpush2.bf16.msra.mxu0 0
        %1280 = vmatprep.subr.bf16.mxu0 0
        %1281 = vmatpush2.bf16.msra.mxu0 0
        %1282 = vmatprep.subr.bf16.mxu0 0
        %1283 = vmatpush2.bf16.msra.mxu0 0
        %1284 = vmatprep.mubr.bf16.mxu0 0
        %1285 = vmatmul.mubr.bf16.gmra.mxu0 %v1207
        %v1286 = vpop.f32.mrf.mxu0
        %v1287 = vadd.f32 %v1193, %v1286
        %v1288 = vpop.f32.mrf.mxu0
        %v1289 = vadd.f32 %v1193, %v1288
        %v1290 = vpop.f32.mrf.mxu0
        %v1291 = vadd.f32 %v1198, %v1290
        %v1292 = vpop.f32.mrf.mxu0
        %v1293 = vadd.f32 %v1198, %v1292
        %1294 = vdwg.mxu0
        %1295 = vmatprep.subr.bf16.mxu0 0
        %1296 = vmatpush1.bf16.msra.mxu0 0
        %1297 = vmatprep.subr.bf16.mxu0 0
        %1298 = vmatpush1.bf16.msra.mxu0 0
        %1299 = vmatprep.subr.bf16.mxu0 0
        %1300 = vmatpush1.bf16.msra.mxu0 0
        %1301 = vmatprep.subr.bf16.mxu0 0
        %1302 = vmatpush1.bf16.msra.mxu0 0
        %1303 = vmatprep.subr.bf16.mxu0 0
        %1304 = vmatpush1.bf16.msra.mxu0 0
        %1305 = vmatprep.subr.bf16.mxu0 %v1183
        %1306 = vmatpush1.bf16.msra.mxu0 %v1182
        %1307 = vmatprep.subr.bf16.mxu0 %v1173
        %1308 = vmatpush1.bf16.msra.mxu0 %v1172
        %1309 = vmatprep.subr.bf16.mxu0 %v1163
        %1310 = vmatpush1.bf16.msra.mxu0 %v1162
        %1311 = vmatprep.subr.bf16.mxu0 0
        %1312 = vmatpush2.bf16.msra.mxu0 0
        %1313 = vmatprep.subr.bf16.mxu0 0
        %1314 = vmatpush2.bf16.msra.mxu0 0
        %1315 = vmatprep.subr.bf16.mxu0 0
        %1316 = vmatpush2.bf16.msra.mxu0 0
        %1317 = vmatprep.subr.bf16.mxu0 0
        %1318 = vmatpush2.bf16.msra.mxu0 0
        %1319 = vmatprep.subr.bf16.mxu0 0
        %1320 = vmatpush2.bf16.msra.mxu0 0
        %1321 = vmatprep.subr.bf16.mxu0 0
        %1322 = vmatpush2.bf16.msra.mxu0 0
        %1323 = vmatprep.subr.bf16.mxu0 0
        %1324 = vmatpush2.bf16.msra.mxu0 0
        %1325 = vmatprep.subr.bf16.mxu0 0
        %1326 = vmatpush2.bf16.msra.mxu0 0
        %1327 = vmatprep.mubr.bf16.mxu0 0
        %1328 = vmatmul.mubr.bf16.gmra.mxu0 %v1207
        %v1329 = vpop.f32.mrf.mxu0
        %v1330 = vadd.f32 %v1193, %v1329
        %v1331 = vpop.f32.mrf.mxu0
        %v1332 = vadd.f32 %v1193, %v1331
        %v1333 = vpop.f32.mrf.mxu0
        %v1334 = vadd.f32 %v1198, %v1333
        %v1335 = vpop.f32.mrf.mxu0
        %v1336 = vadd.f32 %v1198, %v1335
        %1337 = vdwg.mxu0
        %1338 = vmatprep.subr.bf16.mxu0 0
        %1339 = vmatpush1.bf16.msra.mxu0 0
        %1340 = vmatprep.subr.bf16.mxu0 0
        %1341 = vmatpush1.bf16.msra.mxu0 0
        %1342 = vmatprep.subr.bf16.mxu0 0
        %1343 = vmatpush1.bf16.msra.mxu0 0
        %1344 = vmatprep.subr.bf16.mxu0 0
        %1345 = vmatpush1.bf16.msra.mxu0 0
        %1346 = vmatprep.subr.bf16.mxu0 0
        %1347 = vmatpush1.bf16.msra.mxu0 0
        %1348 = vmatprep.subr.bf16.mxu0 %v1185
        %1349 = vmatpush1.bf16.msra.mxu0 %v1184
        %1350 = vmatprep.subr.bf16.mxu0 %v1175
        %1351 = vmatpush1.bf16.msra.mxu0 %v1174
        %1352 = vmatprep.subr.bf16.mxu0 %v1165
        %1353 = vmatpush1.bf16.msra.mxu0 %v1164
        %1354 = vmatprep.subr.bf16.mxu0 0
        %1355 = vmatpush2.bf16.msra.mxu0 0
        %1356 = vmatprep.subr.bf16.mxu0 0
        %1357 = vmatpush2.bf16.msra.mxu0 0
        %1358 = vmatprep.subr.bf16.mxu0 0
        %1359 = vmatpush2.bf16.msra.mxu0 0
        %1360 = vmatprep.subr.bf16.mxu0 0
        %1361 = vmatpush2.bf16.msra.mxu0 0
        %1362 = vmatprep.subr.bf16.mxu0 0
        %1363 = vmatpush2.bf16.msra.mxu0 0
        %1364 = vmatprep.subr.bf16.mxu0 0
        %1365 = vmatpush2.bf16.msra.mxu0 0
        %1366 = vmatprep.subr.bf16.mxu0 0
        %1367 = vmatpush2.bf16.msra.mxu0 0
        %1368 = vmatprep.subr.bf16.mxu0 0
        %1369 = vmatpush2.bf16.msra.mxu0 0
        %1370 = vmatprep.mubr.bf16.mxu0 0
        %1371 = vmatmul.mubr.bf16.gmra.mxu0 %v1207
        %v1372 = vpop.f32.mrf.mxu0
        %v1373 = vadd.f32 %v1193, %v1372
        %v1374 = vpop.f32.mrf.mxu0
        %v1375 = vadd.f32 %v1193, %v1374
        %v1376 = vpop.f32.mrf.mxu0
        %v1377 = vadd.f32 %v1198, %v1376
        %v1378 = vpop.f32.mrf.mxu0
        %v1379 = vadd.f32 %v1198, %v1378
        %1380 = vdwg.mxu0
        %1381 = vmatprep.subr.bf16.mxu0 0
        %1382 = vmatpush1.bf16.msra.mxu0 0
        %1383 = vmatprep.subr.bf16.mxu0 0
        %1384 = vmatpush1.bf16.msra.mxu0 0
        %1385 = vmatprep.subr.bf16.mxu0 0
        %1386 = vmatpush1.bf16.msra.mxu0 0
        %1387 = vmatprep.subr.bf16.mxu0 0
        %1388 = vmatpush1.bf16.msra.mxu0 0
        %1389 = vmatprep.subr.bf16.mxu0 0
        %1390 = vmatpush1.bf16.msra.mxu0 0
        %1391 = vmatprep.subr.bf16.mxu0 %v1187
        %1392 = vmatpush1.bf16.msra.mxu0 %v1186
        %1393 = vmatprep.subr.bf16.mxu0 %v1177
        %1394 = vmatpush1.bf16.msra.mxu0 %v1176
        %1395 = vmatprep.subr.bf16.mxu0 %v1167
        %1396 = vmatpush1.bf16.msra.mxu0 %v1166
        %1397 = vmatprep.subr.bf16.mxu0 0
        %1398 = vmatpush2.bf16.msra.mxu0 0
        %1399 = vmatprep.subr.bf16.mxu0 0
        %1400 = vmatpush2.bf16.msra.mxu0 0
        %1401 = vmatprep.subr.bf16.mxu0 0
        %1402 = vmatpush2.bf16.msra.mxu0 0
        %1403 = vmatprep.subr.bf16.mxu0 0
        %1404 = vmatpush2.bf16.msra.mxu0 0
        %1405 = vmatprep.subr.bf16.mxu0 0
        %1406 = vmatpush2.bf16.msra.mxu0 0
        %1407 = vmatprep.subr.bf16.mxu0 0
        %1408 = vmatpush2.bf16.msra.mxu0 0
        %1409 = vmatprep.subr.bf16.mxu0 0
        %1410 = vmatpush2.bf16.msra.mxu0 0
        %1411 = vmatprep.subr.bf16.mxu0 0
        %1412 = vmatpush2.bf16.msra.mxu0 0
        %1413 = vmatprep.mubr.bf16.mxu0 0
        %1414 = vmatmul.mubr.bf16.gmra.mxu0 %v1207
        %v1415 = vpop.f32.mrf.mxu0
        %v1416 = vadd.f32 %v1193, %v1415
        %v1417 = vpop.f32.mrf.mxu0
        %v1418 = vadd.f32 %v1193, %v1417
        %v1419 = vpop.f32.mrf.mxu0
        %v1420 = vadd.f32 %v1198, %v1419
        %v1421 = vpop.f32.mrf.mxu0
        %v1422 = vadd.f32 %v1198, %v1421
        %1423 = vdwg.mxu0
        %v1424 = vmax.f32 %v1244, 0.0
        %v1425 = vmax.f32 %v1246, 0.0
        %v1426 = vmax.f32 %v1287, 0.0
        %v1427 = vmax.f32 %v1289, 0.0
        %v1428 = vmax.f32 %v1330, 0.0
        %v1429 = vmax.f32 %v1332, 0.0
        %v1430 = vmax.f32 %v1373, 0.0
        %v1431 = vmax.f32 %v1375, 0.0
        %v1432 = vmax.f32 %v1416, 0.0
        %v1433 = vmax.f32 %v1418, 0.0
        %v1434 = vmax.f32 %v1248, 0.0
        %v1435 = vmax.f32 %v1250, 0.0
        %v1436 = vmax.f32 %v1291, 0.0
        %v1437 = vmax.f32 %v1293, 0.0
        %v1438 = vmax.f32 %v1334, 0.0
        %v1439 = vmax.f32 %v1336, 0.0
        %v1440 = vmax.f32 %v1377, 0.0
        %v1441 = vmax.f32 %v1379, 0.0
        %v1442 = vmax.f32 %v1420, 0.0
        %v1443 = vmax.f32 %v1422, 0.0
        %1444 = vrot.lane.b32.xlu0 %v1424, 16
        %v1445 = vpop.permute.xlu0 %1444
        %1446 = vrot.lane.b32.xlu0 %v1434, 16
        %v1447 = vpop.permute.xlu0 %1446
        %1448 = vrot.lane.b32.xlu0 %v1425, 16
        %v1449 = vpop.permute.xlu0 %1448
        %1450 = vrot.lane.b32.xlu0 %v1435, 16
        %v1451 = vpop.permute.xlu0 %1450
        %1452 = vrot.lane.b32.xlu0 %v1426, 16
        %v1453 = vpop.permute.xlu0 %1452
        %1454 = vrot.lane.b32.xlu0 %v1436, 16
        %v1455 = vpop.permute.xlu0 %1454
        %1456 = vrot.lane.b32.xlu0 %v1427, 16
        %v1457 = vpop.permute.xlu0 %1456
        %1458 = vrot.lane.b32.xlu0 %v1437, 16
        %v1459 = vpop.permute.xlu0 %1458
        %1460 = vrot.lane.b32.xlu0 %v1428, 16
        %v1461 = vpop.permute.xlu0 %1460
        %1462 = vrot.lane.b32.xlu0 %v1438, 16
        %v1463 = vpop.permute.xlu0 %1462
        %1464 = vrot.lane.b32.xlu0 %v1429, 16
        %v1465 = vpop.permute.xlu0 %1464
        %1466 = vrot.lane.b32.xlu0 %v1439, 16
        %v1467 = vpop.permute.xlu0 %1466
        %1468 = vrot.lane.b32.xlu0 %v1430, 16
        %v1469 = vpop.permute.xlu0 %1468
        %1470 = vrot.lane.b32.xlu0 %v1440, 16
        %v1471 = vpop.permute.xlu0 %1470
        %1472 = vrot.lane.b32.xlu0 %v1431, 16
        %v1473 = vpop.permute.xlu0 %1472
        %1474 = vrot.lane.b32.xlu0 %v1441, 16
        %v1475 = vpop.permute.xlu0 %1474
        %1476 = vrot.lane.b32.xlu0 %v1432, 16
        %v1477 = vpop.permute.xlu0 %1476
        %1478 = vrot.lane.b32.xlu0 %v1442, 16
        %v1479 = vpop.permute.xlu0 %1478
        %1480 = vrot.lane.b32.xlu0 %v1433, 16
        %v1481 = vpop.permute.xlu0 %1480
        %1482 = vrot.lane.b32.xlu0 %v1443, 16
        %v1483 = vpop.permute.xlu0 %1482
        %vm1484 = vcmp.lt.s32.totalorder %v953, 16
        %v1485 = vsel %vm1484, %v1477, %v1481
        %v1486 = vsel %vm1484, %v1479, %v1483
        %v1487 = vsel %vm1484, %v1473, %v1477
        %v1488 = vsel %vm1484, %v1475, %v1479
        %v1489 = vsel %vm1484, %v1469, %v1473
        %v1490 = vsel %vm1484, %v1471, %v1475
        %v1491 = vsel %vm1484, %v1465, %v1469
        %v1492 = vsel %vm1484, %v1467, %v1471
        %v1493 = vsel %vm1484, %v1461, %v1465
        %v1494 = vsel %vm1484, %v1463, %v1467
        %v1495 = vsel %vm1484, %v1457, %v1461
        %v1496 = vsel %vm1484, %v1459, %v1463
        %v1497 = vsel %vm1484, %v1453, %v1457
        %v1498 = vsel %vm1484, %v1455, %v1459
        %v1499 = vsel %vm1484, %v1449, %v1453
        %v1500 = vsel %vm1484, %v1451, %v1455
        %v1501 = vsel %vm1484, %v1445, %v1449
        %v1502 = vsel %vm1484, %v1447, %v1451
        %v1503 = vsel %vm1484, %v1481, %v1445
        %v1504 = vsel %vm1484, %v1483, %v1447
        %1505 = vrot.lane.b32.xlu0 %v1424, 112
        %v1506 = vpop.permute.xlu0 %1505
        %1507 = vrot.lane.b32.xlu0 %v1434, 112
        %v1508 = vpop.permute.xlu0 %1507
        %1509 = vrot.lane.b32.xlu0 %v1425, 112
        %v1510 = vpop.permute.xlu0 %1509
        %1511 = vrot.lane.b32.xlu0 %v1435, 112
        %v1512 = vpop.permute.xlu0 %1511
        %1513 = vrot.lane.b32.xlu0 %v1426, 112
        %v1514 = vpop.permute.xlu0 %1513
        %1515 = vrot.lane.b32.xlu0 %v1436, 112
        %v1516 = vpop.permute.xlu0 %1515
        %1517 = vrot.lane.b32.xlu0 %v1427, 112
        %v1518 = vpop.permute.xlu0 %1517
        %1519 = vrot.lane.b32.xlu0 %v1437, 112
        %v1520 = vpop.permute.xlu0 %1519
        %1521 = vrot.lane.b32.xlu0 %v1428, 112
        %v1522 = vpop.permute.xlu0 %1521
        %1523 = vrot.lane.b32.xlu0 %v1438, 112
        %v1524 = vpop.permute.xlu0 %1523
        %1525 = vrot.lane.b32.xlu0 %v1429, 112
        %v1526 = vpop.permute.xlu0 %1525
        %1527 = vrot.lane.b32.xlu0 %v1439, 112
        %v1528 = vpop.permute.xlu0 %1527
        %1529 = vrot.lane.b32.xlu0 %v1430, 112
        %v1530 = vpop.permute.xlu0 %1529
        %1531 = vrot.lane.b32.xlu0 %v1440, 112
        %v1532 = vpop.permute.xlu0 %1531
        %1533 = vrot.lane.b32.xlu0 %v1431, 112
        %v1534 = vpop.permute.xlu0 %1533
        %1535 = vrot.lane.b32.xlu0 %v1441, 112
        %v1536 = vpop.permute.xlu0 %1535
        %1537 = vrot.lane.b32.xlu0 %v1432, 112
        %v1538 = vpop.permute.xlu0 %1537
        %1539 = vrot.lane.b32.xlu0 %v1442, 112
        %v1540 = vpop.permute.xlu0 %1539
        %1541 = vrot.lane.b32.xlu0 %v1433, 112
        %v1542 = vpop.permute.xlu0 %1541
        %1543 = vrot.lane.b32.xlu0 %v1443, 112
        %v1544 = vpop.permute.xlu0 %1543
        %vm1545 = vcmp.lt.s32.totalorder %v953, 112
        %v1546 = vsel %vm1545, %v1538, %v1542
        %v1547 = vsel %vm1545, %v1540, %v1544
        %v1548 = vsel %vm1545, %v1534, %v1538
        %v1549 = vsel %vm1545, %v1536, %v1540
        %v1550 = vsel %vm1545, %v1530, %v1534
        %v1551 = vsel %vm1545, %v1532, %v1536
        %v1552 = vsel %vm1545, %v1526, %v1530
        %v1553 = vsel %vm1545, %v1528, %v1532
        %v1554 = vsel %vm1545, %v1522, %v1526
        %v1555 = vsel %vm1545, %v1524, %v1528
        %v1556 = vsel %vm1545, %v1518, %v1522
        %v1557 = vsel %vm1545, %v1520, %v1524
        %v1558 = vsel %vm1545, %v1514, %v1518
        %v1559 = vsel %vm1545, %v1516, %v1520
        %v1560 = vsel %vm1545, %v1510, %v1514
        %v1561 = vsel %vm1545, %v1512, %v1516
        %v1562 = vsel %vm1545, %v1506, %v1510
        %v1563 = vsel %vm1545, %v1508, %v1512
        %v1564 = vsel %vm1545, %v1542, %v1506
        %v1565 = vsel %vm1545, %v1544, %v1508
        %v1566 = vlaneseq
        %v1567 = vshrl.u32 %v1566, 7
        %v1568 = vsub.s32 2, %v1567
        %v1569 = vrot.slane %v524, %v1568
        %v1570 = vlaneseq
        %v1571 = vshrl.u32 %v1570, 7
        %v1572 = vsub.s32 2, %v1571
        %v1573 = vrot.slane %v525, %v1572
        %v1574 = vlaneseq
        %v1575 = vshrl.u32 %v1574, 7
        %v1576 = vsub.s32 2, %v1575
        %v1577 = vrot.slane %v526, %v1576
        %v1578 = vlaneseq
        %v1579 = vshrl.u32 %v1578, 7
        %v1580 = vsub.s32 2, %v1579
        %v1581 = vrot.slane %v527, %v1580
        %v1582 = vlaneseq
        %v1583 = vshrl.u32 %v1582, 7
        %v1584 = vsub.s32 2, %v1583
        %v1585 = vrot.slane %v528, %v1584
        %v1586 = vlaneseq
        %v1587 = vshrl.u32 %v1586, 7
        %v1588 = vsub.s32 2, %v1587
        %v1589 = vrot.slane %v529, %v1588
        %v1590 = vlaneseq
        %v1591 = vshrl.u32 %v1590, 7
        %v1592 = vsub.s32 2, %v1591
        %v1593 = vrot.slane %v530, %v1592
        %v1594 = vlaneseq
        %v1595 = vshrl.u32 %v1594, 7
        %v1596 = vsub.s32 2, %v1595
        %v1597 = vrot.slane %v531, %v1596
        %v1598 = vlaneseq
        %v1599 = vshrl.u32 %v1598, 7
        %v1600 = vsub.s32 2, %v1599
        %v1601 = vrot.slane %v532, %v1600
        %v1602 = vlaneseq
        %v1603 = vshrl.u32 %v1602, 7
        %v1604 = vsub.s32 2, %v1603
        %v1605 = vrot.slane %v533, %v1604
        %v1606 = vmul.f32 %v1503, %v1569
        %v1607 = vmul.f32 %v1501, %v1573
        %v1608 = vmul.f32 %v1499, %v1577
        %v1609 = vmul.f32 %v1497, %v1581
        %v1610 = vmul.f32 %v1495, %v1585
        %v1611 = vmul.f32 %v1493, %v1589
        %v1612 = vmul.f32 %v1491, %v1593
        %v1613 = vmul.f32 %v1489, %v1597
        %v1614 = vmul.f32 %v1487, %v1601
        %v1615 = vmul.f32 %v1485, %v1605
        %v1616 = vmul.f32 %v1504, %v1569
        %v1617 = vmul.f32 %v1502, %v1573
        %v1618 = vmul.f32 %v1500, %v1577
        %v1619 = vmul.f32 %v1498, %v1581
        %v1620 = vmul.f32 %v1496, %v1585
        %v1621 = vmul.f32 %v1494, %v1589
        %v1622 = vmul.f32 %v1492, %v1593
        %v1623 = vmul.f32 %v1490, %v1597
        %v1624 = vmul.f32 %v1488, %v1601
        %v1625 = vmul.f32 %v1486, %v1605
        %v1626 = vlaneseq
        %v1627 = vshrl.u32 %v1626, 7
        %v1628 = vsub.s32 3, %v1627
        %v1629 = vrot.slane %v524, %v1628
        %v1630 = vlaneseq
        %v1631 = vshrl.u32 %v1630, 7
        %v1632 = vsub.s32 3, %v1631
        %v1633 = vrot.slane %v525, %v1632
        %v1634 = vlaneseq
        %v1635 = vshrl.u32 %v1634, 7
        %v1636 = vsub.s32 3, %v1635
        %v1637 = vrot.slane %v526, %v1636
        %v1638 = vlaneseq
        %v1639 = vshrl.u32 %v1638, 7
        %v1640 = vsub.s32 3, %v1639
        %v1641 = vrot.slane %v527, %v1640
        %v1642 = vlaneseq
        %v1643 = vshrl.u32 %v1642, 7
        %v1644 = vsub.s32 3, %v1643
        %v1645 = vrot.slane %v528, %v1644
        %v1646 = vlaneseq
        %v1647 = vshrl.u32 %v1646, 7
        %v1648 = vsub.s32 3, %v1647
        %v1649 = vrot.slane %v529, %v1648
        %v1650 = vlaneseq
        %v1651 = vshrl.u32 %v1650, 7
        %v1652 = vsub.s32 3, %v1651
        %v1653 = vrot.slane %v530, %v1652
        %v1654 = vlaneseq
        %v1655 = vshrl.u32 %v1654, 7
        %v1656 = vsub.s32 3, %v1655
        %v1657 = vrot.slane %v531, %v1656
        %v1658 = vlaneseq
        %v1659 = vshrl.u32 %v1658, 7
        %v1660 = vsub.s32 3, %v1659
        %v1661 = vrot.slane %v532, %v1660
        %v1662 = vlaneseq
        %v1663 = vshrl.u32 %v1662, 7
        %v1664 = vsub.s32 3, %v1663
        %v1665 = vrot.slane %v533, %v1664
        %v1666 = vmul.f32 %v1562, %v1629
        %v1667 = vmul.f32 %v1560, %v1633
        %v1668 = vmul.f32 %v1558, %v1637
        %v1669 = vmul.f32 %v1556, %v1641
        %v1670 = vmul.f32 %v1554, %v1645
        %v1671 = vmul.f32 %v1552, %v1649
        %v1672 = vmul.f32 %v1550, %v1653
        %v1673 = vmul.f32 %v1548, %v1657
        %v1674 = vmul.f32 %v1546, %v1661
        %v1675 = vmul.f32 %v1564, %v1665
        %v1676 = vmul.f32 %v1563, %v1629
        %v1677 = vmul.f32 %v1561, %v1633
        %v1678 = vmul.f32 %v1559, %v1637
        %v1679 = vmul.f32 %v1557, %v1641
        %v1680 = vmul.f32 %v1555, %v1645
        %v1681 = vmul.f32 %v1553, %v1649
        %v1682 = vmul.f32 %v1551, %v1653
        %v1683 = vmul.f32 %v1549, %v1657
        %v1684 = vmul.f32 %v1547, %v1661
        %v1685 = vmul.f32 %v1565, %v1665
        %v1686 = vld [vmem:[%s7] sm:$0xf]
        %v1687 = vld [vmem:[%s7 + $0x4] sm:$0xf]
        %v1688 = vpack.c.bf16 %v1616, %v1606
        %v1689 = vpack.c.bf16 %v1617, %v1607
        %v1690 = vpack.c.bf16 %v1618, %v1608
        %v1691 = vpack.c.bf16 %v1619, %v1609
        %v1692 = vpack.c.bf16 %v1620, %v1610
        %v1693 = vpack.c.bf16 %v1621, %v1611
        %v1694 = vpack.c.bf16 %v1622, %v1612
        %v1695 = vpack.c.bf16 %v1623, %v1613
        %v1696 = vpack.c.bf16 %v1624, %v1614
        %v1697 = vpack.c.bf16 %v1625, %v1615
        %v1698 = vpack.c.bf16 %v1434, %v1424
        %v1699 = vpack.c.bf16 %v1435, %v1425
        %v1700 = vpack.c.bf16 %v1436, %v1426
        %v1701 = vpack.c.bf16 %v1437, %v1427
        %v1702 = vpack.c.bf16 %v1438, %v1428
        %v1703 = vpack.c.bf16 %v1439, %v1429
        %v1704 = vpack.c.bf16 %v1440, %v1430
        %v1705 = vpack.c.bf16 %v1441, %v1431
        %v1706 = vpack.c.bf16 %v1442, %v1432
        %v1707 = vpack.c.bf16 %v1443, %v1433
        %v1708 = vpack.c.bf16 %v1676, %v1666
        %v1709 = vpack.c.bf16 %v1677, %v1667
        %v1710 = vpack.c.bf16 %v1678, %v1668
        %v1711 = vpack.c.bf16 %v1679, %v1669
        %v1712 = vpack.c.bf16 %v1680, %v1670
        %v1713 = vpack.c.bf16 %v1681, %v1671
        %v1714 = vpack.c.bf16 %v1682, %v1672
        %v1715 = vpack.c.bf16 %v1683, %v1673
        %v1716 = vpack.c.bf16 %v1684, %v1674
        %v1717 = vpack.c.bf16 %v1685, %v1675
        %v1718 = vld [vmem:[%s8] sm:$0xff]
        %v1719 = vld [vmem:[%s8 + $0x8] sm:$0xff]
        %1721 = vset.pattern.permute.xlu0 0
        %1722 = vperm.xlu0 %1721, %v1718
        %v1723 = vpop.permute.xlu0 %1722
        %1726 = vset.pattern.permute.xlu0 0
        %1727 = vperm.xlu0 %1726, %v1719
        %v1728 = vpop.permute.xlu0 %1727
        %v1732 = vunpack.c.l.b16 %v1686
        %v1733 = vunpack.c.l.b16 %v1687
        %v1734 = vpack.c.b16 %v1733, %v1732
        %v1736 = vsel %vm1205, %v1734, 0
        %1738 = vmatprep.subr.bf16.mxu0 0
        %1739 = vmatpush1.bf16.msra.mxu0 0
        %1740 = vmatprep.subr.bf16.mxu0 0
        %1741 = vmatpush1.bf16.msra.mxu0 0
        %1742 = vmatprep.subr.bf16.mxu0 0
        %1743 = vmatpush1.bf16.msra.mxu0 0
        %1744 = vmatprep.subr.bf16.mxu0 0
        %1745 = vmatpush1.bf16.msra.mxu0 0
        %1746 = vmatprep.subr.bf16.mxu0 0
        %1747 = vmatpush1.bf16.msra.mxu0 0
        %1748 = vmatprep.subr.bf16.mxu0 %v1709
        %1749 = vmatpush1.bf16.msra.mxu0 %v1708
        %1750 = vmatprep.subr.bf16.mxu0 %v1699
        %1751 = vmatpush1.bf16.msra.mxu0 %v1698
        %1752 = vmatprep.subr.bf16.mxu0 %v1689
        %1753 = vmatpush1.bf16.msra.mxu0 %v1688
        %1754 = vmatprep.subr.bf16.mxu0 0
        %1755 = vmatpush2.bf16.msra.mxu0 0
        %1756 = vmatprep.subr.bf16.mxu0 0
        %1757 = vmatpush2.bf16.msra.mxu0 0
        %1758 = vmatprep.subr.bf16.mxu0 0
        %1759 = vmatpush2.bf16.msra.mxu0 0
        %1760 = vmatprep.subr.bf16.mxu0 0
        %1761 = vmatpush2.bf16.msra.mxu0 0
        %1762 = vmatprep.subr.bf16.mxu0 0
        %1763 = vmatpush2.bf16.msra.mxu0 0
        %1764 = vmatprep.subr.bf16.mxu0 0
        %1765 = vmatpush2.bf16.msra.mxu0 0
        %1766 = vmatprep.subr.bf16.mxu0 0
        %1767 = vmatpush2.bf16.msra.mxu0 0
        %1768 = vmatprep.subr.bf16.mxu0 0
        %1769 = vmatpush2.bf16.msra.mxu0 0
        %1770 = vmatprep.mubr.bf16.mxu0 0
        %1771 = vmatmul.mubr.bf16.gmra.mxu0 %v1736
        %v1772 = vpop.f32.mrf.mxu0
        %v1773 = vadd.f32 %v1723, %v1772
        %v1774 = vpop.f32.mrf.mxu0
        %v1775 = vadd.f32 %v1723, %v1774
        %v1776 = vpop.f32.mrf.mxu0
        %v1777 = vadd.f32 %v1728, %v1776
        %v1778 = vpop.f32.mrf.mxu0
        %v1779 = vadd.f32 %v1728, %v1778
        %1780 = vdwg.mxu0
        %1781 = vmatprep.subr.bf16.mxu0 0
        %1782 = vmatpush1.bf16.msra.mxu0 0
        %1783 = vmatprep.subr.bf16.mxu0 0
        %1784 = vmatpush1.bf16.msra.mxu0 0
        %1785 = vmatprep.subr.bf16.mxu0 0
        %1786 = vmatpush1.bf16.msra.mxu0 0
        %1787 = vmatprep.subr.bf16.mxu0 0
        %1788 = vmatpush1.bf16.msra.mxu0 0
        %1789 = vmatprep.subr.bf16.mxu0 0
        %1790 = vmatpush1.bf16.msra.mxu0 0
        %1791 = vmatprep.subr.bf16.mxu0 %v1711
        %1792 = vmatpush1.bf16.msra.mxu0 %v1710
        %1793 = vmatprep.subr.bf16.mxu0 %v1701
        %1794 = vmatpush1.bf16.msra.mxu0 %v1700
        %1795 = vmatprep.subr.bf16.mxu0 %v1691
        %1796 = vmatpush1.bf16.msra.mxu0 %v1690
        %1797 = vmatprep.subr.bf16.mxu0 0
        %1798 = vmatpush2.bf16.msra.mxu0 0
        %1799 = vmatprep.subr.bf16.mxu0 0
        %1800 = vmatpush2.bf16.msra.mxu0 0
        %1801 = vmatprep.subr.bf16.mxu0 0
        %1802 = vmatpush2.bf16.msra.mxu0 0
        %1803 = vmatprep.subr.bf16.mxu0 0
        %1804 = vmatpush2.bf16.msra.mxu0 0
        %1805 = vmatprep.subr.bf16.mxu0 0
        %1806 = vmatpush2.bf16.msra.mxu0 0
        %1807 = vmatprep.subr.bf16.mxu0 0
        %1808 = vmatpush2.bf16.msra.mxu0 0
        %1809 = vmatprep.subr.bf16.mxu0 0
        %1810 = vmatpush2.bf16.msra.mxu0 0
        %1811 = vmatprep.subr.bf16.mxu0 0
        %1812 = vmatpush2.bf16.msra.mxu0 0
        %1813 = vmatprep.mubr.bf16.mxu0 0
        %1814 = vmatmul.mubr.bf16.gmra.mxu0 %v1736
        %v1815 = vpop.f32.mrf.mxu0
        %v1816 = vadd.f32 %v1723, %v1815
        %v1817 = vpop.f32.mrf.mxu0
        %v1818 = vadd.f32 %v1723, %v1817
        %v1819 = vpop.f32.mrf.mxu0
        %v1820 = vadd.f32 %v1728, %v1819
        %v1821 = vpop.f32.mrf.mxu0
        %v1822 = vadd.f32 %v1728, %v1821
        %1823 = vdwg.mxu0
        %1824 = vmatprep.subr.bf16.mxu0 0
        %1825 = vmatpush1.bf16.msra.mxu0 0
        %1826 = vmatprep.subr.bf16.mxu0 0
        %1827 = vmatpush1.bf16.msra.mxu0 0
        %1828 = vmatprep.subr.bf16.mxu0 0
        %1829 = vmatpush1.bf16.msra.mxu0 0
        %1830 = vmatprep.subr.bf16.mxu0 0
        %1831 = vmatpush1.bf16.msra.mxu0 0
        %1832 = vmatprep.subr.bf16.mxu0 0
        %1833 = vmatpush1.bf16.msra.mxu0 0
        %1834 = vmatprep.subr.bf16.mxu0 %v1713
        %1835 = vmatpush1.bf16.msra.mxu0 %v1712
        %1836 = vmatprep.subr.bf16.mxu0 %v1703
        %1837 = vmatpush1.bf16.msra.mxu0 %v1702
        %1838 = vmatprep.subr.bf16.mxu0 %v1693
        %1839 = vmatpush1.bf16.msra.mxu0 %v1692
        %1840 = vmatprep.subr.bf16.mxu0 0
        %1841 = vmatpush2.bf16.msra.mxu0 0
        %1842 = vmatprep.subr.bf16.mxu0 0
        %1843 = vmatpush2.bf16.msra.mxu0 0
        %1844 = vmatprep.subr.bf16.mxu0 0
        %1845 = vmatpush2.bf16.msra.mxu0 0
        %1846 = vmatprep.subr.bf16.mxu0 0
        %1847 = vmatpush2.bf16.msra.mxu0 0
        %1848 = vmatprep.subr.bf16.mxu0 0
        %1849 = vmatpush2.bf16.msra.mxu0 0
        %1850 = vmatprep.subr.bf16.mxu0 0
        %1851 = vmatpush2.bf16.msra.mxu0 0
        %1852 = vmatprep.subr.bf16.mxu0 0
        %1853 = vmatpush2.bf16.msra.mxu0 0
        %1854 = vmatprep.subr.bf16.mxu0 0
        %1855 = vmatpush2.bf16.msra.mxu0 0
        %1856 = vmatprep.mubr.bf16.mxu0 0
        %1857 = vmatmul.mubr.bf16.gmra.mxu0 %v1736
        %v1858 = vpop.f32.mrf.mxu0
        %v1859 = vadd.f32 %v1723, %v1858
        %v1860 = vpop.f32.mrf.mxu0
        %v1861 = vadd.f32 %v1723, %v1860
        %v1862 = vpop.f32.mrf.mxu0
        %v1863 = vadd.f32 %v1728, %v1862
        %v1864 = vpop.f32.mrf.mxu0
        %v1865 = vadd.f32 %v1728, %v1864
        %1866 = vdwg.mxu0
        %1867 = vmatprep.subr.bf16.mxu0 0
        %1868 = vmatpush1.bf16.msra.mxu0 0
        %1869 = vmatprep.subr.bf16.mxu0 0
        %1870 = vmatpush1.bf16.msra.mxu0 0
        %1871 = vmatprep.subr.bf16.mxu0 0
        %1872 = vmatpush1.bf16.msra.mxu0 0
        %1873 = vmatprep.subr.bf16.mxu0 0
        %1874 = vmatpush1.bf16.msra.mxu0 0
        %1875 = vmatprep.subr.bf16.mxu0 0
        %1876 = vmatpush1.bf16.msra.mxu0 0
        %1877 = vmatprep.subr.bf16.mxu0 %v1715
        %1878 = vmatpush1.bf16.msra.mxu0 %v1714
        %1879 = vmatprep.subr.bf16.mxu0 %v1705
        %1880 = vmatpush1.bf16.msra.mxu0 %v1704
        %1881 = vmatprep.subr.bf16.mxu0 %v1695
        %1882 = vmatpush1.bf16.msra.mxu0 %v1694
        %1883 = vmatprep.subr.bf16.mxu0 0
        %1884 = vmatpush2.bf16.msra.mxu0 0
        %1885 = vmatprep.subr.bf16.mxu0 0
        %1886 = vmatpush2.bf16.msra.mxu0 0
        %1887 = vmatprep.subr.bf16.mxu0 0
        %1888 = vmatpush2.bf16.msra.mxu0 0
        %1889 = vmatprep.subr.bf16.mxu0 0
        %1890 = vmatpush2.bf16.msra.mxu0 0
        %1891 = vmatprep.subr.bf16.mxu0 0
        %1892 = vmatpush2.bf16.msra.mxu0 0
        %1893 = vmatprep.subr.bf16.mxu0 0
        %1894 = vmatpush2.bf16.msra.mxu0 0
        %1895 = vmatprep.subr.bf16.mxu0 0
        %1896 = vmatpush2.bf16.msra.mxu0 0
        %1897 = vmatprep.subr.bf16.mxu0 0
        %1898 = vmatpush2.bf16.msra.mxu0 0
        %1899 = vmatprep.mubr.bf16.mxu0 0
        %1900 = vmatmul.mubr.bf16.gmra.mxu0 %v1736
        %v1901 = vpop.f32.mrf.mxu0
        %v1902 = vadd.f32 %v1723, %v1901
        %v1903 = vpop.f32.mrf.mxu0
        %v1904 = vadd.f32 %v1723, %v1903
        %v1905 = vpop.f32.mrf.mxu0
        %v1906 = vadd.f32 %v1728, %v1905
        %v1907 = vpop.f32.mrf.mxu0
        %v1908 = vadd.f32 %v1728, %v1907
        %1909 = vdwg.mxu0
        %1910 = vmatprep.subr.bf16.mxu0 0
        %1911 = vmatpush1.bf16.msra.mxu0 0
        %1912 = vmatprep.subr.bf16.mxu0 0
        %1913 = vmatpush1.bf16.msra.mxu0 0
        %1914 = vmatprep.subr.bf16.mxu0 0
        %1915 = vmatpush1.bf16.msra.mxu0 0
        %1916 = vmatprep.subr.bf16.mxu0 0
        %1917 = vmatpush1.bf16.msra.mxu0 0
        %1918 = vmatprep.subr.bf16.mxu0 0
        %1919 = vmatpush1.bf16.msra.mxu0 0
        %1920 = vmatprep.subr.bf16.mxu0 %v1717
        %1921 = vmatpush1.bf16.msra.mxu0 %v1716
        %1922 = vmatprep.subr.bf16.mxu0 %v1707
        %1923 = vmatpush1.bf16.msra.mxu0 %v1706
        %1924 = vmatprep.subr.bf16.mxu0 %v1697
        %1925 = vmatpush1.bf16.msra.mxu0 %v1696
        %1926 = vmatprep.subr.bf16.mxu0 0
        %1927 = vmatpush2.bf16.msra.mxu0 0
        %1928 = vmatprep.subr.bf16.mxu0 0
        %1929 = vmatpush2.bf16.msra.mxu0 0
        %1930 = vmatprep.subr.bf16.mxu0 0
        %1931 = vmatpush2.bf16.msra.mxu0 0
        %1932 = vmatprep.subr.bf16.mxu0 0
        %1933 = vmatpush2.bf16.msra.mxu0 0
        %1934 = vmatprep.subr.bf16.mxu0 0
        %1935 = vmatpush2.bf16.msra.mxu0 0
        %1936 = vmatprep.subr.bf16.mxu0 0
        %1937 = vmatpush2.bf16.msra.mxu0 0
        %1938 = vmatprep.subr.bf16.mxu0 0
        %1939 = vmatpush2.bf16.msra.mxu0 0
        %1940 = vmatprep.subr.bf16.mxu0 0
        %1941 = vmatpush2.bf16.msra.mxu0 0
        %1942 = vmatprep.mubr.bf16.mxu0 0
        %1943 = vmatmul.mubr.bf16.gmra.mxu0 %v1736
        %v1944 = vpop.f32.mrf.mxu0
        %v1945 = vadd.f32 %v1723, %v1944
        %v1946 = vpop.f32.mrf.mxu0
        %v1947 = vadd.f32 %v1723, %v1946
        %v1948 = vpop.f32.mrf.mxu0
        %v1949 = vadd.f32 %v1728, %v1948
        %v1950 = vpop.f32.mrf.mxu0
        %v1951 = vadd.f32 %v1728, %v1950
        %1952 = vdwg.mxu0
        %v1953 = vadd.f32 %v1773, %v1244
        %v1954 = vadd.f32 %v1775, %v1246
        %v1955 = vadd.f32 %v1816, %v1287
        %v1956 = vadd.f32 %v1818, %v1289
        %v1957 = vadd.f32 %v1859, %v1330
        %v1958 = vadd.f32 %v1861, %v1332
        %v1959 = vadd.f32 %v1902, %v1373
        %v1960 = vadd.f32 %v1904, %v1375
        %v1961 = vadd.f32 %v1945, %v1416
        %v1962 = vadd.f32 %v1947, %v1418
        %v1963 = vadd.f32 %v1777, %v1248
        %v1964 = vadd.f32 %v1779, %v1250
        %v1965 = vadd.f32 %v1820, %v1291
        %v1966 = vadd.f32 %v1822, %v1293
        %v1967 = vadd.f32 %v1863, %v1334
        %v1968 = vadd.f32 %v1865, %v1336
        %v1969 = vadd.f32 %v1906, %v1377
        %v1970 = vadd.f32 %v1908, %v1379
        %v1971 = vadd.f32 %v1949, %v1420
        %v1972 = vadd.f32 %v1951, %v1422
        %v1973 = vadd.f32 %v1246, %v1954
        %v1974 = vadd.f32 %v1287, %v1955
        %v1975 = vadd.f32 %v1289, %v1956
        %v1976 = vadd.f32 %v1330, %v1957
        %v1977 = vadd.f32 %v1332, %v1958
        %v1978 = vadd.f32 %v1373, %v1959
        %v1979 = vadd.f32 %v1375, %v1960
        %v1980 = vadd.f32 %v1416, %v1961
        %v1981 = vadd.f32 %v1250, %v1964
        %v1982 = vadd.f32 %v1291, %v1965
        %v1983 = vadd.f32 %v1293, %v1966
        %v1984 = vadd.f32 %v1334, %v1967
        %v1985 = vadd.f32 %v1336, %v1968
        %v1986 = vadd.f32 %v1377, %v1969
        %v1987 = vadd.f32 %v1379, %v1970
        %v1988 = vadd.f32 %v1420, %v1971
        %p1989 = scmp.eq.s32.totalorder %s38, 0
        %s1990 = scalar_select %p1989, 1.0, 0.0
        %p1991 = scmp.eq.s32.totalorder %s38, 1
        %s1992 = scalar_select %p1991, 1.0, 0.0
        %v1993 = vstv %s1990
        %v1994 = vmul.f32 %v1993, %v524
        %v1995 = vmul.f32 %v1993, %v525
        %v1996 = vmul.f32 %v1993, %v526
        %v1997 = vmul.f32 %v1993, %v527
        %v1998 = vmul.f32 %v1993, %v528
        %v1999 = vmul.f32 %v1993, %v529
        %v2000 = vmul.f32 %v1993, %v530
        %v2001 = vmul.f32 %v1993, %v531
        %v2002 = vmul.f32 %v1993, %v532
        %v2003 = vmul.f32 %v1993, %v533
        %v2004 = vstv %s1992
        %v2005 = vmul.f32 %v2004, %v524
        %v2006 = vmul.f32 %v2004, %v525
        %v2007 = vmul.f32 %v2004, %v526
        %v2008 = vmul.f32 %v2004, %v527
        %v2009 = vmul.f32 %v2004, %v528
        %v2010 = vmul.f32 %v2004, %v529
        %v2011 = vmul.f32 %v2004, %v530
        %v2012 = vmul.f32 %v2004, %v531
        %v2013 = vmul.f32 %v2004, %v532
        %v2014 = vmul.f32 %v2004, %v533
        %v2025 = vrot.slane %v2005, 1
        %v2026 = vrot.slane %v2006, 1
        %v2027 = vrot.slane %v2007, 1
        %v2028 = vrot.slane %v2008, 1
        %v2029 = vrot.slane %v2009, 1
        %v2030 = vrot.slane %v2010, 1
        %v2031 = vrot.slane %v2011, 1
        %v2032 = vrot.slane %v2012, 1
        %v2033 = vrot.slane %v2013, 1
        %v2034 = vrot.slane %v2014, 1
        %v2045 = vadd.f32 %v1994, %v2025
        %v2046 = vadd.f32 %v1995, %v2026
        %v2047 = vadd.f32 %v1996, %v2027
        %v2048 = vadd.f32 %v1997, %v2028
        %v2049 = vadd.f32 %v1998, %v2029
        %v2050 = vadd.f32 %v1999, %v2030
        %v2051 = vadd.f32 %v2000, %v2031
        %v2052 = vadd.f32 %v2001, %v2032
        %v2053 = vadd.f32 %v2002, %v2033
        %v2054 = vadd.f32 %v2003, %v2034
        %v2055 = vsub.f32 1.0, %v2045
        %v2056 = vsub.f32 1.0, %v2046
        %v2057 = vsub.f32 1.0, %v2047
        %v2058 = vsub.f32 1.0, %v2048
        %v2059 = vsub.f32 1.0, %v2049
        %v2060 = vsub.f32 1.0, %v2050
        %v2061 = vsub.f32 1.0, %v2051
        %v2062 = vsub.f32 1.0, %v2052
        %v2063 = vsub.f32 1.0, %v2053
        %v2064 = vsub.f32 1.0, %v2054
        %v2065 = vmax.f32 %v1953, 0.0
        %v2066 = vmax.f32 %v1954, 0.0
        %v2067 = vmax.f32 %v1955, 0.0
        %v2068 = vmax.f32 %v1956, 0.0
        %v2069 = vmax.f32 %v1957, 0.0
        %v2070 = vmax.f32 %v1958, 0.0
        %v2071 = vmax.f32 %v1959, 0.0
        %v2072 = vmax.f32 %v1960, 0.0
        %v2073 = vmax.f32 %v1961, 0.0
        %v2074 = vmax.f32 %v1962, 0.0
        %v2075 = vmax.f32 %v1963, 0.0
        %v2076 = vmax.f32 %v1964, 0.0
        %v2077 = vmax.f32 %v1965, 0.0
        %v2078 = vmax.f32 %v1966, 0.0
        %v2079 = vmax.f32 %v1967, 0.0
        %v2080 = vmax.f32 %v1968, 0.0
        %v2081 = vmax.f32 %v1969, 0.0
        %v2082 = vmax.f32 %v1970, 0.0
        %v2083 = vmax.f32 %v1971, 0.0
        %v2084 = vmax.f32 %v1972, 0.0
        %v2085 = vlaneseq
        %v2086 = vshrl.u32 %v2085, 7
        %v2087 = vsub.s32 4, %v2086
        %v2088 = vrot.slane %v2055, %v2087
        %v2089 = vlaneseq
        %v2090 = vshrl.u32 %v2089, 7
        %v2091 = vsub.s32 4, %v2090
        %v2092 = vrot.slane %v2056, %v2091
        %v2093 = vlaneseq
        %v2094 = vshrl.u32 %v2093, 7
        %v2095 = vsub.s32 4, %v2094
        %v2096 = vrot.slane %v2057, %v2095
        %v2097 = vlaneseq
        %v2098 = vshrl.u32 %v2097, 7
        %v2099 = vsub.s32 4, %v2098
        %v2100 = vrot.slane %v2058, %v2099
        %v2101 = vlaneseq
        %v2102 = vshrl.u32 %v2101, 7
        %v2103 = vsub.s32 4, %v2102
        %v2104 = vrot.slane %v2059, %v2103
        %v2105 = vlaneseq
        %v2106 = vshrl.u32 %v2105, 7
        %v2107 = vsub.s32 4, %v2106
        %v2108 = vrot.slane %v2060, %v2107
        %v2109 = vlaneseq
        %v2110 = vshrl.u32 %v2109, 7
        %v2111 = vsub.s32 4, %v2110
        %v2112 = vrot.slane %v2061, %v2111
        %v2113 = vlaneseq
        %v2114 = vshrl.u32 %v2113, 7
        %v2115 = vsub.s32 4, %v2114
        %v2116 = vrot.slane %v2062, %v2115
        %v2117 = vlaneseq
        %v2118 = vshrl.u32 %v2117, 7
        %v2119 = vsub.s32 4, %v2118
        %v2120 = vrot.slane %v2063, %v2119
        %v2121 = vlaneseq
        %v2122 = vshrl.u32 %v2121, 7
        %v2123 = vsub.s32 4, %v2122
        %v2124 = vrot.slane %v2064, %v2123
        %v2125 = vmul.f32 %v2065, %v2088
        %v2126 = vmul.f32 %v2066, %v2092
        %v2127 = vmul.f32 %v2067, %v2096
        %v2128 = vmul.f32 %v2068, %v2100
        %v2129 = vmul.f32 %v2069, %v2104
        %v2130 = vmul.f32 %v2070, %v2108
        %v2131 = vmul.f32 %v2071, %v2112
        %v2132 = vmul.f32 %v2072, %v2116
        %v2133 = vmul.f32 %v2073, %v2120
        %v2134 = vmul.f32 %v2074, %v2124
        %v2135 = vmul.f32 %v2075, %v2088
        %v2136 = vmul.f32 %v2076, %v2092
        %v2137 = vmul.f32 %v2077, %v2096
        %v2138 = vmul.f32 %v2078, %v2100
        %v2139 = vmul.f32 %v2079, %v2104
        %v2140 = vmul.f32 %v2080, %v2108
        %v2141 = vmul.f32 %v2081, %v2112
        %v2142 = vmul.f32 %v2082, %v2116
        %v2143 = vmul.f32 %v2083, %v2120
        %v2144 = vmul.f32 %v2084, %v2124
        %v2145 = vld [vmem:[%s9] sm:$0xf]
        %v2146 = vld [vmem:[%s9 + $0x4] sm:$0xf]
        %v2147 = vpack.c.bf16 %v2135, %v2125
        %v2148 = vpack.c.bf16 %v2136, %v2126
        %v2149 = vpack.c.bf16 %v2137, %v2127
        %v2150 = vpack.c.bf16 %v2138, %v2128
        %v2151 = vpack.c.bf16 %v2139, %v2129
        %v2152 = vpack.c.bf16 %v2140, %v2130
        %v2153 = vpack.c.bf16 %v2141, %v2131
        %v2154 = vpack.c.bf16 %v2142, %v2132
        %v2155 = vpack.c.bf16 %v2143, %v2133
        %v2156 = vpack.c.bf16 %v2144, %v2134
        %v2157 = vld [vmem:[%s10] sm:$0xff]
        %v2158 = vld [vmem:[%s10 + $0x8] sm:$0xff]
        %2160 = vset.pattern.permute.xlu0 0
        %2161 = vperm.xlu0 %2160, %v2157
        %v2162 = vpop.permute.xlu0 %2161
        %2165 = vset.pattern.permute.xlu0 0
        %2166 = vperm.xlu0 %2165, %v2158
        %v2167 = vpop.permute.xlu0 %2166
        %v2171 = vunpack.c.l.b16 %v2145
        %v2172 = vunpack.c.l.b16 %v2146
        %v2173 = vpack.c.b16 %v2172, %v2171
        %v2175 = vsel %vm1205, %v2173, 0
        %2177 = vmatprep.subr.bf16.mxu0 0
        %2178 = vmatpush1.bf16.msra.mxu0 0
        %2179 = vmatprep.subr.bf16.mxu0 0
        %2180 = vmatpush1.bf16.msra.mxu0 0
        %2181 = vmatprep.subr.bf16.mxu0 0
        %2182 = vmatpush1.bf16.msra.mxu0 0
        %2183 = vmatprep.subr.bf16.mxu0 0
        %2184 = vmatpush1.bf16.msra.mxu0 0
        %2185 = vmatprep.subr.bf16.mxu0 0
        %2186 = vmatpush1.bf16.msra.mxu0 0
        %2187 = vmatprep.subr.bf16.mxu0 %v2150
        %2188 = vmatpush1.bf16.msra.mxu0 %v2149
        %2189 = vmatprep.subr.bf16.mxu0 %v2149
        %2190 = vmatpush1.bf16.msra.mxu0 %v2148
        %2191 = vmatprep.subr.bf16.mxu0 %v2148
        %2192 = vmatpush1.bf16.msra.mxu0 %v2147
        %2193 = vmatprep.subr.bf16.mxu0 0
        %2194 = vmatpush2.bf16.msra.mxu0 0
        %2195 = vmatprep.subr.bf16.mxu0 0
        %2196 = vmatpush2.bf16.msra.mxu0 0
        %2197 = vmatprep.subr.bf16.mxu0 0
        %2198 = vmatpush2.bf16.msra.mxu0 0
        %2199 = vmatprep.subr.bf16.mxu0 0
        %2200 = vmatpush2.bf16.msra.mxu0 0
        %2201 = vmatprep.subr.bf16.mxu0 0
        %2202 = vmatpush2.bf16.msra.mxu0 0
        %2203 = vmatprep.subr.bf16.mxu0 0
        %2204 = vmatpush2.bf16.msra.mxu0 0
        %2205 = vmatprep.subr.bf16.mxu0 0
        %2206 = vmatpush2.bf16.msra.mxu0 0
        %2207 = vmatprep.subr.bf16.mxu0 0
        %2208 = vmatpush2.bf16.msra.mxu0 0
        %2209 = vmatprep.mubr.bf16.mxu0 0
        %2210 = vmatmul.mubr.bf16.gmra.mxu0 %v2175
        %v2211 = vpop.f32.mrf.mxu0
        %v2212 = vadd.f32 %v2162, %v2211
        %v2213 = vpop.f32.mrf.mxu0
        %v2214 = vadd.f32 %v2162, %v2213
        %v2215 = vpop.f32.mrf.mxu0
        %v2216 = vadd.f32 %v2167, %v2215
        %v2217 = vpop.f32.mrf.mxu0
        %v2218 = vadd.f32 %v2167, %v2217
        %2219 = vdwg.mxu0
        %2220 = vmatprep.subr.bf16.mxu0 0
        %2221 = vmatpush1.bf16.msra.mxu0 0
        %2222 = vmatprep.subr.bf16.mxu0 0
        %2223 = vmatpush1.bf16.msra.mxu0 0
        %2224 = vmatprep.subr.bf16.mxu0 0
        %2225 = vmatpush1.bf16.msra.mxu0 0
        %2226 = vmatprep.subr.bf16.mxu0 0
        %2227 = vmatpush1.bf16.msra.mxu0 0
        %2228 = vmatprep.subr.bf16.mxu0 0
        %2229 = vmatpush1.bf16.msra.mxu0 0
        %2230 = vmatprep.subr.bf16.mxu0 %v2152
        %2231 = vmatpush1.bf16.msra.mxu0 %v2151
        %2232 = vmatprep.subr.bf16.mxu0 %v2151
        %2233 = vmatpush1.bf16.msra.mxu0 %v2150
        %2234 = vmatprep.subr.bf16.mxu0 %v2150
        %2235 = vmatpush1.bf16.msra.mxu0 %v2149
        %2236 = vmatprep.subr.bf16.mxu0 0
        %2237 = vmatpush2.bf16.msra.mxu0 0
        %2238 = vmatprep.subr.bf16.mxu0 0
        %2239 = vmatpush2.bf16.msra.mxu0 0
        %2240 = vmatprep.subr.bf16.mxu0 0
        %2241 = vmatpush2.bf16.msra.mxu0 0
        %2242 = vmatprep.subr.bf16.mxu0 0
        %2243 = vmatpush2.bf16.msra.mxu0 0
        %2244 = vmatprep.subr.bf16.mxu0 0
        %2245 = vmatpush2.bf16.msra.mxu0 0
        %2246 = vmatprep.subr.bf16.mxu0 0
        %2247 = vmatpush2.bf16.msra.mxu0 0
        %2248 = vmatprep.subr.bf16.mxu0 0
        %2249 = vmatpush2.bf16.msra.mxu0 0
        %2250 = vmatprep.subr.bf16.mxu0 0
        %2251 = vmatpush2.bf16.msra.mxu0 0
        %2252 = vmatprep.mubr.bf16.mxu0 0
        %2253 = vmatmul.mubr.bf16.gmra.mxu0 %v2175
        %v2254 = vpop.f32.mrf.mxu0
        %v2255 = vadd.f32 %v2162, %v2254
        %v2256 = vpop.f32.mrf.mxu0
        %v2257 = vadd.f32 %v2162, %v2256
        %v2258 = vpop.f32.mrf.mxu0
        %v2259 = vadd.f32 %v2167, %v2258
        %v2260 = vpop.f32.mrf.mxu0
        %v2261 = vadd.f32 %v2167, %v2260
        %2262 = vdwg.mxu0
        %2263 = vmatprep.subr.bf16.mxu0 0
        %2264 = vmatpush1.bf16.msra.mxu0 0
        %2265 = vmatprep.subr.bf16.mxu0 0
        %2266 = vmatpush1.bf16.msra.mxu0 0
        %2267 = vmatprep.subr.bf16.mxu0 0
        %2268 = vmatpush1.bf16.msra.mxu0 0
        %2269 = vmatprep.subr.bf16.mxu0 0
        %2270 = vmatpush1.bf16.msra.mxu0 0
        %2271 = vmatprep.subr.bf16.mxu0 0
        %2272 = vmatpush1.bf16.msra.mxu0 0
        %2273 = vmatprep.subr.bf16.mxu0 %v2154
        %2274 = vmatpush1.bf16.msra.mxu0 %v2153
        %2275 = vmatprep.subr.bf16.mxu0 %v2153
        %2276 = vmatpush1.bf16.msra.mxu0 %v2152
        %2277 = vmatprep.subr.bf16.mxu0 %v2152
        %2278 = vmatpush1.bf16.msra.mxu0 %v2151
        %2279 = vmatprep.subr.bf16.mxu0 0
        %2280 = vmatpush2.bf16.msra.mxu0 0
        %2281 = vmatprep.subr.bf16.mxu0 0
        %2282 = vmatpush2.bf16.msra.mxu0 0
        %2283 = vmatprep.subr.bf16.mxu0 0
        %2284 = vmatpush2.bf16.msra.mxu0 0
        %2285 = vmatprep.subr.bf16.mxu0 0
        %2286 = vmatpush2.bf16.msra.mxu0 0
        %2287 = vmatprep.subr.bf16.mxu0 0
        %2288 = vmatpush2.bf16.msra.mxu0 0
        %2289 = vmatprep.subr.bf16.mxu0 0
        %2290 = vmatpush2.bf16.msra.mxu0 0
        %2291 = vmatprep.subr.bf16.mxu0 0
        %2292 = vmatpush2.bf16.msra.mxu0 0
        %2293 = vmatprep.subr.bf16.mxu0 0
        %2294 = vmatpush2.bf16.msra.mxu0 0
        %2295 = vmatprep.mubr.bf16.mxu0 0
        %2296 = vmatmul.mubr.bf16.gmra.mxu0 %v2175
        %v2297 = vpop.f32.mrf.mxu0
        %v2298 = vadd.f32 %v2162, %v2297
        %v2299 = vpop.f32.mrf.mxu0
        %v2300 = vadd.f32 %v2162, %v2299
        %v2301 = vpop.f32.mrf.mxu0
        %v2302 = vadd.f32 %v2167, %v2301
        %v2303 = vpop.f32.mrf.mxu0
        %v2304 = vadd.f32 %v2167, %v2303
        %2305 = vdwg.mxu0
        %2306 = vmatprep.subr.bf16.mxu0 0
        %2307 = vmatpush1.bf16.msra.mxu0 0
        %2308 = vmatprep.subr.bf16.mxu0 0
        %2309 = vmatpush1.bf16.msra.mxu0 0
        %2310 = vmatprep.subr.bf16.mxu0 0
        %2311 = vmatpush1.bf16.msra.mxu0 0
        %2312 = vmatprep.subr.bf16.mxu0 0
        %2313 = vmatpush1.bf16.msra.mxu0 0
        %2314 = vmatprep.subr.bf16.mxu0 0
        %2315 = vmatpush1.bf16.msra.mxu0 0
        %2316 = vmatprep.subr.bf16.mxu0 %v2156
        %2317 = vmatpush1.bf16.msra.mxu0 %v2155
        %2318 = vmatprep.subr.bf16.mxu0 %v2155
        %2319 = vmatpush1.bf16.msra.mxu0 %v2154
        %2320 = vmatprep.subr.bf16.mxu0 %v2154
        %2321 = vmatpush1.bf16.msra.mxu0 %v2153
        %2322 = vmatprep.subr.bf16.mxu0 0
        %2323 = vmatpush2.bf16.msra.mxu0 0
        %2324 = vmatprep.subr.bf16.mxu0 0
        %2325 = vmatpush2.bf16.msra.mxu0 0
        %2326 = vmatprep.subr.bf16.mxu0 0
        %2327 = vmatpush2.bf16.msra.mxu0 0
        %2328 = vmatprep.subr.bf16.mxu0 0
        %2329 = vmatpush2.bf16.msra.mxu0 0
        %2330 = vmatprep.subr.bf16.mxu0 0
        %2331 = vmatpush2.bf16.msra.mxu0 0
        %2332 = vmatprep.subr.bf16.mxu0 0
        %2333 = vmatpush2.bf16.msra.mxu0 0
        %2334 = vmatprep.subr.bf16.mxu0 0
        %2335 = vmatpush2.bf16.msra.mxu0 0
        %2336 = vmatprep.subr.bf16.mxu0 0
        %2337 = vmatpush2.bf16.msra.mxu0 0
        %2338 = vmatprep.mubr.bf16.mxu0 0
        %2339 = vmatmul.mubr.bf16.gmra.mxu0 %v2175
        %v2340 = vpop.f32.mrf.mxu0
        %v2341 = vadd.f32 %v2162, %v2340
        %v2342 = vpop.f32.mrf.mxu0
        %v2343 = vadd.f32 %v2162, %v2342
        %v2344 = vpop.f32.mrf.mxu0
        %v2345 = vadd.f32 %v2167, %v2344
        %v2346 = vpop.f32.mrf.mxu0
        %v2347 = vadd.f32 %v2167, %v2346
        %2348 = vdwg.mxu0
        %v2349 = vadd.f32 %v2212, %v1973
        %v2350 = vadd.f32 %v2214, %v1974
        %v2351 = vadd.f32 %v2255, %v1975
        %v2352 = vadd.f32 %v2257, %v1976
        %v2353 = vadd.f32 %v2298, %v1977
        %v2354 = vadd.f32 %v2300, %v1978
        %v2355 = vadd.f32 %v2341, %v1979
        %v2356 = vadd.f32 %v2343, %v1980
        %v2357 = vadd.f32 %v2216, %v1981
        %v2358 = vadd.f32 %v2218, %v1982
        %v2359 = vadd.f32 %v2259, %v1983
        %v2360 = vadd.f32 %v2261, %v1984
        %v2361 = vadd.f32 %v2302, %v1985
        %v2362 = vadd.f32 %v2304, %v1986
        %v2363 = vadd.f32 %v2345, %v1987
        %v2364 = vadd.f32 %v2347, %v1988
        %v2365 = vmax.f32 %v2349, 0.0
        %v2366 = vmax.f32 %v2350, 0.0
        %v2367 = vmax.f32 %v2351, 0.0
        %v2368 = vmax.f32 %v2352, 0.0
        %v2369 = vmax.f32 %v2353, 0.0
        %v2370 = vmax.f32 %v2354, 0.0
        %v2371 = vmax.f32 %v2355, 0.0
        %v2372 = vmax.f32 %v2356, 0.0
        %v2373 = vmax.f32 %v2357, 0.0
        %v2374 = vmax.f32 %v2358, 0.0
        %v2375 = vmax.f32 %v2359, 0.0
        %v2376 = vmax.f32 %v2360, 0.0
        %v2377 = vmax.f32 %v2361, 0.0
        %v2378 = vmax.f32 %v2362, 0.0
        %v2379 = vmax.f32 %v2363, 0.0
        %v2380 = vmax.f32 %v2364, 0.0
        %v2381 = vpack.c.bf16 %v2373, %v2365
        %v2382 = vpack.c.bf16 %v2374, %v2366
        %v2383 = vpack.c.bf16 %v2375, %v2367
        %v2384 = vpack.c.bf16 %v2376, %v2368
        %v2385 = vpack.c.bf16 %v2377, %v2369
        %v2386 = vpack.c.bf16 %v2378, %v2370
        %v2387 = vpack.c.bf16 %v2379, %v2371
        %v2388 = vpack.c.bf16 %v2380, %v2372
        %v2389 = vld [vmem:[%s11] sm:$0xf]
        %v2390 = vld [vmem:[%s11 + $0x4] sm:$0xf]
        %v2391 = vld [vmem:[%s11 + $0x8] sm:$0xf]
        %v2392 = vld [vmem:[%s11 + $0xc] sm:$0xf]
        %v2393 = vld [vmem:[%s11 + $0x10] sm:$0xf]
        %v2394 = vld [vmem:[%s11 + $0x14] sm:$0xf]
        %v2395 = vld [vmem:[%s11 + $0x18] sm:$0xf]
        %v2396 = vld [vmem:[%s11 + $0x1c] sm:$0xf]
        %v2397 = vld [vmem:[%s12] sm:$0xff]
        %v2398 = vld [vmem:[%s12 + $0x8] sm:$0xff]
        %v2399 = vld [vmem:[%s12 + $0x10] sm:$0xff]
        %v2400 = vld [vmem:[%s12 + $0x18] sm:$0xff]
        %v2401 = vld [vmem:[%s12 + $0x20] sm:$0xff]
        %v2402 = vld [vmem:[%s12 + $0x28] sm:$0xff]
        %v2403 = vld [vmem:[%s12 + $0x30] sm:$0xff]
        %v2404 = vld [vmem:[%s12 + $0x38] sm:$0xff]
        %2406 = vset.pattern.permute.xlu0 0
        %2407 = vperm.xlu0 %2406, %v2397
        %v2408 = vpop.permute.xlu0 %2407
        %2411 = vset.pattern.permute.xlu0 0
        %2412 = vperm.xlu0 %2411, %v2398
        %v2413 = vpop.permute.xlu0 %2412
        %2416 = vset.pattern.permute.xlu0 0
        %2417 = vperm.xlu0 %2416, %v2399
        %v2418 = vpop.permute.xlu0 %2417
        %2421 = vset.pattern.permute.xlu0 0
        %2422 = vperm.xlu0 %2421, %v2400
        %v2423 = vpop.permute.xlu0 %2422
        %2426 = vset.pattern.permute.xlu0 0
        %2427 = vperm.xlu0 %2426, %v2401
        %v2428 = vpop.permute.xlu0 %2427
        %2431 = vset.pattern.permute.xlu0 0
        %2432 = vperm.xlu0 %2431, %v2402
        %v2433 = vpop.permute.xlu0 %2432
        %2436 = vset.pattern.permute.xlu0 0
        %2437 = vperm.xlu0 %2436, %v2403
        %v2438 = vpop.permute.xlu0 %2437
        %2441 = vset.pattern.permute.xlu0 0
        %2442 = vperm.xlu0 %2441, %v2404
        %v2443 = vpop.permute.xlu0 %2442
        %v2453 = vunpack.c.l.b16 %v2389
        %v2454 = vunpack.c.l.b16 %v2390
        %v2455 = vunpack.c.l.b16 %v2391
        %v2456 = vunpack.c.l.b16 %v2392
        %v2457 = vunpack.c.l.b16 %v2393
        %v2458 = vunpack.c.l.b16 %v2394
        %v2459 = vunpack.c.l.b16 %v2395
        %v2460 = vunpack.c.l.b16 %v2396
        %v2461 = vpack.c.b16 %v2454, %v2453
        %v2462 = vpack.c.b16 %v2456, %v2455
        %v2463 = vpack.c.b16 %v2458, %v2457
        %v2464 = vpack.c.b16 %v2460, %v2459
        %vm2465 = vcmask 130048
        %v2467 = vsel %vm2465, %v2461, 0
        %v2470 = vsel %vm2465, %v2462, 0
        %v2473 = vsel %vm2465, %v2463, 0
        %v2476 = vsel %vm2465, %v2464, 0
        %2478 = vmatprep.subr.bf16.mxu0 0
        %2479 = vmatpush1.bf16.msra.mxu0 0
        %2480 = vmatprep.subr.bf16.mxu0 0
        %2481 = vmatpush1.bf16.msra.mxu0 0
        %2482 = vmatprep.subr.bf16.mxu0 0
        %2483 = vmatpush1.bf16.msra.mxu0 0
        %2484 = vmatprep.subr.bf16.mxu0 0
        %2485 = vmatpush1.bf16.msra.mxu0 0
        %2486 = vmatprep.subr.bf16.mxu0 0
        %2487 = vmatpush1.bf16.msra.mxu0 0
        %2488 = vmatprep.subr.bf16.mxu0 0
        %2489 = vmatpush1.bf16.msra.mxu0 0
        %2490 = vmatprep.subr.bf16.mxu0 0
        %2491 = vmatpush1.bf16.msra.mxu0 0
        %2492 = vmatprep.subr.bf16.mxu0 %v2382
        %2493 = vmatpush1.bf16.msra.mxu0 %v2381
        %2494 = vmatprep.subr.bf16.mxu0 0
        %2495 = vmatpush2.bf16.msra.mxu0 0
        %2496 = vmatprep.subr.bf16.mxu0 0
        %2497 = vmatpush2.bf16.msra.mxu0 0
        %2498 = vmatprep.subr.bf16.mxu0 0
        %2499 = vmatpush2.bf16.msra.mxu0 0
        %2500 = vmatprep.subr.bf16.mxu0 0
        %2501 = vmatpush2.bf16.msra.mxu0 0
        %2502 = vmatprep.subr.bf16.mxu0 0
        %2503 = vmatpush2.bf16.msra.mxu0 0
        %2504 = vmatprep.subr.bf16.mxu0 0
        %2505 = vmatpush2.bf16.msra.mxu0 0
        %2506 = vmatprep.subr.bf16.mxu0 0
        %2507 = vmatpush2.bf16.msra.mxu0 0
        %2508 = vmatprep.subr.bf16.mxu0 0
        %2509 = vmatpush2.bf16.msra.mxu0 0
        %2510 = vmatprep.mubr.bf16.mxu0 0
        %2511 = vmatmul.mubr.bf16.gmra.mxu0 %v2467
        %v2512 = vpop.f32.mrf.mxu0
        %v2513 = vadd.f32 %v2408, %v2512
        %v2514 = vpop.f32.mrf.mxu0
        %v2515 = vadd.f32 %v2408, %v2514
        %v2516 = vpop.f32.mrf.mxu0
        %v2517 = vadd.f32 %v2413, %v2516
        %v2518 = vpop.f32.mrf.mxu0
        %v2519 = vadd.f32 %v2413, %v2518
        %2520 = vmatprep.mubr.bf16.mxu0 0
        %2521 = vmatmul.mubr.bf16.gmra.mxu0 %v2470
        %v2522 = vpop.f32.mrf.mxu0
        %v2523 = vadd.f32 %v2418, %v2522
        %v2524 = vpop.f32.mrf.mxu0
        %v2525 = vadd.f32 %v2418, %v2524
        %v2526 = vpop.f32.mrf.mxu0
        %v2527 = vadd.f32 %v2423, %v2526
        %v2528 = vpop.f32.mrf.mxu0
        %v2529 = vadd.f32 %v2423, %v2528
        %2530 = vmatprep.mubr.bf16.mxu0 0
        %2531 = vmatmul.mubr.bf16.gmra.mxu0 %v2473
        %v2532 = vpop.f32.mrf.mxu0
        %v2533 = vadd.f32 %v2428, %v2532
        %v2534 = vpop.f32.mrf.mxu0
        %v2535 = vadd.f32 %v2428, %v2534
        %v2536 = vpop.f32.mrf.mxu0
        %v2537 = vadd.f32 %v2433, %v2536
        %v2538 = vpop.f32.mrf.mxu0
        %v2539 = vadd.f32 %v2433, %v2538
        %2540 = vmatprep.mubr.bf16.mxu0 0
        %2541 = vmatmul.mubr.bf16.gmra.mxu0 %v2476
        %v2542 = vpop.f32.mrf.mxu0
        %v2543 = vadd.f32 %v2438, %v2542
        %v2544 = vpop.f32.mrf.mxu0
        %v2545 = vadd.f32 %v2438, %v2544
        %v2546 = vpop.f32.mrf.mxu0
        %v2547 = vadd.f32 %v2443, %v2546
        %v2548 = vpop.f32.mrf.mxu0
        %v2549 = vadd.f32 %v2443, %v2548
        %2550 = vdwg.mxu0
        %2551 = vmatprep.subr.bf16.mxu0 0
        %2552 = vmatpush1.bf16.msra.mxu0 0
        %2553 = vmatprep.subr.bf16.mxu0 0
        %2554 = vmatpush1.bf16.msra.mxu0 0
        %2555 = vmatprep.subr.bf16.mxu0 0
        %2556 = vmatpush1.bf16.msra.mxu0 0
        %2557 = vmatprep.subr.bf16.mxu0 0
        %2558 = vmatpush1.bf16.msra.mxu0 0
        %2559 = vmatprep.subr.bf16.mxu0 0
        %2560 = vmatpush1.bf16.msra.mxu0 0
        %2561 = vmatprep.subr.bf16.mxu0 0
        %2562 = vmatpush1.bf16.msra.mxu0 0
        %2563 = vmatprep.subr.bf16.mxu0 0
        %2564 = vmatpush1.bf16.msra.mxu0 0
        %2565 = vmatprep.subr.bf16.mxu0 %v2384
        %2566 = vmatpush1.bf16.msra.mxu0 %v2383
        %2567 = vmatprep.subr.bf16.mxu0 0
        %2568 = vmatpush2.bf16.msra.mxu0 0
        %2569 = vmatprep.subr.bf16.mxu0 0
        %2570 = vmatpush2.bf16.msra.mxu0 0
        %2571 = vmatprep.subr.bf16.mxu0 0
        %2572 = vmatpush2.bf16.msra.mxu0 0
        %2573 = vmatprep.subr.bf16.mxu0 0
        %2574 = vmatpush2.bf16.msra.mxu0 0
        %2575 = vmatprep.subr.bf16.mxu0 0
        %2576 = vmatpush2.bf16.msra.mxu0 0
        %2577 = vmatprep.subr.bf16.mxu0 0
        %2578 = vmatpush2.bf16.msra.mxu0 0
        %2579 = vmatprep.subr.bf16.mxu0 0
        %2580 = vmatpush2.bf16.msra.mxu0 0
        %2581 = vmatprep.subr.bf16.mxu0 0
        %2582 = vmatpush2.bf16.msra.mxu0 0
        %2583 = vmatprep.mubr.bf16.mxu0 0
        %2584 = vmatmul.mubr.bf16.gmra.mxu0 %v2467
        %v2585 = vpop.f32.mrf.mxu0
        %v2586 = vadd.f32 %v2408, %v2585
        %v2587 = vpop.f32.mrf.mxu0
        %v2588 = vadd.f32 %v2408, %v2587
        %v2589 = vpop.f32.mrf.mxu0
        %v2590 = vadd.f32 %v2413, %v2589
        %v2591 = vpop.f32.mrf.mxu0
        %v2592 = vadd.f32 %v2413, %v2591
        %2593 = vmatprep.mubr.bf16.mxu0 0
        %2594 = vmatmul.mubr.bf16.gmra.mxu0 %v2470
        %v2595 = vpop.f32.mrf.mxu0
        %v2596 = vadd.f32 %v2418, %v2595
        %v2597 = vpop.f32.mrf.mxu0
        %v2598 = vadd.f32 %v2418, %v2597
        %v2599 = vpop.f32.mrf.mxu0
        %v2600 = vadd.f32 %v2423, %v2599
        %v2601 = vpop.f32.mrf.mxu0
        %v2602 = vadd.f32 %v2423, %v2601
        %2603 = vmatprep.mubr.bf16.mxu0 0
        %2604 = vmatmul.mubr.bf16.gmra.mxu0 %v2473
        %v2605 = vpop.f32.mrf.mxu0
        %v2606 = vadd.f32 %v2428, %v2605
        %v2607 = vpop.f32.mrf.mxu0
        %v2608 = vadd.f32 %v2428, %v2607
        %v2609 = vpop.f32.mrf.mxu0
        %v2610 = vadd.f32 %v2433, %v2609
        %v2611 = vpop.f32.mrf.mxu0
        %v2612 = vadd.f32 %v2433, %v2611
        %2613 = vmatprep.mubr.bf16.mxu0 0
        %2614 = vmatmul.mubr.bf16.gmra.mxu0 %v2476
        %v2615 = vpop.f32.mrf.mxu0
        %v2616 = vadd.f32 %v2438, %v2615
        %v2617 = vpop.f32.mrf.mxu0
        %v2618 = vadd.f32 %v2438, %v2617
        %v2619 = vpop.f32.mrf.mxu0
        %v2620 = vadd.f32 %v2443, %v2619
        %v2621 = vpop.f32.mrf.mxu0
        %v2622 = vadd.f32 %v2443, %v2621
        %2623 = vdwg.mxu0
        %2624 = vmatprep.subr.bf16.mxu0 0
        %2625 = vmatpush1.bf16.msra.mxu0 0
        %2626 = vmatprep.subr.bf16.mxu0 0
        %2627 = vmatpush1.bf16.msra.mxu0 0
        %2628 = vmatprep.subr.bf16.mxu0 0
        %2629 = vmatpush1.bf16.msra.mxu0 0
        %2630 = vmatprep.subr.bf16.mxu0 0
        %2631 = vmatpush1.bf16.msra.mxu0 0
        %2632 = vmatprep.subr.bf16.mxu0 0
        %2633 = vmatpush1.bf16.msra.mxu0 0
        %2634 = vmatprep.subr.bf16.mxu0 0
        %2635 = vmatpush1.bf16.msra.mxu0 0
        %2636 = vmatprep.subr.bf16.mxu0 0
        %2637 = vmatpush1.bf16.msra.mxu0 0
        %2638 = vmatprep.subr.bf16.mxu0 %v2386
        %2639 = vmatpush1.bf16.msra.mxu0 %v2385
        %2640 = vmatprep.subr.bf16.mxu0 0
        %2641 = vmatpush2.bf16.msra.mxu0 0
        %2642 = vmatprep.subr.bf16.mxu0 0
        %2643 = vmatpush2.bf16.msra.mxu0 0
        %2644 = vmatprep.subr.bf16.mxu0 0
        %2645 = vmatpush2.bf16.msra.mxu0 0
        %2646 = vmatprep.subr.bf16.mxu0 0
        %2647 = vmatpush2.bf16.msra.mxu0 0
        %2648 = vmatprep.subr.bf16.mxu0 0
        %2649 = vmatpush2.bf16.msra.mxu0 0
        %2650 = vmatprep.subr.bf16.mxu0 0
        %2651 = vmatpush2.bf16.msra.mxu0 0
        %2652 = vmatprep.subr.bf16.mxu0 0
        %2653 = vmatpush2.bf16.msra.mxu0 0
        %2654 = vmatprep.subr.bf16.mxu0 0
        %2655 = vmatpush2.bf16.msra.mxu0 0
        %2656 = vmatprep.mubr.bf16.mxu0 0
        %2657 = vmatmul.mubr.bf16.gmra.mxu0 %v2467
        %v2658 = vpop.f32.mrf.mxu0
        %v2659 = vadd.f32 %v2408, %v2658
        %v2660 = vpop.f32.mrf.mxu0
        %v2661 = vadd.f32 %v2408, %v2660
        %v2662 = vpop.f32.mrf.mxu0
        %v2663 = vadd.f32 %v2413, %v2662
        %v2664 = vpop.f32.mrf.mxu0
        %v2665 = vadd.f32 %v2413, %v2664
        %2666 = vmatprep.mubr.bf16.mxu0 0
        %2667 = vmatmul.mubr.bf16.gmra.mxu0 %v2470
        %v2668 = vpop.f32.mrf.mxu0
        %v2669 = vadd.f32 %v2418, %v2668
        %v2670 = vpop.f32.mrf.mxu0
        %v2671 = vadd.f32 %v2418, %v2670
        %v2672 = vpop.f32.mrf.mxu0
        %v2673 = vadd.f32 %v2423, %v2672
        %v2674 = vpop.f32.mrf.mxu0
        %v2675 = vadd.f32 %v2423, %v2674
        %2676 = vmatprep.mubr.bf16.mxu0 0
        %2677 = vmatmul.mubr.bf16.gmra.mxu0 %v2473
        %v2678 = vpop.f32.mrf.mxu0
        %v2679 = vadd.f32 %v2428, %v2678
        %v2680 = vpop.f32.mrf.mxu0
        %v2681 = vadd.f32 %v2428, %v2680
        %v2682 = vpop.f32.mrf.mxu0
        %v2683 = vadd.f32 %v2433, %v2682
        %v2684 = vpop.f32.mrf.mxu0
        %v2685 = vadd.f32 %v2433, %v2684
        %2686 = vmatprep.mubr.bf16.mxu0 0
        %2687 = vmatmul.mubr.bf16.gmra.mxu0 %v2476
        %v2688 = vpop.f32.mrf.mxu0
        %v2689 = vadd.f32 %v2438, %v2688
        %v2690 = vpop.f32.mrf.mxu0
        %v2691 = vadd.f32 %v2438, %v2690
        %v2692 = vpop.f32.mrf.mxu0
        %v2693 = vadd.f32 %v2443, %v2692
        %v2694 = vpop.f32.mrf.mxu0
        %v2695 = vadd.f32 %v2443, %v2694
        %2696 = vdwg.mxu0
        %2697 = vmatprep.subr.bf16.mxu0 0
        %2698 = vmatpush1.bf16.msra.mxu0 0
        %2699 = vmatprep.subr.bf16.mxu0 0
        %2700 = vmatpush1.bf16.msra.mxu0 0
        %2701 = vmatprep.subr.bf16.mxu0 0
        %2702 = vmatpush1.bf16.msra.mxu0 0
        %2703 = vmatprep.subr.bf16.mxu0 0
        %2704 = vmatpush1.bf16.msra.mxu0 0
        %2705 = vmatprep.subr.bf16.mxu0 0
        %2706 = vmatpush1.bf16.msra.mxu0 0
        %2707 = vmatprep.subr.bf16.mxu0 0
        %2708 = vmatpush1.bf16.msra.mxu0 0
        %2709 = vmatprep.subr.bf16.mxu0 0
        %2710 = vmatpush1.bf16.msra.mxu0 0
        %2711 = vmatprep.subr.bf16.mxu0 %v2388
        %2712 = vmatpush1.bf16.msra.mxu0 %v2387
        %2713 = vmatprep.subr.bf16.mxu0 0
        %2714 = vmatpush2.bf16.msra.mxu0 0
        %2715 = vmatprep.subr.bf16.mxu0 0
        %2716 = vmatpush2.bf16.msra.mxu0 0
        %2717 = vmatprep.subr.bf16.mxu0 0
        %2718 = vmatpush2.bf16.msra.mxu0 0
        %2719 = vmatprep.subr.bf16.mxu0 0
        %2720 = vmatpush2.bf16.msra.mxu0 0
        %2721 = vmatprep.subr.bf16.mxu0 0
        %2722 = vmatpush2.bf16.msra.mxu0 0
        %2723 = vmatprep.subr.bf16.mxu0 0
        %2724 = vmatpush2.bf16.msra.mxu0 0
        %2725 = vmatprep.subr.bf16.mxu0 0
        %2726 = vmatpush2.bf16.msra.mxu0 0
        %2727 = vmatprep.subr.bf16.mxu0 0
        %2728 = vmatpush2.bf16.msra.mxu0 0
        %2729 = vmatprep.mubr.bf16.mxu0 0
        %2730 = vmatmul.mubr.bf16.gmra.mxu0 %v2467
        %v2731 = vpop.f32.mrf.mxu0
        %v2732 = vadd.f32 %v2408, %v2731
        %v2733 = vpop.f32.mrf.mxu0
        %v2734 = vadd.f32 %v2408, %v2733
        %v2735 = vpop.f32.mrf.mxu0
        %v2736 = vadd.f32 %v2413, %v2735
        %v2737 = vpop.f32.mrf.mxu0
        %v2738 = vadd.f32 %v2413, %v2737
        %2739 = vmatprep.mubr.bf16.mxu0 0
        %2740 = vmatmul.mubr.bf16.gmra.mxu0 %v2470
        %v2741 = vpop.f32.mrf.mxu0
        %v2742 = vadd.f32 %v2418, %v2741
        %v2743 = vpop.f32.mrf.mxu0
        %v2744 = vadd.f32 %v2418, %v2743
        %v2745 = vpop.f32.mrf.mxu0
        %v2746 = vadd.f32 %v2423, %v2745
        %v2747 = vpop.f32.mrf.mxu0
        %v2748 = vadd.f32 %v2423, %v2747
        %2749 = vmatprep.mubr.bf16.mxu0 0
        %2750 = vmatmul.mubr.bf16.gmra.mxu0 %v2473
        %v2751 = vpop.f32.mrf.mxu0
        %v2752 = vadd.f32 %v2428, %v2751
        %v2753 = vpop.f32.mrf.mxu0
        %v2754 = vadd.f32 %v2428, %v2753
        %v2755 = vpop.f32.mrf.mxu0
        %v2756 = vadd.f32 %v2433, %v2755
        %v2757 = vpop.f32.mrf.mxu0
        %v2758 = vadd.f32 %v2433, %v2757
        %2759 = vmatprep.mubr.bf16.mxu0 0
        %2760 = vmatmul.mubr.bf16.gmra.mxu0 %v2476
        %v2761 = vpop.f32.mrf.mxu0
        %v2762 = vadd.f32 %v2438, %v2761
        %v2763 = vpop.f32.mrf.mxu0
        %v2764 = vadd.f32 %v2438, %v2763
        %v2765 = vpop.f32.mrf.mxu0
        %v2766 = vadd.f32 %v2443, %v2765
        %v2767 = vpop.f32.mrf.mxu0
        %v2768 = vadd.f32 %v2443, %v2767
        %2769 = vdwg.mxu0
        %v2770 = vadd.f32 %v2513, %v534
        %v2771 = vadd.f32 %v2515, %v535
        %v2772 = vadd.f32 %v2586, %v536
        %v2773 = vadd.f32 %v2588, %v537
        %v2774 = vadd.f32 %v2659, %v538
        %v2775 = vadd.f32 %v2661, %v539
        %v2776 = vadd.f32 %v2732, %v540
        %v2777 = vadd.f32 %v2734, %v541
        %v2778 = vadd.f32 %v2517, %v542
        %v2779 = vadd.f32 %v2519, %v543
        %v2780 = vadd.f32 %v2590, %v544
        %v2781 = vadd.f32 %v2592, %v545
        %v2782 = vadd.f32 %v2663, %v546
        %v2783 = vadd.f32 %v2665, %v547
        %v2784 = vadd.f32 %v2736, %v548
        %v2785 = vadd.f32 %v2738, %v549
        %v2786 = vadd.f32 %v2523, %v550
        %v2787 = vadd.f32 %v2525, %v551
        %v2788 = vadd.f32 %v2596, %v552
        %v2789 = vadd.f32 %v2598, %v553
        %v2790 = vadd.f32 %v2669, %v554
        %v2791 = vadd.f32 %v2671, %v555
        %v2792 = vadd.f32 %v2742, %v556
        %v2793 = vadd.f32 %v2744, %v557
        %v2794 = vadd.f32 %v2527, %v558
        %v2795 = vadd.f32 %v2529, %v559
        %v2796 = vadd.f32 %v2600, %v560
        %v2797 = vadd.f32 %v2602, %v561
        %v2798 = vadd.f32 %v2673, %v562
        %v2799 = vadd.f32 %v2675, %v563
        %v2800 = vadd.f32 %v2746, %v564
        %v2801 = vadd.f32 %v2748, %v565
        %v2802 = vadd.f32 %v2533, %v566
        %v2803 = vadd.f32 %v2535, %v567
        %v2804 = vadd.f32 %v2606, %v568
        %v2805 = vadd.f32 %v2608, %v569
        %v2806 = vadd.f32 %v2679, %v570
        %v2807 = vadd.f32 %v2681, %v571
        %v2808 = vadd.f32 %v2752, %v572
        %v2809 = vadd.f32 %v2754, %v573
        %v2810 = vadd.f32 %v2537, %v574
        %v2811 = vadd.f32 %v2539, %v575
        %v2812 = vadd.f32 %v2610, %v576
        %v2813 = vadd.f32 %v2612, %v577
        %v2814 = vadd.f32 %v2683, %v578
        %v2815 = vadd.f32 %v2685, %v579
        %v2816 = vadd.f32 %v2756, %v580
        %v2817 = vadd.f32 %v2758, %v581
        %v2818 = vadd.f32 %v2543, %v582
        %v2819 = vadd.f32 %v2545, %v583
        %v2820 = vadd.f32 %v2616, %v584
        %v2821 = vadd.f32 %v2618, %v585
        %v2822 = vadd.f32 %v2689, %v586
        %v2823 = vadd.f32 %v2691, %v587
        %v2824 = vadd.f32 %v2762, %v588
        %v2825 = vadd.f32 %v2764, %v589
        %v2826 = vadd.f32 %v2547, %v590
        %v2827 = vadd.f32 %v2549, %v591
        %v2828 = vadd.f32 %v2620, %v592
        %v2829 = vadd.f32 %v2622, %v593
        %v2830 = vadd.f32 %v2693, %v594
        %v2831 = vadd.f32 %v2695, %v595
        %v2832 = vadd.f32 %v2766, %v596
        %v2833 = vadd.f32 %v2768, %v597
        %v2834 = vmax.f32 %v2770, 0.0
        %v2835 = vmax.f32 %v2771, 0.0
        %v2836 = vmax.f32 %v2772, 0.0
        %v2837 = vmax.f32 %v2773, 0.0
        %v2838 = vmax.f32 %v2774, 0.0
        %v2839 = vmax.f32 %v2775, 0.0
        %v2840 = vmax.f32 %v2776, 0.0
        %v2841 = vmax.f32 %v2777, 0.0
        %v2842 = vmax.f32 %v2778, 0.0
        %v2843 = vmax.f32 %v2779, 0.0
        %v2844 = vmax.f32 %v2780, 0.0
        %v2845 = vmax.f32 %v2781, 0.0
        %v2846 = vmax.f32 %v2782, 0.0
        %v2847 = vmax.f32 %v2783, 0.0
        %v2848 = vmax.f32 %v2784, 0.0
        %v2849 = vmax.f32 %v2785, 0.0
        %v2850 = vmax.f32 %v2786, 0.0
        %v2851 = vmax.f32 %v2787, 0.0
        %v2852 = vmax.f32 %v2788, 0.0
        %v2853 = vmax.f32 %v2789, 0.0
        %v2854 = vmax.f32 %v2790, 0.0
        %v2855 = vmax.f32 %v2791, 0.0
        %v2856 = vmax.f32 %v2792, 0.0
        %v2857 = vmax.f32 %v2793, 0.0
        %v2858 = vmax.f32 %v2794, 0.0
        %v2859 = vmax.f32 %v2795, 0.0
        %v2860 = vmax.f32 %v2796, 0.0
        %v2861 = vmax.f32 %v2797, 0.0
        %v2862 = vmax.f32 %v2798, 0.0
        %v2863 = vmax.f32 %v2799, 0.0
        %v2864 = vmax.f32 %v2800, 0.0
        %v2865 = vmax.f32 %v2801, 0.0
        %v2866 = vmax.f32 %v2802, 0.0
        %v2867 = vmax.f32 %v2803, 0.0
        %v2868 = vmax.f32 %v2804, 0.0
        %v2869 = vmax.f32 %v2805, 0.0
        %v2870 = vmax.f32 %v2806, 0.0
        %v2871 = vmax.f32 %v2807, 0.0
        %v2872 = vmax.f32 %v2808, 0.0
        %v2873 = vmax.f32 %v2809, 0.0
        %v2874 = vmax.f32 %v2810, 0.0
        %v2875 = vmax.f32 %v2811, 0.0
        %v2876 = vmax.f32 %v2812, 0.0
        %v2877 = vmax.f32 %v2813, 0.0
        %v2878 = vmax.f32 %v2814, 0.0
        %v2879 = vmax.f32 %v2815, 0.0
        %v2880 = vmax.f32 %v2816, 0.0
        %v2881 = vmax.f32 %v2817, 0.0
        %v2882 = vmax.f32 %v2818, 0.0
        %v2883 = vmax.f32 %v2819, 0.0
        %v2884 = vmax.f32 %v2820, 0.0
        %v2885 = vmax.f32 %v2821, 0.0
        %v2886 = vmax.f32 %v2822, 0.0
        %v2887 = vmax.f32 %v2823, 0.0
        %v2888 = vmax.f32 %v2824, 0.0
        %v2889 = vmax.f32 %v2825, 0.0
        %v2890 = vmax.f32 %v2826, 0.0
        %v2891 = vmax.f32 %v2827, 0.0
        %v2892 = vmax.f32 %v2828, 0.0
        %v2893 = vmax.f32 %v2829, 0.0
        %v2894 = vmax.f32 %v2830, 0.0
        %v2895 = vmax.f32 %v2831, 0.0
        %v2896 = vmax.f32 %v2832, 0.0
        %v2897 = vmax.f32 %v2833, 0.0
        %2898 = vst [vmem:[%s520] sm:$0xff] %v2834
        %2899 = vst [vmem:[%s520 + $0x8] sm:$0xff] %v2835
        %2900 = vst [vmem:[%s520 + $0x10] sm:$0xff] %v2836
        %2901 = vst [vmem:[%s520 + $0x18] sm:$0xff] %v2837
        %2902 = vst [vmem:[%s520 + $0x20] sm:$0xff] %v2838
        %2903 = vst [vmem:[%s520 + $0x28] sm:$0xff] %v2839
        %2904 = vst [vmem:[%s520 + $0x30] sm:$0xff] %v2840
        %2905 = vst [vmem:[%s520 + $0x38] sm:$0xff] %v2841
        %2906 = vst [vmem:[%s520 + $0x40] sm:$0xff] %v2842
        %2907 = vst [vmem:[%s520 + $0x48] sm:$0xff] %v2843
        %2908 = vst [vmem:[%s520 + $0x50] sm:$0xff] %v2844
        %2909 = vst [vmem:[%s520 + $0x58] sm:$0xff] %v2845
        %2910 = vst [vmem:[%s520 + $0x60] sm:$0xff] %v2846
        %2911 = vst [vmem:[%s520 + $0x68] sm:$0xff] %v2847
        %2912 = vst [vmem:[%s520 + $0x70] sm:$0xff] %v2848
        %2913 = vst [vmem:[%s520 + $0x78] sm:$0xff] %v2849
        %2914 = vst [vmem:[%s520 + $0x80] sm:$0xff] %v2850
        %2915 = vst [vmem:[%s520 + $0x88] sm:$0xff] %v2851
        %2916 = vst [vmem:[%s520 + $0x90] sm:$0xff] %v2852
        %2917 = vst [vmem:[%s520 + $0x98] sm:$0xff] %v2853
        %2918 = vst [vmem:[%s520 + $0xa0] sm:$0xff] %v2854
        %2919 = vst [vmem:[%s520 + $0xa8] sm:$0xff] %v2855
        %2920 = vst [vmem:[%s520 + $0xb0] sm:$0xff] %v2856
        %2921 = vst [vmem:[%s520 + $0xb8] sm:$0xff] %v2857
        %2922 = vst [vmem:[%s520 + $0xc0] sm:$0xff] %v2858
        %2923 = vst [vmem:[%s520 + $0xc8] sm:$0xff] %v2859
        %2924 = vst [vmem:[%s520 + $0xd0] sm:$0xff] %v2860
        %2925 = vst [vmem:[%s520 + $0xd8] sm:$0xff] %v2861
        %2926 = vst [vmem:[%s520 + $0xe0] sm:$0xff] %v2862
        %2927 = vst [vmem:[%s520 + $0xe8] sm:$0xff] %v2863
        %2928 = vst [vmem:[%s520 + $0xf0] sm:$0xff] %v2864
        %2929 = vst [vmem:[%s520 + $0xf8] sm:$0xff] %v2865
        %2930 = vst [vmem:[%s520 + $0x100] sm:$0xff] %v2866
        %2931 = vst [vmem:[%s520 + $0x108] sm:$0xff] %v2867
        %2932 = vst [vmem:[%s520 + $0x110] sm:$0xff] %v2868
        %2933 = vst [vmem:[%s520 + $0x118] sm:$0xff] %v2869
        %2934 = vst [vmem:[%s520 + $0x120] sm:$0xff] %v2870
        %2935 = vst [vmem:[%s520 + $0x128] sm:$0xff] %v2871
        %2936 = vst [vmem:[%s520 + $0x130] sm:$0xff] %v2872
        %2937 = vst [vmem:[%s520 + $0x138] sm:$0xff] %v2873
        %2938 = vst [vmem:[%s520 + $0x140] sm:$0xff] %v2874
        %2939 = vst [vmem:[%s520 + $0x148] sm:$0xff] %v2875
        %2940 = vst [vmem:[%s520 + $0x150] sm:$0xff] %v2876
        %2941 = vst [vmem:[%s520 + $0x158] sm:$0xff] %v2877
        %2942 = vst [vmem:[%s520 + $0x160] sm:$0xff] %v2878
        %2943 = vst [vmem:[%s520 + $0x168] sm:$0xff] %v2879
        %2944 = vst [vmem:[%s520 + $0x170] sm:$0xff] %v2880
        %2945 = vst [vmem:[%s520 + $0x178] sm:$0xff] %v2881
        %2946 = vst [vmem:[%s520 + $0x180] sm:$0xff] %v2882
        %2947 = vst [vmem:[%s520 + $0x188] sm:$0xff] %v2883
        %2948 = vst [vmem:[%s520 + $0x190] sm:$0xff] %v2884
        %2949 = vst [vmem:[%s520 + $0x198] sm:$0xff] %v2885
        %2950 = vst [vmem:[%s520 + $0x1a0] sm:$0xff] %v2886
        %2951 = vst [vmem:[%s520 + $0x1a8] sm:$0xff] %v2887
        %2952 = vst [vmem:[%s520 + $0x1b0] sm:$0xff] %v2888
        %2953 = vst [vmem:[%s520 + $0x1b8] sm:$0xff] %v2889
        %2954 = vst [vmem:[%s520 + $0x1c0] sm:$0xff] %v2890
        %2955 = vst [vmem:[%s520 + $0x1c8] sm:$0xff] %v2891
        %2956 = vst [vmem:[%s520 + $0x1d0] sm:$0xff] %v2892
        %2957 = vst [vmem:[%s520 + $0x1d8] sm:$0xff] %v2893
        %2958 = vst [vmem:[%s520 + $0x1e0] sm:$0xff] %v2894
        %2959 = vst [vmem:[%s520 + $0x1e8] sm:$0xff] %v2895
        %2960 = vst [vmem:[%s520 + $0x1f0] sm:$0xff] %v2896
        %2961 = vst [vmem:[%s520 + $0x1f8] sm:$0xff] %v2897
        %s2962 = sand.u32 %s342, 1
        %s2963 = scalar_lea.sflag [#allocation4], %s2962
        %s2964 = sand.u32 %s342, 1
        %s2965 = smul.addr %s2964, 512
        %s2966 = scalar_lea.vmem [#allocation7], %s2965
        // Predicated region
        $region81: #{tpu_custom_call.1} parent=71 // pred_check
          %p2967 = pneg %p352
        $region82: #{tpu_custom_call.1} parent=71 // pred_check_branch
          %2969 = sbr.rel (%p2967) target = $region84
        $region83: #{tpu_custom_call.1} parent=71 // pred_region
          %s2970 = smul.u32 8, %s38
          %s2972 = ssub.s32 8192, 8192
          %2973 = vsyncadd %s2963, %s2972
          %s2974 = smul.addr %s37, 128
          %s2975 = sadd.s32 %s2970, %s2974
          %s2976 = smul.addr %s2975, 128
          %s2977 = scalar_lea.hbm %s13, %s2976
          %s2978 = sshll.u32 %s2966, 4
          %s2979 = int_to_ptr.vmem [resolvable:$true] %s2978
          %2984 = dma.vmem_to_hbm [thread:$0]  %s2979, 8192, %s2977, %s2963, 1024, 2048, 64
        $region84: #{tpu_custom_call.1} parent=71 // pred_fallthru
          _
      $region72: #{tpu_custom_call.1} parent=5 // pred_fallthru
        _
      %p2985 = scmp.le.s32.totalorder 2, %s28
      // Predicated region
      $region85: #{tpu_custom_call.1} parent=5 // pred_check
        %p2986 = pneg %p2985
      $region86: #{tpu_custom_call.1} parent=5 // pred_check_branch
        %2988 = sbr.rel (%p2986) target = $region88
      $region87: #{tpu_custom_call.1} parent=5 // pred_region
        %s2989 = ssub.s32 %s28, 2
        // Predicated region
        $region89: #{tpu_custom_call.1} parent=87 // pred_check
          %p2990 = pneg %p358
        $region90: #{tpu_custom_call.1} parent=87 // pred_check_branch
          %2992 = sbr.rel (%p2990) target = $region92
        $region91: #{tpu_custom_call.1} parent=87 // pred_region
          %s2993 = sand.u32 %s343, 1
          %s2994 = scalar_lea.sflag [#allocation4], %s2993
          %s2995 = sand.u32 %s343, 1
          %s2996 = smul.addr %s2995, 512
          %s2997 = scalar_lea.vmem [#allocation7], %s2996
          %2998 = dma.done %s2994, 8192
        $region92: #{tpu_custom_call.1} parent=87 // pred_fallthru
          _
      $region88: #{tpu_custom_call.1} parent=5 // pred_fallthru
        _
    $region6: #{tpu_custom_call.1} parent=1 // loop_footer
      %s32 = sadd.s32 1, %s28
    $region7: #{tpu_custom_call.1} parent=1 // loop_footer_branch
      %27 = sbr.rel target = $region3
    $region8: #{tpu_custom_call.1} parent=1 // loop_exit
      _
    %2999 = vsyncpa [#allocation3], 1
    %s3000 = scalar_lea.sflag [#allocation3], 1
    %3001 = vsyncpa %s3000, 1
    %3002 = vsyncpa [#allocation6], 1
    %s3003 = scalar_lea.sflag [#allocation6], 1
    %3004 = vsyncpa %s3003, 1
    %3005 = vsyncpa [#allocation4], 1
    %s3006 = scalar_lea.sflag [#allocation4], 1
    %3007 = vsyncpa %s3006, 1

</llo_original>
